<compile_context>
chip_gen: v5e
topology: v5e:2x2
jax: 0.10.0
libtpu: 0.0.40
codegen_flags: <defaults>
</compile_context>

<pallas_src>
import functools

import jax
import jax.numpy as jnp
from jax import lax
from jax.experimental import pallas as pl
from jax.experimental.pallas import tpu as pltpu


# --------------------------------------------------------------------------
# Stage 1: spatial encoder (conv1 -> ReLU -> conv2 -> ReLU), one grid step = b
# --------------------------------------------------------------------------
def _encoder_kernel(x_ref, w1_ref, b1_ref, w2_ref, b2_ref, mask_ref, enc_ref,
                    *, H, W):
    """x_ref:   [1, HW, 9*Cin] bf16  conv1 im2col (built in the wrapper)
       w1_ref:  [9*Cin, Ch]    bf16
       b1_ref:  [1, Ch]        f32
       w2_ref:  [9*Ch, Ch]     bf16
       b2_ref:  [1, Ch]        f32
       mask_ref:[HW, 9]        f32   per-tap validity (zero-pad boundary)
       enc_ref: [1, HW, Ch]    bf16  encoder output
    """
    HW = H * W

    # conv1 + ReLU: one K=9*Cin MXU matmul, f32 accumulation.
    h1 = jnp.maximum(
        jnp.dot(x_ref[0], w1_ref[...], preferred_element_type=jnp.float32)
        + b1_ref[...], 0.0)                                  # [HW, Ch] f32

    # conv2 im2col via 9 sublane rolls of the flattened image; wrap-around
    # contamination is removed with a per-tap [HW, 1] boundary select
    # (broadcast over the Ch lanes) — no full-width [HW, 9*Ch] mask stream.
    # (Rolls/selects kept in f32 for v5e-friendliness; cast once at MXU input.)
    taps = []
    t = 0
    for ky in (-1, 0, 1):
        for kx in (-1, 0, 1):
            d = ky * W + kx
            tap = h1 if d == 0 else pltpu.roll(h1, shift=(-d) % HW, axis=0)
            if d != 0:
                valid = mask_ref[:, t:t + 1] > 0.5           # [HW, 1]
                tap = jnp.where(valid, tap, 0.0)
            taps.append(tap)
            t += 1
    im2 = jnp.concatenate(taps, axis=-1).astype(jnp.bfloat16)  # [HW, 9*Ch]

    # conv2 + ReLU: one K=9*Ch MXU matmul.
    enc2 = jnp.maximum(
        jnp.dot(im2, w2_ref[...], preferred_element_type=jnp.float32)
        + b2_ref[...], 0.0)
    enc_ref[0] = enc2.astype(jnp.bfloat16)


# --------------------------------------------------------------------------
# Stage 2: pairwise coupling, one grid step = (batch b, output-column tile q)
# --------------------------------------------------------------------------
def _coupling_kernel(decay_ref, enc_ref, encT_ref, pc_ref, qc_ref, out_ref):
    """decay_ref: [1]            f32 (SMEM)
       enc_ref:   [1, HWp, Ch]   bf16  (LHS, constant across q)
       encT_ref:  [1, Ch, TQ]    bf16  (RHS q-tile; transposed in the wrapper)
       pc_ref:    [HWp, 2]       f32   (h, w) coords per row position
       qc_ref:    [2, TQ]        f32   (h; w) coords for this column tile
       out_ref:   [1, HWp, TQ]   f32
    """
    # similarities tile on the MXU (bf16 operands, f32 accumulation)
    sims = jnp.dot(enc_ref[0], encT_ref[0],
                   preferred_element_type=jnp.float32)        # [HWp, TQ]

    # distance weights computed in-kernel (EUP sqrt/exp) from tiny coordinate
    # streams — replaces the HW^2 f32 dist-weight read of the previous version
    dy = pc_ref[:, 0:1] - qc_ref[0:1, :]                      # [HWp, TQ]
    dx = pc_ref[:, 1:2] - qc_ref[1:2, :]
    dist = jnp.sqrt(dy * dy + dx * dx)
    dw = jnp.exp(-decay_ref[0] * dist)

    out_ref[0] = jax.nn.sigmoid(sims) * dw


# --------------------------------------------------------------------------
# Planning helpers
# --------------------------------------------------------------------------
def _vmem_plan():
    """Generation-aware VMEM budgeting: small out tiles on v7x (64 MiB
    physical VMEM), larger tiles + raised scoped limit on v5e/v6e (128 MiB)."""
    cap = 128 << 20
    try:
        cap = int(getattr(pltpu.get_tpu_info(), "vmem_capacity_bytes", cap))
    except Exception:
        pass
    vmem_limit = int(min(cap * 3 // 4, 100 << 20))      # ~48 MiB v7x, ~96 MiB v5e/v6e
    out_block_budget = int(max(1 << 20, vmem_limit // 12))
    return vmem_limit, out_block_budget


def _plan_q_tiling(hw, out_block_budget):
    """Return (padded HW, TQ). Single full tile when it fits the budget;
    otherwise pad HW to a multiple of 128 and pick the largest 128-multiple
    divisor whose [HWp, TQ] f32 output block fits the budget."""
    if hw * hw * 4 <= out_block_budget:
        return hw, hw
    hw_pad = ((hw + 127) // 128) * 128
    best = 128
    tq = 128
    while tq <= hw_pad:
        if hw_pad % tq == 0 and hw_pad * tq * 4 <= out_block_budget:
            best = tq
        tq += 128
    return hw_pad, best


# --------------------------------------------------------------------------
# Parameters / wrapper
# --------------------------------------------------------------------------
def init_params(key, feature_dim, hidden_dim):
    k1, k2, k3, k4 = jax.random.split(key, 4)
    w1 = 0.1 * jax.random.normal(k1, (3, 3, feature_dim, hidden_dim), jnp.float32)
    b1 = 0.1 * jax.random.normal(k2, (hidden_dim,), jnp.float32)
    w2 = 0.1 * jax.random.normal(k3, (3, 3, hidden_dim, hidden_dim), jnp.float32)
    b2 = 0.1 * jax.random.normal(k4, (hidden_dim,), jnp.float32)
    decay = jnp.float32(1.0)   # distance_decay parameter
    # TODO(synk): coupling_predictor params are defined in __init__ but never
    # used by the reference forward pass, so they are omitted here.
    return dict(w1=w1, b1=b1, w2=w2, b2=b2, decay=decay)


def _pairwise_distances(H, W):
    coords = jnp.stack(
        jnp.meshgrid(jnp.arange(H), jnp.arange(W), indexing="ij"), axis=0
    ).astype(jnp.float32)                                  # (2, H, W)
    cf = coords.reshape(2, H * W).T                        # (HW, 2)
    diff = cf[:, None, :] - cf[None, :, :]
    return jnp.sqrt(jnp.sum(diff * diff, axis=-1))         # (HW, HW)


def spatial_coupling_forward(features, params):
    """features: [B, feature_dim, H, W] (NCHW) -> [B, H, W, H, W]."""
    B, Cin, H, W = features.shape
    HW = H * W
    hidden = params["b1"].shape[-1]

    vmem_limit, out_block_budget = _vmem_plan()
    HWp, TQ = _plan_q_tiling(HW, out_block_budget)
    NQ = HWp // TQ

    # ---- wrapper-side glue (layout / batch-invariant precompute only) -----
    # conv1 im2col: [B, HW, 9*Cin], tap order (ky, kx) row-major — matches the
    # reshape of the HWIO weights below.
    x_nhwc = jnp.transpose(features, (0, 2, 3, 1))          # [B, H, W, Cin]
    xp = jnp.pad(x_nhwc, ((0, 0), (1, 1), (1, 1), (0, 0)))
    patches = [xp[:, ky:ky + H, kx:kx + W, :]
               for ky in range(3) for kx in range(3)]
    x_im2col = jnp.concatenate(patches, axis=-1).reshape(B, HW, 9 * Cin)
    x_im2col = x_im2col.astype(jnp.bfloat16)

    w1 = params["w1"].reshape(9 * Cin, hidden).astype(jnp.bfloat16)
    w2 = params["w2"].reshape(9 * hidden, hidden).astype(jnp.bfloat16)
    b1 = params["b1"].reshape(1, hidden).astype(jnp.float32)
    b2 = params["b2"].reshape(1, hidden).astype(jnp.float32)

    # per-tap boundary validity for conv2's in-kernel im2col: [HW, 9] (was
    # [HW, 9*hidden] f32 in the previous version)
    p = jnp.arange(HW)
    h_idx, w_idx = p // W, p % W
    cols = [((h_idx + ky >= 0) & (h_idx + ky < H) &
             (w_idx + kx >= 0) & (w_idx + kx < W))
            for ky in (-1, 0, 1) for kx in (-1, 0, 1)]
    mask9 = jnp.stack(cols, axis=-1).astype(jnp.float32)    # [HW, 9]

    # ---- stage 1: spatial encoder (tiny vs the HW^2 stage) -----------------
    enc = pl.pallas_call(
        functools.partial(_encoder_kernel, H=H, W=W),
        out_shape=jax.ShapeDtypeStruct((B, HW, hidden), jnp.bfloat16),
        grid=(B,),
        in_specs=[
            pl.BlockSpec((1, HW, 9 * Cin), lambda b: (b, 0, 0)),     # x
            pl.BlockSpec((9 * Cin, hidden), lambda b: (0, 0)),       # w1
            pl.BlockSpec((1, hidden), lambda b: (0, 0)),             # b1
            pl.BlockSpec((9 * hidden, hidden), lambda b: (0, 0)),    # w2
            pl.BlockSpec((1, hidden), lambda b: (0, 0)),             # b2
            pl.BlockSpec((HW, 9), lambda b: (0, 0)),                 # mask
        ],
        out_specs=pl.BlockSpec((1, HW, hidden), lambda b: (b, 0, 0)),
        compiler_params=pltpu.CompilerParams(
            dimension_semantics=("parallel",),
            vmem_limit_bytes=vmem_limit),
    )(x_im2col, w1, b1, w2, b2, mask9)

    # ---- stage 2: pairwise coupling ---------------------------------------
    if HWp != HW:
        # pad to a 128-multiple so the q tiles are lane-aligned; padded rows
        # are zero (finite everywhere) and cropped from the output below.
        enc = jnp.pad(enc, ((0, 0), (0, HWp - HW), (0, 0)))
    encT = jnp.swapaxes(enc, 1, 2)                           # [B, Ch, HWp]

    pp = jnp.arange(HWp)
    hp = (pp // W).astype(jnp.float32)
    wp = (pp % W).astype(jnp.float32)
    pcoord = jnp.stack([hp, wp], axis=1)                     # [HWp, 2]
    qcoord = jnp.stack([hp, wp], axis=0)                     # [2, HWp]
    decay = jnp.asarray(params["decay"], jnp.float32).reshape(1)

    out = pl.pallas_call(
        _coupling_kernel,
        out_shape=jax.ShapeDtypeStruct((B, HWp, HWp), jnp.float32),
        grid=(B, NQ),
        in_specs=[
            pl.BlockSpec(memory_space=pltpu.MemorySpace.SMEM),        # decay
            pl.BlockSpec((1, HWp, hidden), lambda b, q: (b, 0, 0)),   # enc
            pl.BlockSpec((1, hidden, TQ), lambda b, q: (b, 0, q)),    # encT
            pl.BlockSpec((HWp, 2), lambda b, q: (0, 0)),              # pcoord
            pl.BlockSpec((2, TQ), lambda b, q: (0, q)),               # qcoord
        ],
        out_specs=pl.BlockSpec((1, HWp, TQ), lambda b, q: (b, 0, q)),
        compiler_params=pltpu.CompilerParams(
            # no cross-step scratch -> both axes fully parallel (megacore/v7x)
            dimension_semantics=("parallel", "parallel"),
            vmem_limit_bytes=vmem_limit),
    )(decay, enc, encT, pcoord, qcoord)

    out = out[:, :HW, :HW]
    return out.reshape(B, H, W, H, W)


# --------------------------------------------------------------------------
# Pure-JAX f32 reference matching the PyTorch module semantics
# --------------------------------------------------------------------------
def reference_forward(features, params):
    dn = ("NCHW", "OIHW", "NCHW")
    w1 = jnp.transpose(params["w1"], (3, 2, 0, 1))
    w2 = jnp.transpose(params["w2"], (3, 2, 0, 1))
    h1 = jax.nn.relu(
        lax.conv_general_dilated(features, w1, (1, 1), ((1, 1), (1, 1)),
                                 dimension_numbers=dn,
                                 precision=lax.Precision.HIGHEST)
        + params["b1"][None, :, None, None])
    h2 = jax.nn.relu(
        lax.conv_general_dilated(h1, w2, (1, 1), ((1, 1), (1, 1)),
                                 dimension_numbers=dn,
                                 precision=lax.Precision.HIGHEST)
        + params["b2"][None, :, None, None])
    B, Cin, H, W = features.shape
    hidden = params["b1"].shape[-1]
    ef = h2.reshape(B, hidden, H * W)
    sims = jnp.einsum("bcp,bcq->bpq", ef, ef, precision=lax.Precision.HIGHEST)
    dist = _pairwise_distances(H, W)
    dw = jnp.exp(-params["decay"] * dist)[None]
    return (jax.nn.sigmoid(sims) * dw).reshape(B, H, W, H, W)


if __name__ == "__main__":
    B, feature_dim, H, W = 2, 4, 16, 16
    hidden_dim = 32

    key = jax.random.PRNGKey(0)
    k_params, k_x = jax.random.split(key)
    params = init_params(k_params, feature_dim, hidden_dim)
    features = jax.random.normal(k_x, (B, feature_dim, H, W), jnp.float32)

    out = spatial_coupling_forward(features, params)
    out = jax.block_until_ready(out)

    assert out.shape == (B, H, W, H, W), out.shape
    ref = reference_forward(features, params)
    max_err = float(jnp.max(jnp.abs(out - ref)))
    # bf16-MXU path lands at ~1e-3 abs error vs the f32 reference; 2e-2 is the
    # deliberate acceptance bound for the reduced-precision matmuls.
    assert jnp.all(jnp.isfinite(out)) and max_err < 2e-2, f"max_err={max_err}"

    print("KERNEL_OK")
</pallas_src>

<mosaic_0001>
module attributes {stable_mosaic.version = 11 : i64} {
  func.func @_encoder_kernel(%arg0: i32, %arg1: memref<1x256x36xbf16, #tpu.memory_space<vmem>>, %arg2: memref<36x32xbf16, #tpu.memory_space<vmem>>, %arg3: memref<1x32xf32, #tpu.memory_space<vmem>>, %arg4: memref<288x32xbf16, #tpu.memory_space<vmem>>, %arg5: memref<1x32xf32, #tpu.memory_space<vmem>>, %arg6: memref<256x9xf32, #tpu.memory_space<vmem>>, %arg7: memref<1x256x32xbf16, #tpu.memory_space<vmem>>) attributes {dimension_semantics = [#tpu.dimension_semantics<parallel>], iteration_bounds = array<i64: 2>, scalar_prefetch = 0 : i64, scratch_operands = 0 : i64, tpu.core_type = #tpu.core_type<tc>, window_params = [{transform_indices = @transform_0, window_bounds = array<i64: 1, 256, 36>}, {pipeline_mode = #tpu.pipeline_mode<synchronous>, transform_indices = @transform_1, window_bounds = array<i64: 36, 32>}, {pipeline_mode = #tpu.pipeline_mode<synchronous>, transform_indices = @transform_2, window_bounds = array<i64: 1, 32>}, {pipeline_mode = #tpu.pipeline_mode<synchronous>, transform_indices = @transform_3, window_bounds = array<i64: 288, 32>}, {pipeline_mode = #tpu.pipeline_mode<synchronous>, transform_indices = @transform_4, window_bounds = array<i64: 1, 32>}, {pipeline_mode = #tpu.pipeline_mode<synchronous>, transform_indices = @transform_5, window_bounds = array<i64: 256, 9>}, {transform_indices = @transform_6, window_bounds = array<i64: 1, 256, 32>}]} {
    %c0 = arith.constant 0 : index
    %c0_0 = arith.constant 0 : index
    %c0_1 = arith.constant 0 : index
    %0 = vector.load %arg1[%c0, %c0_0, %c0_1] : memref<1x256x36xbf16, #tpu.memory_space<vmem>>, vector<1x256x36xbf16>
    %1 = vector.shape_cast %0 : vector<1x256x36xbf16> to vector<256x36xbf16>
    %c0_2 = arith.constant 0 : index
    %c0_3 = arith.constant 0 : index
    %2 = vector.load %arg2[%c0_2, %c0_3] : memref<36x32xbf16, #tpu.memory_space<vmem>>, vector<36x32xbf16>
    %cst = arith.constant dense<0.000000e+00> : vector<256x32xf32>
    %3 = tpu.matmul %1, %2, %cst {dimension_numbers = #tpu.dot_dimension_numbers<[1], [0], [0], [1], [0, 0, 1, 1], [], []>} : vector<256x36xbf16>, vector<36x32xbf16>, vector<256x32xf32> -> vector<256x32xf32>
    %c0_4 = arith.constant 0 : index
    %c0_5 = arith.constant 0 : index
    %4 = vector.load %arg3[%c0_4, %c0_5] : memref<1x32xf32, #tpu.memory_space<vmem>>, vector<1x32xf32>
    %5 = vector.broadcast %4 : vector<1x32xf32> to vector<256x32xf32>
    %6 = arith.addf %3, %5 : vector<256x32xf32>
    %cst_6 = arith.constant 0.000000e+00 : f32
    %7 = vector.broadcast %cst_6 : f32 to vector<256x32xf32>
    %8 = arith.maximumf %6, %7 : vector<256x32xf32>
    %c17_i32 = arith.constant 17 : i32
    %9 = tpu.dynamic_rotate %8 by %c17_i32 dim 0 : vector<256x32xf32>, i32 -> vector<256x32xf32>
    %c0_7 = arith.constant 0 : index
    %c0_8 = arith.constant 0 : index
    %10 = vector.load %arg6[%c0_7, %c0_8] : memref<256x9xf32, #tpu.memory_space<vmem>>, vector<256x1xf32>
    %cst_9 = arith.constant 5.000000e-01 : f32
    %11 = vector.broadcast %cst_9 : f32 to vector<256x1xf32>
    %12 = arith.cmpf ogt, %10, %11 : vector<256x1xf32>
    %cst_10 = arith.constant 0.000000e+00 : f32
    %13 = vector.shape_cast %12 : vector<256x1xi1> to vector<256x1xi1>
    %14 = vector.broadcast %13 : vector<256x1xi1> to vector<256x32xi1>
    %15 = vector.broadcast %cst_10 : f32 to vector<256x32xf32>
    %16 = arith.select %14, %9, %15 : vector<256x32xi1>, vector<256x32xf32>
    %c16_i32 = arith.constant 16 : i32
    %17 = tpu.dynamic_rotate %8 by %c16_i32 dim 0 : vector<256x32xf32>, i32 -> vector<256x32xf32>
    %c0_11 = arith.constant 0 : index
    %c1 = arith.constant 1 : index
    %18 = vector.load %arg6[%c0_11, %c1] : memref<256x9xf32, #tpu.memory_space<vmem>>, vector<256x1xf32>
    %cst_12 = arith.constant 5.000000e-01 : f32
    %19 = vector.broadcast %cst_12 : f32 to vector<256x1xf32>
    %20 = arith.cmpf ogt, %18, %19 : vector<256x1xf32>
    %cst_13 = arith.constant 0.000000e+00 : f32
    %21 = vector.shape_cast %20 : vector<256x1xi1> to vector<256x1xi1>
    %22 = vector.broadcast %21 : vector<256x1xi1> to vector<256x32xi1>
    %23 = vector.broadcast %cst_13 : f32 to vector<256x32xf32>
    %24 = arith.select %22, %17, %23 : vector<256x32xi1>, vector<256x32xf32>
    %c15_i32 = arith.constant 15 : i32
    %25 = tpu.dynamic_rotate %8 by %c15_i32 dim 0 : vector<256x32xf32>, i32 -> vector<256x32xf32>
    %c0_14 = arith.constant 0 : index
    %c2 = arith.constant 2 : index
    %26 = vector.load %arg6[%c0_14, %c2] : memref<256x9xf32, #tpu.memory_space<vmem>>, vector<256x1xf32>
    %cst_15 = arith.constant 5.000000e-01 : f32
    %27 = vector.broadcast %cst_15 : f32 to vector<256x1xf32>
    %28 = arith.cmpf ogt, %26, %27 : vector<256x1xf32>
    %cst_16 = arith.constant 0.000000e+00 : f32
    %29 = vector.shape_cast %28 : vector<256x1xi1> to vector<256x1xi1>
    %30 = vector.broadcast %29 : vector<256x1xi1> to vector<256x32xi1>
    %31 = vector.broadcast %cst_16 : f32 to vector<256x32xf32>
    %32 = arith.select %30, %25, %31 : vector<256x32xi1>, vector<256x32xf32>
    %c1_i32 = arith.constant 1 : i32
    %33 = tpu.dynamic_rotate %8 by %c1_i32 dim 0 : vector<256x32xf32>, i32 -> vector<256x32xf32>
    %c0_17 = arith.constant 0 : index
    %c3 = arith.constant 3 : index
    %34 = vector.load %arg6[%c0_17, %c3] : memref<256x9xf32, #tpu.memory_space<vmem>>, vector<256x1xf32>
    %cst_18 = arith.constant 5.000000e-01 : f32
    %35 = vector.broadcast %cst_18 : f32 to vector<256x1xf32>
    %36 = arith.cmpf ogt, %34, %35 : vector<256x1xf32>
    %cst_19 = arith.constant 0.000000e+00 : f32
    %37 = vector.shape_cast %36 : vector<256x1xi1> to vector<256x1xi1>
    %38 = vector.broadcast %37 : vector<256x1xi1> to vector<256x32xi1>
    %39 = vector.broadcast %cst_19 : f32 to vector<256x32xf32>
    %40 = arith.select %38, %33, %39 : vector<256x32xi1>, vector<256x32xf32>
    %c255_i32 = arith.constant 255 : i32
    %41 = tpu.dynamic_rotate %8 by %c255_i32 dim 0 : vector<256x32xf32>, i32 -> vector<256x32xf32>
    %c0_20 = arith.constant 0 : index
    %c5 = arith.constant 5 : index
    %42 = vector.load %arg6[%c0_20, %c5] : memref<256x9xf32, #tpu.memory_space<vmem>>, vector<256x1xf32>
    %cst_21 = arith.constant 5.000000e-01 : f32
    %43 = vector.broadcast %cst_21 : f32 to vector<256x1xf32>
    %44 = arith.cmpf ogt, %42, %43 : vector<256x1xf32>
    %cst_22 = arith.constant 0.000000e+00 : f32
    %45 = vector.shape_cast %44 : vector<256x1xi1> to vector<256x1xi1>
    %46 = vector.broadcast %45 : vector<256x1xi1> to vector<256x32xi1>
    %47 = vector.broadcast %cst_22 : f32 to vector<256x32xf32>
    %48 = arith.select %46, %41, %47 : vector<256x32xi1>, vector<256x32xf32>
    %c241_i32 = arith.constant 241 : i32
    %49 = tpu.dynamic_rotate %8 by %c241_i32 dim 0 : vector<256x32xf32>, i32 -> vector<256x32xf32>
    %c0_23 = arith.constant 0 : index
    %c6 = arith.constant 6 : index
    %50 = vector.load %arg6[%c0_23, %c6] : memref<256x9xf32, #tpu.memory_space<vmem>>, vector<256x1xf32>
    %cst_24 = arith.constant 5.000000e-01 : f32
    %51 = vector.broadcast %cst_24 : f32 to vector<256x1xf32>
    %52 = arith.cmpf ogt, %50, %51 : vector<256x1xf32>
    %cst_25 = arith.constant 0.000000e+00 : f32
    %53 = vector.shape_cast %52 : vector<256x1xi1> to vector<256x1xi1>
    %54 = vector.broadcast %53 : vector<256x1xi1> to vector<256x32xi1>
    %55 = vector.broadcast %cst_25 : f32 to vector<256x32xf32>
    %56 = arith.select %54, %49, %55 : vector<256x32xi1>, vector<256x32xf32>
    %c240_i32 = arith.constant 240 : i32
    %57 = tpu.dynamic_rotate %8 by %c240_i32 dim 0 : vector<256x32xf32>, i32 -> vector<256x32xf32>
    %c0_26 = arith.constant 0 : index
    %c7 = arith.constant 7 : index
    %58 = vector.load %arg6[%c0_26, %c7] : memref<256x9xf32, #tpu.memory_space<vmem>>, vector<256x1xf32>
    %cst_27 = arith.constant 5.000000e-01 : f32
    %59 = vector.broadcast %cst_27 : f32 to vector<256x1xf32>
    %60 = arith.cmpf ogt, %58, %59 : vector<256x1xf32>
    %cst_28 = arith.constant 0.000000e+00 : f32
    %61 = vector.shape_cast %60 : vector<256x1xi1> to vector<256x1xi1>
    %62 = vector.broadcast %61 : vector<256x1xi1> to vector<256x32xi1>
    %63 = vector.broadcast %cst_28 : f32 to vector<256x32xf32>
    %64 = arith.select %62, %57, %63 : vector<256x32xi1>, vector<256x32xf32>
    %c239_i32 = arith.constant 239 : i32
    %65 = tpu.dynamic_rotate %8 by %c239_i32 dim 0 : vector<256x32xf32>, i32 -> vector<256x32xf32>
    %c0_29 = arith.constant 0 : index
    %c8 = arith.constant 8 : index
    %66 = vector.load %arg6[%c0_29, %c8] : memref<256x9xf32, #tpu.memory_space<vmem>>, vector<256x1xf32>
    %cst_30 = arith.constant 5.000000e-01 : f32
    %67 = vector.broadcast %cst_30 : f32 to vector<256x1xf32>
    %68 = arith.cmpf ogt, %66, %67 : vector<256x1xf32>
    %cst_31 = arith.constant 0.000000e+00 : f32
    %69 = vector.shape_cast %68 : vector<256x1xi1> to vector<256x1xi1>
    %70 = vector.broadcast %69 : vector<256x1xi1> to vector<256x32xi1>
    %71 = vector.broadcast %cst_31 : f32 to vector<256x32xf32>
    %72 = arith.select %70, %65, %71 : vector<256x32xi1>, vector<256x32xf32>
    %73 = tpu.concatenate %16, %24, %32, %40, %8, %48, %56, %64, %72 in 1 : vector<256x32xf32>, vector<256x32xf32>, vector<256x32xf32>, vector<256x32xf32>, vector<256x32xf32>, vector<256x32xf32>, vector<256x32xf32>, vector<256x32xf32>, vector<256x32xf32> -> vector<256x288xf32>
    %74 = arith.truncf %73 : vector<256x288xf32> to vector<256x288xbf16>
    %c0_32 = arith.constant 0 : index
    %c0_33 = arith.constant 0 : index
    %75 = vector.load %arg4[%c0_32, %c0_33] : memref<288x32xbf16, #tpu.memory_space<vmem>>, vector<288x32xbf16>
    %cst_34 = arith.constant dense<0.000000e+00> : vector<256x32xf32>
    %76 = tpu.matmul %74, %75, %cst_34 {dimension_numbers = #tpu.dot_dimension_numbers<[1], [0], [0], [1], [0, 0, 1, 1], [], []>} : vector<256x288xbf16>, vector<288x32xbf16>, vector<256x32xf32> -> vector<256x32xf32>
    %c0_35 = arith.constant 0 : index
    %c0_36 = arith.constant 0 : index
    %77 = vector.load %arg5[%c0_35, %c0_36] : memref<1x32xf32, #tpu.memory_space<vmem>>, vector<1x32xf32>
    %78 = vector.broadcast %77 : vector<1x32xf32> to vector<256x32xf32>
    %79 = arith.addf %76, %78 : vector<256x32xf32>
    %cst_37 = arith.constant 0.000000e+00 : f32
    %80 = vector.broadcast %cst_37 : f32 to vector<256x32xf32>
    %81 = arith.maximumf %79, %80 : vector<256x32xf32>
    %82 = arith.truncf %81 : vector<256x32xf32> to vector<256x32xbf16>
    %c0_38 = arith.constant 0 : index
    %c0_39 = arith.constant 0 : index
    %c0_40 = arith.constant 0 : index
    %83 = vector.load %arg7[%c0_38, %c0_39, %c0_40] : memref<1x256x32xbf16, #tpu.memory_space<vmem>>, vector<1x256x32xbf16>
    %84 = vector.shape_cast %83 : vector<1x256x32xbf16> to vector<256x32xbf16>
    %85 = vector.shape_cast %82 : vector<256x32xbf16> to vector<1x256x32xbf16>
    tpu.vector_store %arg7[%c0_38, %c0_39, %c0_40], %85 {strides = array<i32>} : memref<1x256x32xbf16, #tpu.memory_space<vmem>>, vector<1x256x32xbf16>,
    return
  }
  func.func @transform_0(%arg0: i32) -> (i32, i32, i32) {
    %c0_i32 = arith.constant 0 : i32
    %c0_i32_0 = arith.constant 0 : i32
    %c0_i32_1 = arith.constant 0 : i32
    return %arg0, %c0_i32, %c0_i32_0 : i32, i32, i32
  }
  func.func @transform_1(%arg0: i32) -> (i32, i32) {
    %c0_i32 = arith.constant 0 : i32
    %c0_i32_0 = arith.constant 0 : i32
    %c0_i32_1 = arith.constant 0 : i32
    return %c0_i32, %c0_i32_0 : i32, i32
  }
  func.func @transform_2(%arg0: i32) -> (i32, i32) {
    %c0_i32 = arith.constant 0 : i32
    %c0_i32_0 = arith.constant 0 : i32
    %c0_i32_1 = arith.constant 0 : i32
    return %c0_i32, %c0_i32_0 : i32, i32
  }
  func.func @transform_3(%arg0: i32) -> (i32, i32) {
    %c0_i32 = arith.constant 0 : i32
    %c0_i32_0 = arith.constant 0 : i32
    %c0_i32_1 = arith.constant 0 : i32
    return %c0_i32, %c0_i32_0 : i32, i32
  }
  func.func @transform_4(%arg0: i32) -> (i32, i32) {
    %c0_i32 = arith.constant 0 : i32
    %c0_i32_0 = arith.constant 0 : i32
    %c0_i32_1 = arith.constant 0 : i32
    return %c0_i32, %c0_i32_0 : i32, i32
  }
  func.func @transform_5(%arg0: i32) -> (i32, i32) {
    %c0_i32 = arith.constant 0 : i32
    %c0_i32_0 = arith.constant 0 : i32
    %c0_i32_1 = arith.constant 0 : i32
    return %c0_i32, %c0_i32_0 : i32, i32
  }
  func.func @transform_6(%arg0: i32) -> (i32, i32, i32) {
    %c0_i32 = arith.constant 0 : i32
    %c0_i32_0 = arith.constant 0 : i32
    %c0_i32_1 = arith.constant 0 : i32
    return %arg0, %c0_i32, %c0_i32_0 : i32, i32, i32
  }
}

</mosaic_0001>

<llo_original>
// kernel: tpu_custom_call.1
$region0: #{tpu_custom_call.1}
  #allocation0 [shape = 'u32[]', space=smem, size = 0x4, offset = 0x4, fixed_abs, tag = 'smem constant byte address 0x4 - core index']
  #allocation1 [shape = 'u32[72,128]{1,0:T(1,128)}', space=vmem, size = 0x9000, scoped, tag = 'internal scratch']
  %s0 = inlined_call_operand.vmem [shape: bf16[2,256,36], index: 0, kind: input, shape index: {}]
  %s1 = inlined_call_operand.vmem [shape: bf16[36,32], index: 1, kind: input, shape index: {}]
  %s2 = inlined_call_operand.vmem [shape: f32[1,32], index: 2, kind: input, shape index: {}]
  %s3 = inlined_call_operand.vmem [shape: bf16[288,32], index: 3, kind: input, shape index: {}]
  %s4 = inlined_call_operand.vmem [shape: f32[1,32], index: 4, kind: input, shape index: {}]
  %s5 = inlined_call_operand.vmem [shape: f32[256,9], index: 5, kind: input, shape index: {}]
  %s6 = inlined_call_operand.vmem [shape: bf16[2,256,32], index: 6, kind: output, shape index: {}]
  %s7 = sld [smem:[#allocation0]]
  $region57: #{tpu_custom_call.1} parent=0
    _
  %s9 = ssub.s32 1, %s7
  %s10 = scalar_select 0, %s9, %s7
  loop: start=0, step=1, limit=4
  $region2: #{tpu_custom_call.1} parent=0 // loop_pre_header
    _
  $region3: #{tpu_custom_call.1} parent=0 // loop_header
    %s12 = sphi 0, %s16
    %p13 = scmp.ge.s32.totalorder %s12, 4
    %s22 = sphi 0, %s24
    %s25 = sphi 0, %s22
    %s26 = sphi 0, %s25
    %s42 = sphi 0, %s26
    %s46 = sphi 0, %s46
    %s48 = sphi 0, %s46
    %s49 = sphi 0, %s48
    %s63 = sphi 0, %s49
    %s67 = sphi 0, %s67
    %s69 = sphi 0, %s67
    %s70 = sphi 0, %s69
    %s84 = sphi 0, %s70
    %s88 = sphi 0, %s88
    %s90 = sphi 0, %s88
    %s91 = sphi 0, %s90
    %s105 = sphi 0, %s91
    %s109 = sphi 0, %s109
    %s111 = sphi 0, %s109
    %s112 = sphi 0, %s111
    %s126 = sphi 0, %s112
    %s130 = sphi 0, %s130
    %s132 = sphi 0, %s130
    %s133 = sphi 0, %s132
    %s147 = sphi 0, %s133
    %s153 = sphi 0, %s155
    %s156 = sphi 0, %s153
    %s157 = sphi 0, %s156
    %s173 = sphi 0, %s157
  $region4: #{tpu_custom_call.1} parent=0 // loop_header_branch
    %15 = sbr.rel (%p13) target = $region8
  $region5: #{tpu_custom_call.1} parent=0 // loop_body
    %s17 = ssub.s32 %s12, 1
    %s18 = ssub.s32 %s12, 2
    %s19 = sadd.s32 %s12, 1
    %s20 = ssub.s32 %s12, %s19
    %p21 = scmp.eq.s32.totalorder %s20, 0
    %s23 = sadd.s32 %s22, 1
    %s24 = scalar_select %p21, %s22, %s23
    %p27 = pneg %p21
    %p28 = scmp.eq.s32.totalorder %s12, 1
    %p29 = por %p27, %p28
    %p30 = scmp.ne.s32.totalorder %s22, %s25
    %p31 = scmp.eq.s32.totalorder %s12, 0
    %p32 = por %p30, %p31
    %p33 = scmp.ne.s32.totalorder %s22, %s25
    %p34 = scmp.eq.s32.totalorder %s17, 1
    %p35 = por %p33, %p34
    %p36 = scmp.ne.s32.totalorder %s25, %s26
    %p37 = scmp.eq.s32.totalorder %s17, 0
    %p38 = por %p36, %p37
    %p39 = scmp.ne.s32.totalorder %s25, %s26
    %p40 = scmp.eq.s32.totalorder %s18, 1
    %p41 = por %p39, %p40
    %p43 = scmp.ne.s32.totalorder %s26, %s42
    %p44 = scmp.eq.s32.totalorder %s18, 0
    %p45 = por %p43, %p44
    %s47 = sadd.s32 %s46, 1
    %p50 = scmp.eq.s32.totalorder %s12, 1
    %p51 = scmp.ne.s32.totalorder %s46, %s48
    %p52 = scmp.eq.s32.totalorder %s12, 0
    %p53 = por %p51, %p52
    %p54 = scmp.ne.s32.totalorder %s46, %s48
    %p55 = scmp.eq.s32.totalorder %s17, 1
    %p56 = por %p54, %p55
    %p57 = scmp.ne.s32.totalorder %s48, %s49
    %p58 = scmp.eq.s32.totalorder %s17, 0
    %p59 = por %p57, %p58
    %p60 = scmp.ne.s32.totalorder %s48, %s49
    %p61 = scmp.eq.s32.totalorder %s18, 1
    %p62 = por %p60, %p61
    %p64 = scmp.ne.s32.totalorder %s49, %s63
    %p65 = scmp.eq.s32.totalorder %s18, 0
    %p66 = por %p64, %p65
    %s68 = sadd.s32 %s67, 1
    %p71 = scmp.eq.s32.totalorder %s12, 1
    %p72 = scmp.ne.s32.totalorder %s67, %s69
    %p73 = scmp.eq.s32.totalorder %s12, 0
    %p74 = por %p72, %p73
    %p75 = scmp.ne.s32.totalorder %s67, %s69
    %p76 = scmp.eq.s32.totalorder %s17, 1
    %p77 = por %p75, %p76
    %p78 = scmp.ne.s32.totalorder %s69, %s70
    %p79 = scmp.eq.s32.totalorder %s17, 0
    %p80 = por %p78, %p79
    %p81 = scmp.ne.s32.totalorder %s69, %s70
    %p82 = scmp.eq.s32.totalorder %s18, 1
    %p83 = por %p81, %p82
    %p85 = scmp.ne.s32.totalorder %s70, %s84
    %p86 = scmp.eq.s32.totalorder %s18, 0
    %p87 = por %p85, %p86
    %s89 = sadd.s32 %s88, 1
    %p92 = scmp.eq.s32.totalorder %s12, 1
    %p93 = scmp.ne.s32.totalorder %s88, %s90
    %p94 = scmp.eq.s32.totalorder %s12, 0
    %p95 = por %p93, %p94
    %p96 = scmp.ne.s32.totalorder %s88, %s90
    %p97 = scmp.eq.s32.totalorder %s17, 1
    %p98 = por %p96, %p97
    %p99 = scmp.ne.s32.totalorder %s90, %s91
    %p100 = scmp.eq.s32.totalorder %s17, 0
    %p101 = por %p99, %p100
    %p102 = scmp.ne.s32.totalorder %s90, %s91
    %p103 = scmp.eq.s32.totalorder %s18, 1
    %p104 = por %p102, %p103
    %p106 = scmp.ne.s32.totalorder %s91, %s105
    %p107 = scmp.eq.s32.totalorder %s18, 0
    %p108 = por %p106, %p107
    %s110 = sadd.s32 %s109, 1
    %p113 = scmp.eq.s32.totalorder %s12, 1
    %p114 = scmp.ne.s32.totalorder %s109, %s111
    %p115 = scmp.eq.s32.totalorder %s12, 0
    %p116 = por %p114, %p115
    %p117 = scmp.ne.s32.totalorder %s109, %s111
    %p118 = scmp.eq.s32.totalorder %s17, 1
    %p119 = por %p117, %p118
    %p120 = scmp.ne.s32.totalorder %s111, %s112
    %p121 = scmp.eq.s32.totalorder %s17, 0
    %p122 = por %p120, %p121
    %p123 = scmp.ne.s32.totalorder %s111, %s112
    %p124 = scmp.eq.s32.totalorder %s18, 1
    %p125 = por %p123, %p124
    %p127 = scmp.ne.s32.totalorder %s112, %s126
    %p128 = scmp.eq.s32.totalorder %s18, 0
    %p129 = por %p127, %p128
    %s131 = sadd.s32 %s130, 1
    %p134 = scmp.eq.s32.totalorder %s12, 1
    %p135 = scmp.ne.s32.totalorder %s130, %s132
    %p136 = scmp.eq.s32.totalorder %s12, 0
    %p137 = por %p135, %p136
    %p138 = scmp.ne.s32.totalorder %s130, %s132
    %p139 = scmp.eq.s32.totalorder %s17, 1
    %p140 = por %p138, %p139
    %p141 = scmp.ne.s32.totalorder %s132, %s133
    %p142 = scmp.eq.s32.totalorder %s17, 0
    %p143 = por %p141, %p142
    %p144 = scmp.ne.s32.totalorder %s132, %s133
    %p145 = scmp.eq.s32.totalorder %s18, 1
    %p146 = por %p144, %p145
    %p148 = scmp.ne.s32.totalorder %s133, %s147
    %p149 = scmp.eq.s32.totalorder %s18, 0
    %p150 = por %p148, %p149
    %s151 = ssub.s32 %s12, %s19
    %p152 = scmp.eq.s32.totalorder %s151, 0
    %s154 = sadd.s32 %s153, 1
    %s155 = scalar_select %p152, %s153, %s154
    %p158 = pneg %p152
    %p159 = scmp.eq.s32.totalorder %s12, 1
    %p160 = por %p158, %p159
    %p161 = scmp.ne.s32.totalorder %s153, %s156
    %p162 = scmp.eq.s32.totalorder %s12, 0
    %p163 = por %p161, %p162
    %p164 = scmp.ne.s32.totalorder %s153, %s156
    %p165 = scmp.eq.s32.totalorder %s17, 1
    %p166 = por %p164, %p165
    %p167 = scmp.ne.s32.totalorder %s156, %s157
    %p168 = scmp.eq.s32.totalorder %s17, 0
    %p169 = por %p167, %p168
    %p170 = scmp.ne.s32.totalorder %s156, %s157
    %p171 = scmp.eq.s32.totalorder %s18, 1
    %p172 = por %p170, %p171
    %p174 = scmp.ne.s32.totalorder %s157, %s173
    %p175 = scmp.eq.s32.totalorder %s18, 0
    %p176 = por %p174, %p175
    %p177 = scmp.le.s32.totalorder 1, %s12
    %p178 = scmp.lt.s32.totalorder %s12, 3
    %p179 = pnand %p177, %p178
    %p180 = pneg %p179
    // Predicated region
    $region9: #{tpu_custom_call.1} parent=5 // pred_check
      _
    $region10: #{tpu_custom_call.1} parent=5 // pred_check_branch
      %182 = sbr.rel (%p179) target = $region12
    $region11: #{tpu_custom_call.1} parent=5 // pred_region
      %s183 = ssub.s32 %s12, 1
      // Predicated region
      $region13: #{tpu_custom_call.1} parent=11 // pred_check
        %p184 = pneg %p59
      $region14: #{tpu_custom_call.1} parent=11 // pred_check_branch
        %186 = sbr.rel (%p184) target = $region16
      $region15: #{tpu_custom_call.1} parent=11 // pred_region
        _
      $region16: #{tpu_custom_call.1} parent=11 // pred_fallthru
        _
      // Predicated region
      $region17: #{tpu_custom_call.1} parent=11 // pred_check
        %p187 = pneg %p80
      $region18: #{tpu_custom_call.1} parent=11 // pred_check_branch
        %189 = sbr.rel (%p187) target = $region20
      $region19: #{tpu_custom_call.1} parent=11 // pred_region
        _
      $region20: #{tpu_custom_call.1} parent=11 // pred_fallthru
        _
      // Predicated region
      $region21: #{tpu_custom_call.1} parent=11 // pred_check
        %p190 = pneg %p101
      $region22: #{tpu_custom_call.1} parent=11 // pred_check_branch
        %192 = sbr.rel (%p190) target = $region24
      $region23: #{tpu_custom_call.1} parent=11 // pred_region
        _
      $region24: #{tpu_custom_call.1} parent=11 // pred_fallthru
        _
      // Predicated region
      $region25: #{tpu_custom_call.1} parent=11 // pred_check
        %p193 = pneg %p122
      $region26: #{tpu_custom_call.1} parent=11 // pred_check_branch
        %195 = sbr.rel (%p193) target = $region28
      $region27: #{tpu_custom_call.1} parent=11 // pred_region
        _
      $region28: #{tpu_custom_call.1} parent=11 // pred_fallthru
        _
      // Predicated region
      $region29: #{tpu_custom_call.1} parent=11 // pred_check
        %p196 = pneg %p143
      $region30: #{tpu_custom_call.1} parent=11 // pred_check_branch
        %198 = sbr.rel (%p196) target = $region32
      $region31: #{tpu_custom_call.1} parent=11 // pred_region
        _
      $region32: #{tpu_custom_call.1} parent=11 // pred_fallthru
        _
    $region12: #{tpu_custom_call.1} parent=5 // pred_fallthru
      _
    %p199 = scmp.lt.s32.totalorder %s12, 2
    // Predicated region
    $region33: #{tpu_custom_call.1} parent=5 // pred_check
      %p200 = pneg %p199
    $region34: #{tpu_custom_call.1} parent=5 // pred_check_branch
      %202 = sbr.rel (%p200) target = $region36
    $region35: #{tpu_custom_call.1} parent=5 // pred_region
      // Predicated region
      $region37: #{tpu_custom_call.1} parent=35 // pred_check
        %p203 = pneg %p32
      $region38: #{tpu_custom_call.1} parent=35 // pred_check_branch
        %205 = sbr.rel (%p203) target = $region40
      $region39: #{tpu_custom_call.1} parent=35 // pred_region
        %p206 = scmp.lt.s32.totalorder %s12, 1
        %s207 = scalar_select %p206, %s12, 1
        %s208 = smul.addr %s207, 32
        %s209 = smul.addr %s208, 4
        %s210 = scalar_lea.vmem %s0, %s209
      $region40: #{tpu_custom_call.1} parent=35 // pred_fallthru
        _
    $region36: #{tpu_custom_call.1} parent=5 // pred_fallthru
      _
    %p211 = scmp.le.s32.totalorder 1, %s12
    %p212 = scmp.lt.s32.totalorder %s12, 3
    %p213 = pnand %p211, %p212
    %p214 = pneg %p213
    // Predicated region
    $region41: #{tpu_custom_call.1} parent=5 // pred_check
      _
    $region42: #{tpu_custom_call.1} parent=5 // pred_check_branch
      %216 = sbr.rel (%p213) target = $region44
    $region43: #{tpu_custom_call.1} parent=5 // pred_region
      %s217 = ssub.s32 %s12, 1
      %p218 = scmp.lt.s32.totalorder %s17, 1
      %s219 = scalar_select %p218, %s17, 1
      %s220 = smul.addr %s219, 32
      %s221 = smul.addr %s220, 4
      %s222 = scalar_lea.vmem %s0, %s221
      %p223 = pneg %p38
      %p224 = pneg %p35
      %p225 = pneg %p59
      %p226 = pneg %p56
      %p227 = pneg %p80
      %p228 = pneg %p77
      %p229 = pneg %p101
      %p230 = pneg %p98
      %p231 = pneg %p122
      %p232 = pneg %p119
      %p233 = pneg %p143
      %p234 = pneg %p140
      %p235 = pneg %p169
      %p236 = pneg %p166
      %p237 = scmp.lt.s32.totalorder %s17, 1
      %s238 = scalar_select %p237, %s17, 1
      %s239 = smul.addr %s238, 32
      %s240 = smul.addr %s239, 4
      %s241 = scalar_lea.vmem %s6, %s240
      %p242 = scmp.lt.s32.totalorder %s17, 1
      %s243 = scalar_select %p242, %s17, 1
      %s244 = smul.addr %s243, 32
      %s245 = smul.addr %s244, 4
      %s246 = scalar_lea.vmem %s0, %s245
      %p247 = scmp.lt.s32.totalorder %s17, 1
      %s248 = scalar_select %p247, %s17, 1
      %s249 = smul.addr %s248, 32
      %s250 = smul.addr %s249, 4
      %s251 = scalar_lea.vmem %s6, %s250
      %v253 = vld [vmem:[%s246] sm:$0xf]
      %v254 = vld [vmem:[%s246 + $0x4] sm:$0xf]
      %v255 = vld [vmem:[%s246 + $0x8] sm:$0xf]
      %v256 = vld [vmem:[%s246 + $0xc] sm:$0xf]
      %v257 = vld [vmem:[%s246 + $0x10] sm:$0xf]
      %v258 = vld [vmem:[%s246 + $0x14] sm:$0xf]
      %v259 = vld [vmem:[%s246 + $0x18] sm:$0xf]
      %v260 = vld [vmem:[%s246 + $0x1c] sm:$0xf]
      %v261 = vld [vmem:[%s246 + $0x20] sm:$0xf]
      %v262 = vld [vmem:[%s246 + $0x24] sm:$0xf]
      %v263 = vld [vmem:[%s246 + $0x28] sm:$0xf]
      %v264 = vld [vmem:[%s246 + $0x2c] sm:$0xf]
      %v265 = vld [vmem:[%s246 + $0x30] sm:$0xf]
      %v266 = vld [vmem:[%s246 + $0x34] sm:$0xf]
      %v267 = vld [vmem:[%s246 + $0x38] sm:$0xf]
      %v268 = vld [vmem:[%s246 + $0x3c] sm:$0xf]
      %v269 = vld [vmem:[%s246 + $0x40] sm:$0xf]
      %v270 = vld [vmem:[%s246 + $0x44] sm:$0xf]
      %v271 = vld [vmem:[%s246 + $0x48] sm:$0xf]
      %v272 = vld [vmem:[%s246 + $0x4c] sm:$0xf]
      %v273 = vld [vmem:[%s246 + $0x50] sm:$0xf]
      %v274 = vld [vmem:[%s246 + $0x54] sm:$0xf]
      %v275 = vld [vmem:[%s246 + $0x58] sm:$0xf]
      %v276 = vld [vmem:[%s246 + $0x5c] sm:$0xf]
      %v277 = vld [vmem:[%s246 + $0x60] sm:$0xf]
      %v278 = vld [vmem:[%s246 + $0x64] sm:$0xf]
      %v279 = vld [vmem:[%s246 + $0x68] sm:$0xf]
      %v280 = vld [vmem:[%s246 + $0x6c] sm:$0xf]
      %v281 = vld [vmem:[%s246 + $0x70] sm:$0xf]
      %v282 = vld [vmem:[%s246 + $0x74] sm:$0xf]
      %v283 = vld [vmem:[%s246 + $0x78] sm:$0xf]
      %v284 = vld [vmem:[%s246 + $0x7c] sm:$0xf]
      %v285 = vld [vmem:[%s1] sm:$0xf]
      %v286 = vld [vmem:[%s1 + $0x4] sm:$0xf]
      %v287 = vld [vmem:[%s1 + $0x8] sm:$0xf]
      %v288 = vld [vmem:[%s1 + $0xc] sm:$0xf]
      %v289 = vld [vmem:[%s1 + $0x10] sm:$0x3]
      %v290 = vld [vmem:[%s2] sm:$0x1]
      %v292 = vperm.slane %v290, 0
      %v326 = vunpack.c.l.b16 %v253
      %v327 = vunpack.c.l.b16 %v254
      %v328 = vunpack.c.l.b16 %v255
      %v329 = vunpack.c.l.b16 %v256
      %v330 = vunpack.c.l.b16 %v257
      %v331 = vunpack.c.l.b16 %v258
      %v332 = vunpack.c.l.b16 %v259
      %v333 = vunpack.c.l.b16 %v260
      %v334 = vunpack.c.l.b16 %v261
      %v335 = vunpack.c.l.b16 %v262
      %v336 = vunpack.c.l.b16 %v263
      %v337 = vunpack.c.l.b16 %v264
      %v338 = vunpack.c.l.b16 %v265
      %v339 = vunpack.c.l.b16 %v266
      %v340 = vunpack.c.l.b16 %v267
      %v341 = vunpack.c.l.b16 %v268
      %v342 = vunpack.c.l.b16 %v269
      %v343 = vunpack.c.l.b16 %v270
      %v344 = vunpack.c.l.b16 %v271
      %v345 = vunpack.c.l.b16 %v272
      %v346 = vunpack.c.l.b16 %v273
      %v347 = vunpack.c.l.b16 %v274
      %v348 = vunpack.c.l.b16 %v275
      %v349 = vunpack.c.l.b16 %v276
      %v350 = vunpack.c.l.b16 %v277
      %v351 = vunpack.c.l.b16 %v278
      %v352 = vunpack.c.l.b16 %v279
      %v353 = vunpack.c.l.b16 %v280
      %v354 = vunpack.c.l.b16 %v281
      %v355 = vunpack.c.l.b16 %v282
      %v356 = vunpack.c.l.b16 %v283
      %v357 = vunpack.c.l.b16 %v284
      %v358 = vpack.c.b16 %v327, %v326
      %v359 = vpack.c.b16 %v329, %v328
      %v360 = vpack.c.b16 %v331, %v330
      %v361 = vpack.c.b16 %v333, %v332
      %v362 = vpack.c.b16 %v335, %v334
      %v363 = vpack.c.b16 %v337, %v336
      %v364 = vpack.c.b16 %v339, %v338
      %v365 = vpack.c.b16 %v341, %v340
      %v366 = vpack.c.b16 %v343, %v342
      %v367 = vpack.c.b16 %v345, %v344
      %v368 = vpack.c.b16 %v347, %v346
      %v369 = vpack.c.b16 %v349, %v348
      %v370 = vpack.c.b16 %v351, %v350
      %v371 = vpack.c.b16 %v353, %v352
      %v372 = vpack.c.b16 %v355, %v354
      %v373 = vpack.c.b16 %v357, %v356
      %v379 = vunpack.c.l.b16 %v285
      %v380 = vunpack.c.l.b16 %v286
      %v381 = vunpack.c.l.b16 %v287
      %v382 = vunpack.c.l.b16 %v288
      %v383 = vunpack.c.l.b16 %v289
      %v384 = vpack.c.b16 %v380, %v379
      %v385 = vpack.c.b16 %v382, %v381
      %v386 = vpack.c.b16 %v383, %v383
      %vm389 = vcmask 293888
      %v391 = vsel %vm389, %v358, 0
      %v394 = vsel %vm389, %v359, 0
      %v397 = vsel %vm389, %v360, 0
      %v400 = vsel %vm389, %v361, 0
      %v403 = vsel %vm389, %v362, 0
      %v406 = vsel %vm389, %v363, 0
      %v409 = vsel %vm389, %v364, 0
      %v412 = vsel %vm389, %v365, 0
      %v415 = vsel %vm389, %v366, 0
      %v418 = vsel %vm389, %v367, 0
      %v421 = vsel %vm389, %v368, 0
      %v424 = vsel %vm389, %v369, 0
      %v427 = vsel %vm389, %v370, 0
      %v430 = vsel %vm389, %v371, 0
      %v433 = vsel %vm389, %v372, 0
      %v436 = vsel %vm389, %v373, 0
      %vm438 = vcmask 1041408
      %v440 = vsel %vm438, %v386, 0
      %442 = vmatpush.bf16.msra.mxu0 0
      %443 = vmatpush.bf16.msra.mxu0 0
      %444 = vmatpush.bf16.msra.mxu0 0
      %445 = vmatpush.bf16.msra.mxu0 0
      %446 = vmatpush.bf16.msra.mxu0 0
      %447 = vmatpush.bf16.msra.mxu0 %v440
      %448 = vmatpush.bf16.msra.mxu0 %v385
      %449 = vmatpush.bf16.msra.mxu0 %v384
      %450 = vmatmul.bf16.gmra.mxu0 %v391
      %v451 = vpop.f32.mrf.mxu0
      %v452 = vadd.f32 %v292, %v451
      %v453 = vpop.f32.mrf.mxu0
      %v454 = vadd.f32 %v292, %v453
      %455 = vmatmul.bf16.gmra.mxu0 %v394
      %v456 = vpop.f32.mrf.mxu0
      %v457 = vadd.f32 %v292, %v456
      %v458 = vpop.f32.mrf.mxu0
      %v459 = vadd.f32 %v292, %v458
      %460 = vmatmul.bf16.gmra.mxu0 %v397
      %v461 = vpop.f32.mrf.mxu0
      %v462 = vadd.f32 %v292, %v461
      %v463 = vpop.f32.mrf.mxu0
      %v464 = vadd.f32 %v292, %v463
      %465 = vmatmul.bf16.gmra.mxu0 %v400
      %v466 = vpop.f32.mrf.mxu0
      %v467 = vadd.f32 %v292, %v466
      %v468 = vpop.f32.mrf.mxu0
      %v469 = vadd.f32 %v292, %v468
      %470 = vmatmul.bf16.gmra.mxu0 %v403
      %v471 = vpop.f32.mrf.mxu0
      %v472 = vadd.f32 %v292, %v471
      %v473 = vpop.f32.mrf.mxu0
      %v474 = vadd.f32 %v292, %v473
      %475 = vmatmul.bf16.gmra.mxu0 %v406
      %v476 = vpop.f32.mrf.mxu0
      %v477 = vadd.f32 %v292, %v476
      %v478 = vpop.f32.mrf.mxu0
      %v479 = vadd.f32 %v292, %v478
      %480 = vmatmul.bf16.gmra.mxu0 %v409
      %v481 = vpop.f32.mrf.mxu0
      %v482 = vadd.f32 %v292, %v481
      %v483 = vpop.f32.mrf.mxu0
      %v484 = vadd.f32 %v292, %v483
      %485 = vmatmul.bf16.gmra.mxu0 %v412
      %v486 = vpop.f32.mrf.mxu0
      %v487 = vadd.f32 %v292, %v486
      %v488 = vpop.f32.mrf.mxu0
      %v489 = vadd.f32 %v292, %v488
      %490 = vmatmul.bf16.gmra.mxu0 %v415
      %v491 = vpop.f32.mrf.mxu0
      %v492 = vadd.f32 %v292, %v491
      %v493 = vpop.f32.mrf.mxu0
      %v494 = vadd.f32 %v292, %v493
      %495 = vmatmul.bf16.gmra.mxu0 %v418
      %v496 = vpop.f32.mrf.mxu0
      %v497 = vadd.f32 %v292, %v496
      %v498 = vpop.f32.mrf.mxu0
      %v499 = vadd.f32 %v292, %v498
      %500 = vmatmul.bf16.gmra.mxu0 %v421
      %v501 = vpop.f32.mrf.mxu0
      %v502 = vadd.f32 %v292, %v501
      %v503 = vpop.f32.mrf.mxu0
      %v504 = vadd.f32 %v292, %v503
      %505 = vmatmul.bf16.gmra.mxu0 %v424
      %v506 = vpop.f32.mrf.mxu0
      %v507 = vadd.f32 %v292, %v506
      %v508 = vpop.f32.mrf.mxu0
      %v509 = vadd.f32 %v292, %v508
      %510 = vmatmul.bf16.gmra.mxu0 %v427
      %v511 = vpop.f32.mrf.mxu0
      %v512 = vadd.f32 %v292, %v511
      %v513 = vpop.f32.mrf.mxu0
      %v514 = vadd.f32 %v292, %v513
      %515 = vmatmul.bf16.gmra.mxu0 %v430
      %v516 = vpop.f32.mrf.mxu0
      %v517 = vadd.f32 %v292, %v516
      %v518 = vpop.f32.mrf.mxu0
      %v519 = vadd.f32 %v292, %v518
      %520 = vmatmul.bf16.gmra.mxu0 %v433
      %v521 = vpop.f32.mrf.mxu0
      %v522 = vadd.f32 %v292, %v521
      %v523 = vpop.f32.mrf.mxu0
      %v524 = vadd.f32 %v292, %v523
      %525 = vmatmul.bf16.gmra.mxu0 %v436
      %v526 = vpop.f32.mrf.mxu0
      %v527 = vadd.f32 %v292, %v526
      %v528 = vpop.f32.mrf.mxu0
      %v529 = vadd.f32 %v292, %v528
      %530 = vdwg.mxu0
      %v531 = vmax.f32 %v452, 0.0
      %v532 = vmax.f32 %v454, 0.0
      %v533 = vmax.f32 %v457, 0.0
      %v534 = vmax.f32 %v459, 0.0
      %v535 = vmax.f32 %v462, 0.0
      %v536 = vmax.f32 %v464, 0.0
      %v537 = vmax.f32 %v467, 0.0
      %v538 = vmax.f32 %v469, 0.0
      %v539 = vmax.f32 %v472, 0.0
      %v540 = vmax.f32 %v474, 0.0
      %v541 = vmax.f32 %v477, 0.0
      %v542 = vmax.f32 %v479, 0.0
      %v543 = vmax.f32 %v482, 0.0
      %v544 = vmax.f32 %v484, 0.0
      %v545 = vmax.f32 %v487, 0.0
      %v546 = vmax.f32 %v489, 0.0
      %v547 = vmax.f32 %v492, 0.0
      %v548 = vmax.f32 %v494, 0.0
      %v549 = vmax.f32 %v497, 0.0
      %v550 = vmax.f32 %v499, 0.0
      %v551 = vmax.f32 %v502, 0.0
      %v552 = vmax.f32 %v504, 0.0
      %v553 = vmax.f32 %v507, 0.0
      %v554 = vmax.f32 %v509, 0.0
      %v555 = vmax.f32 %v512, 0.0
      %v556 = vmax.f32 %v514, 0.0
      %v557 = vmax.f32 %v517, 0.0
      %v558 = vmax.f32 %v519, 0.0
      %v559 = vmax.f32 %v522, 0.0
      %v560 = vmax.f32 %v524, 0.0
      %v561 = vmax.f32 %v527, 0.0
      %v562 = vmax.f32 %v529, 0.0
      %v563 = vrot.slane %v531, 7
      %v564 = vrot.slane %v532, 7
      %v565 = vrot.slane %v533, 7
      %v566 = vrot.slane %v534, 7
      %v567 = vrot.slane %v535, 7
      %v568 = vrot.slane %v536, 7
      %v569 = vrot.slane %v537, 7
      %v570 = vrot.slane %v538, 7
      %v571 = vrot.slane %v539, 7
      %v572 = vrot.slane %v540, 7
      %v573 = vrot.slane %v541, 7
      %v574 = vrot.slane %v542, 7
      %v575 = vrot.slane %v543, 7
      %v576 = vrot.slane %v544, 7
      %v577 = vrot.slane %v545, 7
      %v578 = vrot.slane %v546, 7
      %v579 = vrot.slane %v547, 7
      %v580 = vrot.slane %v548, 7
      %v581 = vrot.slane %v549, 7
      %v582 = vrot.slane %v550, 7
      %v583 = vrot.slane %v551, 7
      %v584 = vrot.slane %v552, 7
      %v585 = vrot.slane %v553, 7
      %v586 = vrot.slane %v554, 7
      %v587 = vrot.slane %v555, 7
      %v588 = vrot.slane %v556, 7
      %v589 = vrot.slane %v557, 7
      %v590 = vrot.slane %v558, 7
      %v591 = vrot.slane %v559, 7
      %v592 = vrot.slane %v560, 7
      %v593 = vrot.slane %v561, 7
      %v594 = vrot.slane %v562, 7
      %v595 = vlaneseq
      %v596 = vshrl.u32 %v595, 7
      %vm597 = vcmp.lt.s32.totalorder %v596, 1
      %v598 = vsel %vm597, %v593, %v594
      %v599 = vsel %vm597, %v592, %v593
      %v600 = vsel %vm597, %v591, %v592
      %v601 = vsel %vm597, %v590, %v591
      %v602 = vsel %vm597, %v589, %v590
      %v603 = vsel %vm597, %v588, %v589
      %v604 = vsel %vm597, %v587, %v588
      %v605 = vsel %vm597, %v586, %v587
      %v606 = vsel %vm597, %v585, %v586
      %v607 = vsel %vm597, %v584, %v585
      %v608 = vsel %vm597, %v583, %v584
      %v609 = vsel %vm597, %v582, %v583
      %v610 = vsel %vm597, %v581, %v582
      %v611 = vsel %vm597, %v580, %v581
      %v612 = vsel %vm597, %v579, %v580
      %v613 = vsel %vm597, %v578, %v579
      %v614 = vsel %vm597, %v577, %v578
      %v615 = vsel %vm597, %v576, %v577
      %v616 = vsel %vm597, %v575, %v576
      %v617 = vsel %vm597, %v574, %v575
      %v618 = vsel %vm597, %v573, %v574
      %v619 = vsel %vm597, %v572, %v573
      %v620 = vsel %vm597, %v571, %v572
      %v621 = vsel %vm597, %v570, %v571
      %v622 = vsel %vm597, %v569, %v570
      %v623 = vsel %vm597, %v568, %v569
      %v624 = vsel %vm597, %v567, %v568
      %v625 = vsel %vm597, %v566, %v567
      %v626 = vsel %vm597, %v565, %v566
      %v627 = vsel %vm597, %v564, %v565
      %v628 = vsel %vm597, %v563, %v564
      %v629 = vsel %vm597, %v594, %v563
      %v630 = vld [vmem:[%s5] sm:$0xff]
      %v631 = vld [vmem:[%s5 + $0x8] sm:$0xff]
      %v632 = vld [vmem:[%s5 + $0x10] sm:$0xff]
      %v633 = vld [vmem:[%s5 + $0x18] sm:$0xff]
      %v634 = vld [vmem:[%s5 + $0x20] sm:$0xff]
      %v635 = vld [vmem:[%s5 + $0x28] sm:$0xff]
      %v636 = vld [vmem:[%s5 + $0x30] sm:$0xff]
      %v637 = vld [vmem:[%s5 + $0x38] sm:$0xff]
      %v638 = vld [vmem:[%s5 + $0x40] sm:$0xff]
      %v639 = vld [vmem:[%s5 + $0x48] sm:$0xff]
      %v640 = vld [vmem:[%s5 + $0x50] sm:$0xff]
      %v641 = vld [vmem:[%s5 + $0x58] sm:$0xff]
      %v642 = vld [vmem:[%s5 + $0x60] sm:$0xff]
      %v643 = vld [vmem:[%s5 + $0x68] sm:$0xff]
      %v644 = vld [vmem:[%s5 + $0x70] sm:$0xff]
      %v645 = vld [vmem:[%s5 + $0x78] sm:$0xff]
      %v646 = vld [vmem:[%s5 + $0x80] sm:$0xff]
      %v647 = vld [vmem:[%s5 + $0x88] sm:$0xff]
      %v648 = vld [vmem:[%s5 + $0x90] sm:$0xff]
      %v649 = vld [vmem:[%s5 + $0x98] sm:$0xff]
      %v650 = vld [vmem:[%s5 + $0xa0] sm:$0xff]
      %v651 = vld [vmem:[%s5 + $0xa8] sm:$0xff]
      %v652 = vld [vmem:[%s5 + $0xb0] sm:$0xff]
      %v653 = vld [vmem:[%s5 + $0xb8] sm:$0xff]
      %v654 = vld [vmem:[%s5 + $0xc0] sm:$0xff]
      %v655 = vld [vmem:[%s5 + $0xc8] sm:$0xff]
      %v656 = vld [vmem:[%s5 + $0xd0] sm:$0xff]
      %v657 = vld [vmem:[%s5 + $0xd8] sm:$0xff]
      %v658 = vld [vmem:[%s5 + $0xe0] sm:$0xff]
      %v659 = vld [vmem:[%s5 + $0xe8] sm:$0xff]
      %v660 = vld [vmem:[%s5 + $0xf0] sm:$0xff]
      %v661 = vld [vmem:[%s5 + $0xf8] sm:$0xff]
      %vm662 = vcmp.gt.f32.partialorder %v630, 0.5
      %vm663 = vcmp.gt.f32.partialorder %v631, 0.5
      %vm664 = vcmp.gt.f32.partialorder %v632, 0.5
      %vm665 = vcmp.gt.f32.partialorder %v633, 0.5
      %vm666 = vcmp.gt.f32.partialorder %v634, 0.5
      %vm667 = vcmp.gt.f32.partialorder %v635, 0.5
      %vm668 = vcmp.gt.f32.partialorder %v636, 0.5
      %vm669 = vcmp.gt.f32.partialorder %v637, 0.5
      %vm670 = vcmp.gt.f32.partialorder %v638, 0.5
      %vm671 = vcmp.gt.f32.partialorder %v639, 0.5
      %vm672 = vcmp.gt.f32.partialorder %v640, 0.5
      %vm673 = vcmp.gt.f32.partialorder %v641, 0.5
      %vm674 = vcmp.gt.f32.partialorder %v642, 0.5
      %vm675 = vcmp.gt.f32.partialorder %v643, 0.5
      %vm676 = vcmp.gt.f32.partialorder %v644, 0.5
      %vm677 = vcmp.gt.f32.partialorder %v645, 0.5
      %vm678 = vcmp.gt.f32.partialorder %v646, 0.5
      %vm679 = vcmp.gt.f32.partialorder %v647, 0.5
      %vm680 = vcmp.gt.f32.partialorder %v648, 0.5
      %vm681 = vcmp.gt.f32.partialorder %v649, 0.5
      %vm682 = vcmp.gt.f32.partialorder %v650, 0.5
      %vm683 = vcmp.gt.f32.partialorder %v651, 0.5
      %vm684 = vcmp.gt.f32.partialorder %v652, 0.5
      %vm685 = vcmp.gt.f32.partialorder %v653, 0.5
      %vm686 = vcmp.gt.f32.partialorder %v654, 0.5
      %vm687 = vcmp.gt.f32.partialorder %v655, 0.5
      %vm688 = vcmp.gt.f32.partialorder %v656, 0.5
      %vm689 = vcmp.gt.f32.partialorder %v657, 0.5
      %vm690 = vcmp.gt.f32.partialorder %v658, 0.5
      %vm691 = vcmp.gt.f32.partialorder %v659, 0.5
      %vm692 = vcmp.gt.f32.partialorder %v660, 0.5
      %vm693 = vcmp.gt.f32.partialorder %v661, 0.5
      %v694 = vsel %vm662, 1, 0
      %v695 = vsel %vm663, 1, 0
      %v696 = vsel %vm664, 1, 0
      %v697 = vsel %vm665, 1, 0
      %v698 = vsel %vm666, 1, 0
      %v699 = vsel %vm667, 1, 0
      %v700 = vsel %vm668, 1, 0
      %v701 = vsel %vm669, 1, 0
      %v702 = vsel %vm670, 1, 0
      %v703 = vsel %vm671, 1, 0
      %v704 = vsel %vm672, 1, 0
      %v705 = vsel %vm673, 1, 0
      %v706 = vsel %vm674, 1, 0
      %v707 = vsel %vm675, 1, 0
      %v708 = vsel %vm676, 1, 0
      %v709 = vsel %vm677, 1, 0
      %v710 = vsel %vm678, 1, 0
      %v711 = vsel %vm679, 1, 0
      %v712 = vsel %vm680, 1, 0
      %v713 = vsel %vm681, 1, 0
      %v714 = vsel %vm682, 1, 0
      %v715 = vsel %vm683, 1, 0
      %v716 = vsel %vm684, 1, 0
      %v717 = vsel %vm685, 1, 0
      %v718 = vsel %vm686, 1, 0
      %v719 = vsel %vm687, 1, 0
      %v720 = vsel %vm688, 1, 0
      %v721 = vsel %vm689, 1, 0
      %v722 = vsel %vm690, 1, 0
      %v723 = vsel %vm691, 1, 0
      %v724 = vsel %vm692, 1, 0
      %v725 = vsel %vm693, 1, 0
      %726 = vset.pattern.permute.xlu0 0
      %727 = vperm.xlu0 %726, %v694
      %v728 = vpop.permute.xlu0 %727
      %729 = vset.pattern.permute.xlu0 0
      %730 = vperm.xlu0 %729, %v695
      %v731 = vpop.permute.xlu0 %730
      %732 = vset.pattern.permute.xlu0 0
      %733 = vperm.xlu0 %732, %v696
      %v734 = vpop.permute.xlu0 %733
      %735 = vset.pattern.permute.xlu0 0
      %736 = vperm.xlu0 %735, %v697
      %v737 = vpop.permute.xlu0 %736
      %738 = vset.pattern.permute.xlu0 0
      %739 = vperm.xlu0 %738, %v698
      %v740 = vpop.permute.xlu0 %739
      %741 = vset.pattern.permute.xlu0 0
      %742 = vperm.xlu0 %741, %v699
      %v743 = vpop.permute.xlu0 %742
      %744 = vset.pattern.permute.xlu0 0
      %745 = vperm.xlu0 %744, %v700
      %v746 = vpop.permute.xlu0 %745
      %747 = vset.pattern.permute.xlu0 0
      %748 = vperm.xlu0 %747, %v701
      %v749 = vpop.permute.xlu0 %748
      %750 = vset.pattern.permute.xlu0 0
      %751 = vperm.xlu0 %750, %v702
      %v752 = vpop.permute.xlu0 %751
      %753 = vset.pattern.permute.xlu0 0
      %754 = vperm.xlu0 %753, %v703
      %v755 = vpop.permute.xlu0 %754
      %756 = vset.pattern.permute.xlu0 0
      %757 = vperm.xlu0 %756, %v704
      %v758 = vpop.permute.xlu0 %757
      %759 = vset.pattern.permute.xlu0 0
      %760 = vperm.xlu0 %759, %v705
      %v761 = vpop.permute.xlu0 %760
      %762 = vset.pattern.permute.xlu0 0
      %763 = vperm.xlu0 %762, %v706
      %v764 = vpop.permute.xlu0 %763
      %765 = vset.pattern.permute.xlu0 0
      %766 = vperm.xlu0 %765, %v707
      %v767 = vpop.permute.xlu0 %766
      %768 = vset.pattern.permute.xlu0 0
      %769 = vperm.xlu0 %768, %v708
      %v770 = vpop.permute.xlu0 %769
      %771 = vset.pattern.permute.xlu0 0
      %772 = vperm.xlu0 %771, %v709
      %v773 = vpop.permute.xlu0 %772
      %774 = vset.pattern.permute.xlu0 0
      %775 = vperm.xlu0 %774, %v710
      %v776 = vpop.permute.xlu0 %775
      %777 = vset.pattern.permute.xlu0 0
      %778 = vperm.xlu0 %777, %v711
      %v779 = vpop.permute.xlu0 %778
      %780 = vset.pattern.permute.xlu0 0
      %781 = vperm.xlu0 %780, %v712
      %v782 = vpop.permute.xlu0 %781
      %783 = vset.pattern.permute.xlu0 0
      %784 = vperm.xlu0 %783, %v713
      %v785 = vpop.permute.xlu0 %784
      %786 = vset.pattern.permute.xlu0 0
      %787 = vperm.xlu0 %786, %v714
      %v788 = vpop.permute.xlu0 %787
      %789 = vset.pattern.permute.xlu0 0
      %790 = vperm.xlu0 %789, %v715
      %v791 = vpop.permute.xlu0 %790
      %792 = vset.pattern.permute.xlu0 0
      %793 = vperm.xlu0 %792, %v716
      %v794 = vpop.permute.xlu0 %793
      %795 = vset.pattern.permute.xlu0 0
      %796 = vperm.xlu0 %795, %v717
      %v797 = vpop.permute.xlu0 %796
      %798 = vset.pattern.permute.xlu0 0
      %799 = vperm.xlu0 %798, %v718
      %v800 = vpop.permute.xlu0 %799
      %801 = vset.pattern.permute.xlu0 0
      %802 = vperm.xlu0 %801, %v719
      %v803 = vpop.permute.xlu0 %802
      %804 = vset.pattern.permute.xlu0 0
      %805 = vperm.xlu0 %804, %v720
      %v806 = vpop.permute.xlu0 %805
      %807 = vset.pattern.permute.xlu0 0
      %808 = vperm.xlu0 %807, %v721
      %v809 = vpop.permute.xlu0 %808
      %810 = vset.pattern.permute.xlu0 0
      %811 = vperm.xlu0 %810, %v722
      %v812 = vpop.permute.xlu0 %811
      %813 = vset.pattern.permute.xlu0 0
      %814 = vperm.xlu0 %813, %v723
      %v815 = vpop.permute.xlu0 %814
      %816 = vset.pattern.permute.xlu0 0
      %817 = vperm.xlu0 %816, %v724
      %v818 = vpop.permute.xlu0 %817
      %819 = vset.pattern.permute.xlu0 0
      %820 = vperm.xlu0 %819, %v725
      %v821 = vpop.permute.xlu0 %820
      %vm822 = vcmp.eq.s32.totalorder %v728, 1
      %vm823 = vcmp.eq.s32.totalorder %v731, 1
      %vm824 = vcmp.eq.s32.totalorder %v734, 1
      %vm825 = vcmp.eq.s32.totalorder %v737, 1
      %vm826 = vcmp.eq.s32.totalorder %v740, 1
      %vm827 = vcmp.eq.s32.totalorder %v743, 1
      %vm828 = vcmp.eq.s32.totalorder %v746, 1
      %vm829 = vcmp.eq.s32.totalorder %v749, 1
      %vm830 = vcmp.eq.s32.totalorder %v752, 1
      %vm831 = vcmp.eq.s32.totalorder %v755, 1
      %vm832 = vcmp.eq.s32.totalorder %v758, 1
      %vm833 = vcmp.eq.s32.totalorder %v761, 1
      %vm834 = vcmp.eq.s32.totalorder %v764, 1
      %vm835 = vcmp.eq.s32.totalorder %v767, 1
      %vm836 = vcmp.eq.s32.totalorder %v770, 1
      %vm837 = vcmp.eq.s32.totalorder %v773, 1
      %vm838 = vcmp.eq.s32.totalorder %v776, 1
      %vm839 = vcmp.eq.s32.totalorder %v779, 1
      %vm840 = vcmp.eq.s32.totalorder %v782, 1
      %vm841 = vcmp.eq.s32.totalorder %v785, 1
      %vm842 = vcmp.eq.s32.totalorder %v788, 1
      %vm843 = vcmp.eq.s32.totalorder %v791, 1
      %vm844 = vcmp.eq.s32.totalorder %v794, 1
      %vm845 = vcmp.eq.s32.totalorder %v797, 1
      %vm846 = vcmp.eq.s32.totalorder %v800, 1
      %vm847 = vcmp.eq.s32.totalorder %v803, 1
      %vm848 = vcmp.eq.s32.totalorder %v806, 1
      %vm849 = vcmp.eq.s32.totalorder %v809, 1
      %vm850 = vcmp.eq.s32.totalorder %v812, 1
      %vm851 = vcmp.eq.s32.totalorder %v815, 1
      %vm852 = vcmp.eq.s32.totalorder %v818, 1
      %vm853 = vcmp.eq.s32.totalorder %v821, 1
      %v854 = vsel %vm822, %v599, 0.0
      %v855 = vsel %vm823, %v598, 0.0
      %v856 = vsel %vm824, %v629, 0.0
      %v857 = vsel %vm825, %v628, 0.0
      %v858 = vsel %vm826, %v627, 0.0
      %v859 = vsel %vm827, %v626, 0.0
      %v860 = vsel %vm828, %v625, 0.0
      %v861 = vsel %vm829, %v624, 0.0
      %v862 = vsel %vm830, %v623, 0.0
      %v863 = vsel %vm831, %v622, 0.0
      %v864 = vsel %vm832, %v621, 0.0
      %v865 = vsel %vm833, %v620, 0.0
      %v866 = vsel %vm834, %v619, 0.0
      %v867 = vsel %vm835, %v618, 0.0
      %v868 = vsel %vm836, %v617, 0.0
      %v869 = vsel %vm837, %v616, 0.0
      %v870 = vsel %vm838, %v615, 0.0
      %v871 = vsel %vm839, %v614, 0.0
      %v872 = vsel %vm840, %v613, 0.0
      %v873 = vsel %vm841, %v612, 0.0
      %v874 = vsel %vm842, %v611, 0.0
      %v875 = vsel %vm843, %v610, 0.0
      %v876 = vsel %vm844, %v609, 0.0
      %v877 = vsel %vm845, %v608, 0.0
      %v878 = vsel %vm846, %v607, 0.0
      %v879 = vsel %vm847, %v606, 0.0
      %v880 = vsel %vm848, %v605, 0.0
      %v881 = vsel %vm849, %v604, 0.0
      %v882 = vsel %vm850, %v603, 0.0
      %v883 = vsel %vm851, %v602, 0.0
      %v884 = vsel %vm852, %v601, 0.0
      %v885 = vsel %vm853, %v600, 0.0
      %886 = vset.pattern.permute.xlu0 1
      %887 = vperm.xlu0 %886, %v694
      %v888 = vpop.permute.xlu0 %887
      %889 = vset.pattern.permute.xlu0 1
      %890 = vperm.xlu0 %889, %v695
      %v891 = vpop.permute.xlu0 %890
      %892 = vset.pattern.permute.xlu0 1
      %893 = vperm.xlu0 %892, %v696
      %v894 = vpop.permute.xlu0 %893
      %895 = vset.pattern.permute.xlu0 1
      %896 = vperm.xlu0 %895, %v697
      %v897 = vpop.permute.xlu0 %896
      %898 = vset.pattern.permute.xlu0 1
      %899 = vperm.xlu0 %898, %v698
      %v900 = vpop.permute.xlu0 %899
      %901 = vset.pattern.permute.xlu0 1
      %902 = vperm.xlu0 %901, %v699
      %v903 = vpop.permute.xlu0 %902
      %904 = vset.pattern.permute.xlu0 1
      %905 = vperm.xlu0 %904, %v700
      %v906 = vpop.permute.xlu0 %905
      %907 = vset.pattern.permute.xlu0 1
      %908 = vperm.xlu0 %907, %v701
      %v909 = vpop.permute.xlu0 %908
      %910 = vset.pattern.permute.xlu0 1
      %911 = vperm.xlu0 %910, %v702
      %v912 = vpop.permute.xlu0 %911
      %913 = vset.pattern.permute.xlu0 1
      %914 = vperm.xlu0 %913, %v703
      %v915 = vpop.permute.xlu0 %914
      %916 = vset.pattern.permute.xlu0 1
      %917 = vperm.xlu0 %916, %v704
      %v918 = vpop.permute.xlu0 %917
      %919 = vset.pattern.permute.xlu0 1
      %920 = vperm.xlu0 %919, %v705
      %v921 = vpop.permute.xlu0 %920
      %922 = vset.pattern.permute.xlu0 1
      %923 = vperm.xlu0 %922, %v706
      %v924 = vpop.permute.xlu0 %923
      %925 = vset.pattern.permute.xlu0 1
      %926 = vperm.xlu0 %925, %v707
      %v927 = vpop.permute.xlu0 %926
      %928 = vset.pattern.permute.xlu0 1
      %929 = vperm.xlu0 %928, %v708
      %v930 = vpop.permute.xlu0 %929
      %931 = vset.pattern.permute.xlu0 1
      %932 = vperm.xlu0 %931, %v709
      %v933 = vpop.permute.xlu0 %932
      %934 = vset.pattern.permute.xlu0 1
      %935 = vperm.xlu0 %934, %v710
      %v936 = vpop.permute.xlu0 %935
      %937 = vset.pattern.permute.xlu0 1
      %938 = vperm.xlu0 %937, %v711
      %v939 = vpop.permute.xlu0 %938
      %940 = vset.pattern.permute.xlu0 1
      %941 = vperm.xlu0 %940, %v712
      %v942 = vpop.permute.xlu0 %941
      %943 = vset.pattern.permute.xlu0 1
      %944 = vperm.xlu0 %943, %v713
      %v945 = vpop.permute.xlu0 %944
      %946 = vset.pattern.permute.xlu0 1
      %947 = vperm.xlu0 %946, %v714
      %v948 = vpop.permute.xlu0 %947
      %949 = vset.pattern.permute.xlu0 1
      %950 = vperm.xlu0 %949, %v715
      %v951 = vpop.permute.xlu0 %950
      %952 = vset.pattern.permute.xlu0 1
      %953 = vperm.xlu0 %952, %v716
      %v954 = vpop.permute.xlu0 %953
      %955 = vset.pattern.permute.xlu0 1
      %956 = vperm.xlu0 %955, %v717
      %v957 = vpop.permute.xlu0 %956
      %958 = vset.pattern.permute.xlu0 1
      %959 = vperm.xlu0 %958, %v718
      %v960 = vpop.permute.xlu0 %959
      %961 = vset.pattern.permute.xlu0 1
      %962 = vperm.xlu0 %961, %v719
      %v963 = vpop.permute.xlu0 %962
      %964 = vset.pattern.permute.xlu0 1
      %965 = vperm.xlu0 %964, %v720
      %v966 = vpop.permute.xlu0 %965
      %967 = vset.pattern.permute.xlu0 1
      %968 = vperm.xlu0 %967, %v721
      %v969 = vpop.permute.xlu0 %968
      %970 = vset.pattern.permute.xlu0 1
      %971 = vperm.xlu0 %970, %v722
      %v972 = vpop.permute.xlu0 %971
      %973 = vset.pattern.permute.xlu0 1
      %974 = vperm.xlu0 %973, %v723
      %v975 = vpop.permute.xlu0 %974
      %976 = vset.pattern.permute.xlu0 1
      %977 = vperm.xlu0 %976, %v724
      %v978 = vpop.permute.xlu0 %977
      %979 = vset.pattern.permute.xlu0 1
      %980 = vperm.xlu0 %979, %v725
      %v981 = vpop.permute.xlu0 %980
      %vm982 = vcmp.eq.s32.totalorder %v888, 1
      %vm983 = vcmp.eq.s32.totalorder %v891, 1
      %vm984 = vcmp.eq.s32.totalorder %v894, 1
      %vm985 = vcmp.eq.s32.totalorder %v897, 1
      %vm986 = vcmp.eq.s32.totalorder %v900, 1
      %vm987 = vcmp.eq.s32.totalorder %v903, 1
      %vm988 = vcmp.eq.s32.totalorder %v906, 1
      %vm989 = vcmp.eq.s32.totalorder %v909, 1
      %vm990 = vcmp.eq.s32.totalorder %v912, 1
      %vm991 = vcmp.eq.s32.totalorder %v915, 1
      %vm992 = vcmp.eq.s32.totalorder %v918, 1
      %vm993 = vcmp.eq.s32.totalorder %v921, 1
      %vm994 = vcmp.eq.s32.totalorder %v924, 1
      %vm995 = vcmp.eq.s32.totalorder %v927, 1
      %vm996 = vcmp.eq.s32.totalorder %v930, 1
      %vm997 = vcmp.eq.s32.totalorder %v933, 1
      %vm998 = vcmp.eq.s32.totalorder %v936, 1
      %vm999 = vcmp.eq.s32.totalorder %v939, 1
      %vm1000 = vcmp.eq.s32.totalorder %v942, 1
      %vm1001 = vcmp.eq.s32.totalorder %v945, 1
      %vm1002 = vcmp.eq.s32.totalorder %v948, 1
      %vm1003 = vcmp.eq.s32.totalorder %v951, 1
      %vm1004 = vcmp.eq.s32.totalorder %v954, 1
      %vm1005 = vcmp.eq.s32.totalorder %v957, 1
      %vm1006 = vcmp.eq.s32.totalorder %v960, 1
      %vm1007 = vcmp.eq.s32.totalorder %v963, 1
      %vm1008 = vcmp.eq.s32.totalorder %v966, 1
      %vm1009 = vcmp.eq.s32.totalorder %v969, 1
      %vm1010 = vcmp.eq.s32.totalorder %v972, 1
      %vm1011 = vcmp.eq.s32.totalorder %v975, 1
      %vm1012 = vcmp.eq.s32.totalorder %v978, 1
      %vm1013 = vcmp.eq.s32.totalorder %v981, 1
      %v1014 = vsel %vm982, %v561, 0.0
      %v1015 = vsel %vm983, %v562, 0.0
      %v1016 = vsel %vm984, %v531, 0.0
      %v1017 = vsel %vm985, %v532, 0.0
      %v1018 = vsel %vm986, %v533, 0.0
      %v1019 = vsel %vm987, %v534, 0.0
      %v1020 = vsel %vm988, %v535, 0.0
      %v1021 = vsel %vm989, %v536, 0.0
      %v1022 = vsel %vm990, %v537, 0.0
      %v1023 = vsel %vm991, %v538, 0.0
      %v1024 = vsel %vm992, %v539, 0.0
      %v1025 = vsel %vm993, %v540, 0.0
      %v1026 = vsel %vm994, %v541, 0.0
      %v1027 = vsel %vm995, %v542, 0.0
      %v1028 = vsel %vm996, %v543, 0.0
      %v1029 = vsel %vm997, %v544, 0.0
      %v1030 = vsel %vm998, %v545, 0.0
      %v1031 = vsel %vm999, %v546, 0.0
      %v1032 = vsel %vm1000, %v547, 0.0
      %v1033 = vsel %vm1001, %v548, 0.0
      %v1034 = vsel %vm1002, %v549, 0.0
      %v1035 = vsel %vm1003, %v550, 0.0
      %v1036 = vsel %vm1004, %v551, 0.0
      %v1037 = vsel %vm1005, %v552, 0.0
      %v1038 = vsel %vm1006, %v553, 0.0
      %v1039 = vsel %vm1007, %v554, 0.0
      %v1040 = vsel %vm1008, %v555, 0.0
      %v1041 = vsel %vm1009, %v556, 0.0
      %v1042 = vsel %vm1010, %v557, 0.0
      %v1043 = vsel %vm1011, %v558, 0.0
      %v1044 = vsel %vm1012, %v559, 0.0
      %v1045 = vsel %vm1013, %v560, 0.0
      %v1046 = vrot.slane %v531, 1
      %v1047 = vrot.slane %v532, 1
      %v1048 = vrot.slane %v533, 1
      %v1049 = vrot.slane %v534, 1
      %v1050 = vrot.slane %v535, 1
      %v1051 = vrot.slane %v536, 1
      %v1052 = vrot.slane %v537, 1
      %v1053 = vrot.slane %v538, 1
      %v1054 = vrot.slane %v539, 1
      %v1055 = vrot.slane %v540, 1
      %v1056 = vrot.slane %v541, 1
      %v1057 = vrot.slane %v542, 1
      %v1058 = vrot.slane %v543, 1
      %v1059 = vrot.slane %v544, 1
      %v1060 = vrot.slane %v545, 1
      %v1061 = vrot.slane %v546, 1
      %v1062 = vrot.slane %v547, 1
      %v1063 = vrot.slane %v548, 1
      %v1064 = vrot.slane %v549, 1
      %v1065 = vrot.slane %v550, 1
      %v1066 = vrot.slane %v551, 1
      %v1067 = vrot.slane %v552, 1
      %v1068 = vrot.slane %v553, 1
      %v1069 = vrot.slane %v554, 1
      %v1070 = vrot.slane %v555, 1
      %v1071 = vrot.slane %v556, 1
      %v1072 = vrot.slane %v557, 1
      %v1073 = vrot.slane %v558, 1
      %v1074 = vrot.slane %v559, 1
      %v1075 = vrot.slane %v560, 1
      %v1076 = vrot.slane %v561, 1
      %v1077 = vrot.slane %v562, 1
      %vm1078 = vcmp.lt.s32.totalorder %v596, 7
      %v1079 = vsel %vm1078, %v1076, %v1077
      %v1080 = vsel %vm1078, %v1075, %v1076
      %v1081 = vsel %vm1078, %v1074, %v1075
      %v1082 = vsel %vm1078, %v1073, %v1074
      %v1083 = vsel %vm1078, %v1072, %v1073
      %v1084 = vsel %vm1078, %v1071, %v1072
      %v1085 = vsel %vm1078, %v1070, %v1071
      %v1086 = vsel %vm1078, %v1069, %v1070
      %v1087 = vsel %vm1078, %v1068, %v1069
      %v1088 = vsel %vm1078, %v1067, %v1068
      %v1089 = vsel %vm1078, %v1066, %v1067
      %v1090 = vsel %vm1078, %v1065, %v1066
      %v1091 = vsel %vm1078, %v1064, %v1065
      %v1092 = vsel %vm1078, %v1063, %v1064
      %v1093 = vsel %vm1078, %v1062, %v1063
      %v1094 = vsel %vm1078, %v1061, %v1062
      %v1095 = vsel %vm1078, %v1060, %v1061
      %v1096 = vsel %vm1078, %v1059, %v1060
      %v1097 = vsel %vm1078, %v1058, %v1059
      %v1098 = vsel %vm1078, %v1057, %v1058
      %v1099 = vsel %vm1078, %v1056, %v1057
      %v1100 = vsel %vm1078, %v1055, %v1056
      %v1101 = vsel %vm1078, %v1054, %v1055
      %v1102 = vsel %vm1078, %v1053, %v1054
      %v1103 = vsel %vm1078, %v1052, %v1053
      %v1104 = vsel %vm1078, %v1051, %v1052
      %v1105 = vsel %vm1078, %v1050, %v1051
      %v1106 = vsel %vm1078, %v1049, %v1050
      %v1107 = vsel %vm1078, %v1048, %v1049
      %v1108 = vsel %vm1078, %v1047, %v1048
      %v1109 = vsel %vm1078, %v1046, %v1047
      %v1110 = vsel %vm1078, %v1077, %v1046
      %1111 = vset.pattern.permute.xlu0 2
      %1112 = vperm.xlu0 %1111, %v694
      %v1113 = vpop.permute.xlu0 %1112
      %1114 = vset.pattern.permute.xlu0 2
      %1115 = vperm.xlu0 %1114, %v695
      %v1116 = vpop.permute.xlu0 %1115
      %1117 = vset.pattern.permute.xlu0 2
      %1118 = vperm.xlu0 %1117, %v696
      %v1119 = vpop.permute.xlu0 %1118
      %1120 = vset.pattern.permute.xlu0 2
      %1121 = vperm.xlu0 %1120, %v697
      %v1122 = vpop.permute.xlu0 %1121
      %1123 = vset.pattern.permute.xlu0 2
      %1124 = vperm.xlu0 %1123, %v698
      %v1125 = vpop.permute.xlu0 %1124
      %1126 = vset.pattern.permute.xlu0 2
      %1127 = vperm.xlu0 %1126, %v699
      %v1128 = vpop.permute.xlu0 %1127
      %1129 = vset.pattern.permute.xlu0 2
      %1130 = vperm.xlu0 %1129, %v700
      %v1131 = vpop.permute.xlu0 %1130
      %1132 = vset.pattern.permute.xlu0 2
      %1133 = vperm.xlu0 %1132, %v701
      %v1134 = vpop.permute.xlu0 %1133
      %1135 = vset.pattern.permute.xlu0 2
      %1136 = vperm.xlu0 %1135, %v702
      %v1137 = vpop.permute.xlu0 %1136
      %1138 = vset.pattern.permute.xlu0 2
      %1139 = vperm.xlu0 %1138, %v703
      %v1140 = vpop.permute.xlu0 %1139
      %1141 = vset.pattern.permute.xlu0 2
      %1142 = vperm.xlu0 %1141, %v704
      %v1143 = vpop.permute.xlu0 %1142
      %1144 = vset.pattern.permute.xlu0 2
      %1145 = vperm.xlu0 %1144, %v705
      %v1146 = vpop.permute.xlu0 %1145
      %1147 = vset.pattern.permute.xlu0 2
      %1148 = vperm.xlu0 %1147, %v706
      %v1149 = vpop.permute.xlu0 %1148
      %1150 = vset.pattern.permute.xlu0 2
      %1151 = vperm.xlu0 %1150, %v707
      %v1152 = vpop.permute.xlu0 %1151
      %1153 = vset.pattern.permute.xlu0 2
      %1154 = vperm.xlu0 %1153, %v708
      %v1155 = vpop.permute.xlu0 %1154
      %1156 = vset.pattern.permute.xlu0 2
      %1157 = vperm.xlu0 %1156, %v709
      %v1158 = vpop.permute.xlu0 %1157
      %1159 = vset.pattern.permute.xlu0 2
      %1160 = vperm.xlu0 %1159, %v710
      %v1161 = vpop.permute.xlu0 %1160
      %1162 = vset.pattern.permute.xlu0 2
      %1163 = vperm.xlu0 %1162, %v711
      %v1164 = vpop.permute.xlu0 %1163
      %1165 = vset.pattern.permute.xlu0 2
      %1166 = vperm.xlu0 %1165, %v712
      %v1167 = vpop.permute.xlu0 %1166
      %1168 = vset.pattern.permute.xlu0 2
      %1169 = vperm.xlu0 %1168, %v713
      %v1170 = vpop.permute.xlu0 %1169
      %1171 = vset.pattern.permute.xlu0 2
      %1172 = vperm.xlu0 %1171, %v714
      %v1173 = vpop.permute.xlu0 %1172
      %1174 = vset.pattern.permute.xlu0 2
      %1175 = vperm.xlu0 %1174, %v715
      %v1176 = vpop.permute.xlu0 %1175
      %1177 = vset.pattern.permute.xlu0 2
      %1178 = vperm.xlu0 %1177, %v716
      %v1179 = vpop.permute.xlu0 %1178
      %1180 = vset.pattern.permute.xlu0 2
      %1181 = vperm.xlu0 %1180, %v717
      %v1182 = vpop.permute.xlu0 %1181
      %1183 = vset.pattern.permute.xlu0 2
      %1184 = vperm.xlu0 %1183, %v718
      %v1185 = vpop.permute.xlu0 %1184
      %1186 = vset.pattern.permute.xlu0 2
      %1187 = vperm.xlu0 %1186, %v719
      %v1188 = vpop.permute.xlu0 %1187
      %1189 = vset.pattern.permute.xlu0 2
      %1190 = vperm.xlu0 %1189, %v720
      %v1191 = vpop.permute.xlu0 %1190
      %1192 = vset.pattern.permute.xlu0 2
      %1193 = vperm.xlu0 %1192, %v721
      %v1194 = vpop.permute.xlu0 %1193
      %1195 = vset.pattern.permute.xlu0 2
      %1196 = vperm.xlu0 %1195, %v722
      %v1197 = vpop.permute.xlu0 %1196
      %1198 = vset.pattern.permute.xlu0 2
      %1199 = vperm.xlu0 %1198, %v723
      %v1200 = vpop.permute.xlu0 %1199
      %1201 = vset.pattern.permute.xlu0 2
      %1202 = vperm.xlu0 %1201, %v724
      %v1203 = vpop.permute.xlu0 %1202
      %1204 = vset.pattern.permute.xlu0 2
      %1205 = vperm.xlu0 %1204, %v725
      %v1206 = vpop.permute.xlu0 %1205
      %vm1207 = vcmp.eq.s32.totalorder %v1113, 1
      %vm1208 = vcmp.eq.s32.totalorder %v1116, 1
      %vm1209 = vcmp.eq.s32.totalorder %v1119, 1
      %vm1210 = vcmp.eq.s32.totalorder %v1122, 1
      %vm1211 = vcmp.eq.s32.totalorder %v1125, 1
      %vm1212 = vcmp.eq.s32.totalorder %v1128, 1
      %vm1213 = vcmp.eq.s32.totalorder %v1131, 1
      %vm1214 = vcmp.eq.s32.totalorder %v1134, 1
      %vm1215 = vcmp.eq.s32.totalorder %v1137, 1
      %vm1216 = vcmp.eq.s32.totalorder %v1140, 1
      %vm1217 = vcmp.eq.s32.totalorder %v1143, 1
      %vm1218 = vcmp.eq.s32.totalorder %v1146, 1
      %vm1219 = vcmp.eq.s32.totalorder %v1149, 1
      %vm1220 = vcmp.eq.s32.totalorder %v1152, 1
      %vm1221 = vcmp.eq.s32.totalorder %v1155, 1
      %vm1222 = vcmp.eq.s32.totalorder %v1158, 1
      %vm1223 = vcmp.eq.s32.totalorder %v1161, 1
      %vm1224 = vcmp.eq.s32.totalorder %v1164, 1
      %vm1225 = vcmp.eq.s32.totalorder %v1167, 1
      %vm1226 = vcmp.eq.s32.totalorder %v1170, 1
      %vm1227 = vcmp.eq.s32.totalorder %v1173, 1
      %vm1228 = vcmp.eq.s32.totalorder %v1176, 1
      %vm1229 = vcmp.eq.s32.totalorder %v1179, 1
      %vm1230 = vcmp.eq.s32.totalorder %v1182, 1
      %vm1231 = vcmp.eq.s32.totalorder %v1185, 1
      %vm1232 = vcmp.eq.s32.totalorder %v1188, 1
      %vm1233 = vcmp.eq.s32.totalorder %v1191, 1
      %vm1234 = vcmp.eq.s32.totalorder %v1194, 1
      %vm1235 = vcmp.eq.s32.totalorder %v1197, 1
      %vm1236 = vcmp.eq.s32.totalorder %v1200, 1
      %vm1237 = vcmp.eq.s32.totalorder %v1203, 1
      %vm1238 = vcmp.eq.s32.totalorder %v1206, 1
      %v1239 = vsel %vm1207, %v1079, 0.0
      %v1240 = vsel %vm1208, %v1110, 0.0
      %v1241 = vsel %vm1209, %v1109, 0.0
      %v1242 = vsel %vm1210, %v1108, 0.0
      %v1243 = vsel %vm1211, %v1107, 0.0
      %v1244 = vsel %vm1212, %v1106, 0.0
      %v1245 = vsel %vm1213, %v1105, 0.0
      %v1246 = vsel %vm1214, %v1104, 0.0
      %v1247 = vsel %vm1215, %v1103, 0.0
      %v1248 = vsel %vm1216, %v1102, 0.0
      %v1249 = vsel %vm1217, %v1101, 0.0
      %v1250 = vsel %vm1218, %v1100, 0.0
      %v1251 = vsel %vm1219, %v1099, 0.0
      %v1252 = vsel %vm1220, %v1098, 0.0
      %v1253 = vsel %vm1221, %v1097, 0.0
      %v1254 = vsel %vm1222, %v1096, 0.0
      %v1255 = vsel %vm1223, %v1095, 0.0
      %v1256 = vsel %vm1224, %v1094, 0.0
      %v1257 = vsel %vm1225, %v1093, 0.0
      %v1258 = vsel %vm1226, %v1092, 0.0
      %v1259 = vsel %vm1227, %v1091, 0.0
      %v1260 = vsel %vm1228, %v1090, 0.0
      %v1261 = vsel %vm1229, %v1089, 0.0
      %v1262 = vsel %vm1230, %v1088, 0.0
      %v1263 = vsel %vm1231, %v1087, 0.0
      %v1264 = vsel %vm1232, %v1086, 0.0
      %v1265 = vsel %vm1233, %v1085, 0.0
      %v1266 = vsel %vm1234, %v1084, 0.0
      %v1267 = vsel %vm1235, %v1083, 0.0
      %v1268 = vsel %vm1236, %v1082, 0.0
      %v1269 = vsel %vm1237, %v1081, 0.0
      %v1270 = vsel %vm1238, %v1080, 0.0
      %1271 = vset.pattern.permute.xlu0 3
      %1272 = vperm.xlu0 %1271, %v694
      %v1273 = vpop.permute.xlu0 %1272
      %1274 = vset.pattern.permute.xlu0 3
      %1275 = vperm.xlu0 %1274, %v695
      %v1276 = vpop.permute.xlu0 %1275
      %1277 = vset.pattern.permute.xlu0 3
      %1278 = vperm.xlu0 %1277, %v696
      %v1279 = vpop.permute.xlu0 %1278
      %1280 = vset.pattern.permute.xlu0 3
      %1281 = vperm.xlu0 %1280, %v697
      %v1282 = vpop.permute.xlu0 %1281
      %1283 = vset.pattern.permute.xlu0 3
      %1284 = vperm.xlu0 %1283, %v698
      %v1285 = vpop.permute.xlu0 %1284
      %1286 = vset.pattern.permute.xlu0 3
      %1287 = vperm.xlu0 %1286, %v699
      %v1288 = vpop.permute.xlu0 %1287
      %1289 = vset.pattern.permute.xlu0 3
      %1290 = vperm.xlu0 %1289, %v700
      %v1291 = vpop.permute.xlu0 %1290
      %1292 = vset.pattern.permute.xlu0 3
      %1293 = vperm.xlu0 %1292, %v701
      %v1294 = vpop.permute.xlu0 %1293
      %1295 = vset.pattern.permute.xlu0 3
      %1296 = vperm.xlu0 %1295, %v702
      %v1297 = vpop.permute.xlu0 %1296
      %1298 = vset.pattern.permute.xlu0 3
      %1299 = vperm.xlu0 %1298, %v703
      %v1300 = vpop.permute.xlu0 %1299
      %1301 = vset.pattern.permute.xlu0 3
      %1302 = vperm.xlu0 %1301, %v704
      %v1303 = vpop.permute.xlu0 %1302
      %1304 = vset.pattern.permute.xlu0 3
      %1305 = vperm.xlu0 %1304, %v705
      %v1306 = vpop.permute.xlu0 %1305
      %1307 = vset.pattern.permute.xlu0 3
      %1308 = vperm.xlu0 %1307, %v706
      %v1309 = vpop.permute.xlu0 %1308
      %1310 = vset.pattern.permute.xlu0 3
      %1311 = vperm.xlu0 %1310, %v707
      %v1312 = vpop.permute.xlu0 %1311
      %1313 = vset.pattern.permute.xlu0 3
      %1314 = vperm.xlu0 %1313, %v708
      %v1315 = vpop.permute.xlu0 %1314
      %1316 = vset.pattern.permute.xlu0 3
      %1317 = vperm.xlu0 %1316, %v709
      %v1318 = vpop.permute.xlu0 %1317
      %1319 = vset.pattern.permute.xlu0 3
      %1320 = vperm.xlu0 %1319, %v710
      %v1321 = vpop.permute.xlu0 %1320
      %1322 = vset.pattern.permute.xlu0 3
      %1323 = vperm.xlu0 %1322, %v711
      %v1324 = vpop.permute.xlu0 %1323
      %1325 = vset.pattern.permute.xlu0 3
      %1326 = vperm.xlu0 %1325, %v712
      %v1327 = vpop.permute.xlu0 %1326
      %1328 = vset.pattern.permute.xlu0 3
      %1329 = vperm.xlu0 %1328, %v713
      %v1330 = vpop.permute.xlu0 %1329
      %1331 = vset.pattern.permute.xlu0 3
      %1332 = vperm.xlu0 %1331, %v714
      %v1333 = vpop.permute.xlu0 %1332
      %1334 = vset.pattern.permute.xlu0 3
      %1335 = vperm.xlu0 %1334, %v715
      %v1336 = vpop.permute.xlu0 %1335
      %1337 = vset.pattern.permute.xlu0 3
      %1338 = vperm.xlu0 %1337, %v716
      %v1339 = vpop.permute.xlu0 %1338
      %1340 = vset.pattern.permute.xlu0 3
      %1341 = vperm.xlu0 %1340, %v717
      %v1342 = vpop.permute.xlu0 %1341
      %1343 = vset.pattern.permute.xlu0 3
      %1344 = vperm.xlu0 %1343, %v718
      %v1345 = vpop.permute.xlu0 %1344
      %1346 = vset.pattern.permute.xlu0 3
      %1347 = vperm.xlu0 %1346, %v719
      %v1348 = vpop.permute.xlu0 %1347
      %1349 = vset.pattern.permute.xlu0 3
      %1350 = vperm.xlu0 %1349, %v720
      %v1351 = vpop.permute.xlu0 %1350
      %1352 = vset.pattern.permute.xlu0 3
      %1353 = vperm.xlu0 %1352, %v721
      %v1354 = vpop.permute.xlu0 %1353
      %1355 = vset.pattern.permute.xlu0 3
      %1356 = vperm.xlu0 %1355, %v722
      %v1357 = vpop.permute.xlu0 %1356
      %1358 = vset.pattern.permute.xlu0 3
      %1359 = vperm.xlu0 %1358, %v723
      %v1360 = vpop.permute.xlu0 %1359
      %1361 = vset.pattern.permute.xlu0 3
      %1362 = vperm.xlu0 %1361, %v724
      %v1363 = vpop.permute.xlu0 %1362
      %1364 = vset.pattern.permute.xlu0 3
      %1365 = vperm.xlu0 %1364, %v725
      %v1366 = vpop.permute.xlu0 %1365
      %vm1367 = vcmp.eq.s32.totalorder %v1273, 1
      %vm1368 = vcmp.eq.s32.totalorder %v1276, 1
      %vm1369 = vcmp.eq.s32.totalorder %v1279, 1
      %vm1370 = vcmp.eq.s32.totalorder %v1282, 1
      %vm1371 = vcmp.eq.s32.totalorder %v1285, 1
      %vm1372 = vcmp.eq.s32.totalorder %v1288, 1
      %vm1373 = vcmp.eq.s32.totalorder %v1291, 1
      %vm1374 = vcmp.eq.s32.totalorder %v1294, 1
      %vm1375 = vcmp.eq.s32.totalorder %v1297, 1
      %vm1376 = vcmp.eq.s32.totalorder %v1300, 1
      %vm1377 = vcmp.eq.s32.totalorder %v1303, 1
      %vm1378 = vcmp.eq.s32.totalorder %v1306, 1
      %vm1379 = vcmp.eq.s32.totalorder %v1309, 1
      %vm1380 = vcmp.eq.s32.totalorder %v1312, 1
      %vm1381 = vcmp.eq.s32.totalorder %v1315, 1
      %vm1382 = vcmp.eq.s32.totalorder %v1318, 1
      %vm1383 = vcmp.eq.s32.totalorder %v1321, 1
      %vm1384 = vcmp.eq.s32.totalorder %v1324, 1
      %vm1385 = vcmp.eq.s32.totalorder %v1327, 1
      %vm1386 = vcmp.eq.s32.totalorder %v1330, 1
      %vm1387 = vcmp.eq.s32.totalorder %v1333, 1
      %vm1388 = vcmp.eq.s32.totalorder %v1336, 1
      %vm1389 = vcmp.eq.s32.totalorder %v1339, 1
      %vm1390 = vcmp.eq.s32.totalorder %v1342, 1
      %vm1391 = vcmp.eq.s32.totalorder %v1345, 1
      %vm1392 = vcmp.eq.s32.totalorder %v1348, 1
      %vm1393 = vcmp.eq.s32.totalorder %v1351, 1
      %vm1394 = vcmp.eq.s32.totalorder %v1354, 1
      %vm1395 = vcmp.eq.s32.totalorder %v1357, 1
      %vm1396 = vcmp.eq.s32.totalorder %v1360, 1
      %vm1397 = vcmp.eq.s32.totalorder %v1363, 1
      %vm1398 = vcmp.eq.s32.totalorder %v1366, 1
      %v1399 = vsel %vm1367, %v629, 0.0
      %v1400 = vsel %vm1368, %v628, 0.0
      %v1401 = vsel %vm1369, %v627, 0.0
      %v1402 = vsel %vm1370, %v626, 0.0
      %v1403 = vsel %vm1371, %v625, 0.0
      %v1404 = vsel %vm1372, %v624, 0.0
      %v1405 = vsel %vm1373, %v623, 0.0
      %v1406 = vsel %vm1374, %v622, 0.0
      %v1407 = vsel %vm1375, %v621, 0.0
      %v1408 = vsel %vm1376, %v620, 0.0
      %v1409 = vsel %vm1377, %v619, 0.0
      %v1410 = vsel %vm1378, %v618, 0.0
      %v1411 = vsel %vm1379, %v617, 0.0
      %v1412 = vsel %vm1380, %v616, 0.0
      %v1413 = vsel %vm1381, %v615, 0.0
      %v1414 = vsel %vm1382, %v614, 0.0
      %v1415 = vsel %vm1383, %v613, 0.0
      %v1416 = vsel %vm1384, %v612, 0.0
      %v1417 = vsel %vm1385, %v611, 0.0
      %v1418 = vsel %vm1386, %v610, 0.0
      %v1419 = vsel %vm1387, %v609, 0.0
      %v1420 = vsel %vm1388, %v608, 0.0
      %v1421 = vsel %vm1389, %v607, 0.0
      %v1422 = vsel %vm1390, %v606, 0.0
      %v1423 = vsel %vm1391, %v605, 0.0
      %v1424 = vsel %vm1392, %v604, 0.0
      %v1425 = vsel %vm1393, %v603, 0.0
      %v1426 = vsel %vm1394, %v602, 0.0
      %v1427 = vsel %vm1395, %v601, 0.0
      %v1428 = vsel %vm1396, %v600, 0.0
      %v1429 = vsel %vm1397, %v599, 0.0
      %v1430 = vsel %vm1398, %v598, 0.0
      %1431 = vset.pattern.permute.xlu0 5
      %1432 = vperm.xlu0 %1431, %v694
      %v1433 = vpop.permute.xlu0 %1432
      %1434 = vset.pattern.permute.xlu0 5
      %1435 = vperm.xlu0 %1434, %v695
      %v1436 = vpop.permute.xlu0 %1435
      %1437 = vset.pattern.permute.xlu0 5
      %1438 = vperm.xlu0 %1437, %v696
      %v1439 = vpop.permute.xlu0 %1438
      %1440 = vset.pattern.permute.xlu0 5
      %1441 = vperm.xlu0 %1440, %v697
      %v1442 = vpop.permute.xlu0 %1441
      %1443 = vset.pattern.permute.xlu0 5
      %1444 = vperm.xlu0 %1443, %v698
      %v1445 = vpop.permute.xlu0 %1444
      %1446 = vset.pattern.permute.xlu0 5
      %1447 = vperm.xlu0 %1446, %v699
      %v1448 = vpop.permute.xlu0 %1447
      %1449 = vset.pattern.permute.xlu0 5
      %1450 = vperm.xlu0 %1449, %v700
      %v1451 = vpop.permute.xlu0 %1450
      %1452 = vset.pattern.permute.xlu0 5
      %1453 = vperm.xlu0 %1452, %v701
      %v1454 = vpop.permute.xlu0 %1453
      %1455 = vset.pattern.permute.xlu0 5
      %1456 = vperm.xlu0 %1455, %v702
      %v1457 = vpop.permute.xlu0 %1456
      %1458 = vset.pattern.permute.xlu0 5
      %1459 = vperm.xlu0 %1458, %v703
      %v1460 = vpop.permute.xlu0 %1459
      %1461 = vset.pattern.permute.xlu0 5
      %1462 = vperm.xlu0 %1461, %v704
      %v1463 = vpop.permute.xlu0 %1462
      %1464 = vset.pattern.permute.xlu0 5
      %1465 = vperm.xlu0 %1464, %v705
      %v1466 = vpop.permute.xlu0 %1465
      %1467 = vset.pattern.permute.xlu0 5
      %1468 = vperm.xlu0 %1467, %v706
      %v1469 = vpop.permute.xlu0 %1468
      %1470 = vset.pattern.permute.xlu0 5
      %1471 = vperm.xlu0 %1470, %v707
      %v1472 = vpop.permute.xlu0 %1471
      %1473 = vset.pattern.permute.xlu0 5
      %1474 = vperm.xlu0 %1473, %v708
      %v1475 = vpop.permute.xlu0 %1474
      %1476 = vset.pattern.permute.xlu0 5
      %1477 = vperm.xlu0 %1476, %v709
      %v1478 = vpop.permute.xlu0 %1477
      %1479 = vset.pattern.permute.xlu0 5
      %1480 = vperm.xlu0 %1479, %v710
      %v1481 = vpop.permute.xlu0 %1480
      %1482 = vset.pattern.permute.xlu0 5
      %1483 = vperm.xlu0 %1482, %v711
      %v1484 = vpop.permute.xlu0 %1483
      %1485 = vset.pattern.permute.xlu0 5
      %1486 = vperm.xlu0 %1485, %v712
      %v1487 = vpop.permute.xlu0 %1486
      %1488 = vset.pattern.permute.xlu0 5
      %1489 = vperm.xlu0 %1488, %v713
      %v1490 = vpop.permute.xlu0 %1489
      %1491 = vset.pattern.permute.xlu0 5
      %1492 = vperm.xlu0 %1491, %v714
      %v1493 = vpop.permute.xlu0 %1492
      %1494 = vset.pattern.permute.xlu0 5
      %1495 = vperm.xlu0 %1494, %v715
      %v1496 = vpop.permute.xlu0 %1495
      %1497 = vset.pattern.permute.xlu0 5
      %1498 = vperm.xlu0 %1497, %v716
      %v1499 = vpop.permute.xlu0 %1498
      %1500 = vset.pattern.permute.xlu0 5
      %1501 = vperm.xlu0 %1500, %v717
      %v1502 = vpop.permute.xlu0 %1501
      %1503 = vset.pattern.permute.xlu0 5
      %1504 = vperm.xlu0 %1503, %v718
      %v1505 = vpop.permute.xlu0 %1504
      %1506 = vset.pattern.permute.xlu0 5
      %1507 = vperm.xlu0 %1506, %v719
      %v1508 = vpop.permute.xlu0 %1507
      %1509 = vset.pattern.permute.xlu0 5
      %1510 = vperm.xlu0 %1509, %v720
      %v1511 = vpop.permute.xlu0 %1510
      %1512 = vset.pattern.permute.xlu0 5
      %1513 = vperm.xlu0 %1512, %v721
      %v1514 = vpop.permute.xlu0 %1513
      %1515 = vset.pattern.permute.xlu0 5
      %1516 = vperm.xlu0 %1515, %v722
      %v1517 = vpop.permute.xlu0 %1516
      %1518 = vset.pattern.permute.xlu0 5
      %1519 = vperm.xlu0 %1518, %v723
      %v1520 = vpop.permute.xlu0 %1519
      %1521 = vset.pattern.permute.xlu0 5
      %1522 = vperm.xlu0 %1521, %v724
      %v1523 = vpop.permute.xlu0 %1522
      %1524 = vset.pattern.permute.xlu0 5
      %1525 = vperm.xlu0 %1524, %v725
      %v1526 = vpop.permute.xlu0 %1525
      %vm1527 = vcmp.eq.s32.totalorder %v1433, 1
      %vm1528 = vcmp.eq.s32.totalorder %v1436, 1
      %vm1529 = vcmp.eq.s32.totalorder %v1439, 1
      %vm1530 = vcmp.eq.s32.totalorder %v1442, 1
      %vm1531 = vcmp.eq.s32.totalorder %v1445, 1
      %vm1532 = vcmp.eq.s32.totalorder %v1448, 1
      %vm1533 = vcmp.eq.s32.totalorder %v1451, 1
      %vm1534 = vcmp.eq.s32.totalorder %v1454, 1
      %vm1535 = vcmp.eq.s32.totalorder %v1457, 1
      %vm1536 = vcmp.eq.s32.totalorder %v1460, 1
      %vm1537 = vcmp.eq.s32.totalorder %v1463, 1
      %vm1538 = vcmp.eq.s32.totalorder %v1466, 1
      %vm1539 = vcmp.eq.s32.totalorder %v1469, 1
      %vm1540 = vcmp.eq.s32.totalorder %v1472, 1
      %vm1541 = vcmp.eq.s32.totalorder %v1475, 1
      %vm1542 = vcmp.eq.s32.totalorder %v1478, 1
      %vm1543 = vcmp.eq.s32.totalorder %v1481, 1
      %vm1544 = vcmp.eq.s32.totalorder %v1484, 1
      %vm1545 = vcmp.eq.s32.totalorder %v1487, 1
      %vm1546 = vcmp.eq.s32.totalorder %v1490, 1
      %vm1547 = vcmp.eq.s32.totalorder %v1493, 1
      %vm1548 = vcmp.eq.s32.totalorder %v1496, 1
      %vm1549 = vcmp.eq.s32.totalorder %v1499, 1
      %vm1550 = vcmp.eq.s32.totalorder %v1502, 1
      %vm1551 = vcmp.eq.s32.totalorder %v1505, 1
      %vm1552 = vcmp.eq.s32.totalorder %v1508, 1
      %vm1553 = vcmp.eq.s32.totalorder %v1511, 1
      %vm1554 = vcmp.eq.s32.totalorder %v1514, 1
      %vm1555 = vcmp.eq.s32.totalorder %v1517, 1
      %vm1556 = vcmp.eq.s32.totalorder %v1520, 1
      %vm1557 = vcmp.eq.s32.totalorder %v1523, 1
      %vm1558 = vcmp.eq.s32.totalorder %v1526, 1
      %v1559 = vsel %vm1527, %v1109, 0.0
      %v1560 = vsel %vm1528, %v1108, 0.0
      %v1561 = vsel %vm1529, %v1107, 0.0
      %v1562 = vsel %vm1530, %v1106, 0.0
      %v1563 = vsel %vm1531, %v1105, 0.0
      %v1564 = vsel %vm1532, %v1104, 0.0
      %v1565 = vsel %vm1533, %v1103, 0.0
      %v1566 = vsel %vm1534, %v1102, 0.0
      %v1567 = vsel %vm1535, %v1101, 0.0
      %v1568 = vsel %vm1536, %v1100, 0.0
      %v1569 = vsel %vm1537, %v1099, 0.0
      %v1570 = vsel %vm1538, %v1098, 0.0
      %v1571 = vsel %vm1539, %v1097, 0.0
      %v1572 = vsel %vm1540, %v1096, 0.0
      %v1573 = vsel %vm1541, %v1095, 0.0
      %v1574 = vsel %vm1542, %v1094, 0.0
      %v1575 = vsel %vm1543, %v1093, 0.0
      %v1576 = vsel %vm1544, %v1092, 0.0
      %v1577 = vsel %vm1545, %v1091, 0.0
      %v1578 = vsel %vm1546, %v1090, 0.0
      %v1579 = vsel %vm1547, %v1089, 0.0
      %v1580 = vsel %vm1548, %v1088, 0.0
      %v1581 = vsel %vm1549, %v1087, 0.0
      %v1582 = vsel %vm1550, %v1086, 0.0
      %v1583 = vsel %vm1551, %v1085, 0.0
      %v1584 = vsel %vm1552, %v1084, 0.0
      %v1585 = vsel %vm1553, %v1083, 0.0
      %v1586 = vsel %vm1554, %v1082, 0.0
      %v1587 = vsel %vm1555, %v1081, 0.0
      %v1588 = vsel %vm1556, %v1080, 0.0
      %v1589 = vsel %vm1557, %v1079, 0.0
      %v1590 = vsel %vm1558, %v1110, 0.0
      %1591 = vset.pattern.permute.xlu0 6
      %1592 = vperm.xlu0 %1591, %v694
      %v1593 = vpop.permute.xlu0 %1592
      %1594 = vset.pattern.permute.xlu0 6
      %1595 = vperm.xlu0 %1594, %v695
      %v1596 = vpop.permute.xlu0 %1595
      %1597 = vset.pattern.permute.xlu0 6
      %1598 = vperm.xlu0 %1597, %v696
      %v1599 = vpop.permute.xlu0 %1598
      %1600 = vset.pattern.permute.xlu0 6
      %1601 = vperm.xlu0 %1600, %v697
      %v1602 = vpop.permute.xlu0 %1601
      %1603 = vset.pattern.permute.xlu0 6
      %1604 = vperm.xlu0 %1603, %v698
      %v1605 = vpop.permute.xlu0 %1604
      %1606 = vset.pattern.permute.xlu0 6
      %1607 = vperm.xlu0 %1606, %v699
      %v1608 = vpop.permute.xlu0 %1607
      %1609 = vset.pattern.permute.xlu0 6
      %1610 = vperm.xlu0 %1609, %v700
      %v1611 = vpop.permute.xlu0 %1610
      %1612 = vset.pattern.permute.xlu0 6
      %1613 = vperm.xlu0 %1612, %v701
      %v1614 = vpop.permute.xlu0 %1613
      %1615 = vset.pattern.permute.xlu0 6
      %1616 = vperm.xlu0 %1615, %v702
      %v1617 = vpop.permute.xlu0 %1616
      %1618 = vset.pattern.permute.xlu0 6
      %1619 = vperm.xlu0 %1618, %v703
      %v1620 = vpop.permute.xlu0 %1619
      %1621 = vset.pattern.permute.xlu0 6
      %1622 = vperm.xlu0 %1621, %v704
      %v1623 = vpop.permute.xlu0 %1622
      %1624 = vset.pattern.permute.xlu0 6
      %1625 = vperm.xlu0 %1624, %v705
      %v1626 = vpop.permute.xlu0 %1625
      %1627 = vset.pattern.permute.xlu0 6
      %1628 = vperm.xlu0 %1627, %v706
      %v1629 = vpop.permute.xlu0 %1628
      %1630 = vset.pattern.permute.xlu0 6
      %1631 = vperm.xlu0 %1630, %v707
      %v1632 = vpop.permute.xlu0 %1631
      %1633 = vset.pattern.permute.xlu0 6
      %1634 = vperm.xlu0 %1633, %v708
      %v1635 = vpop.permute.xlu0 %1634
      %1636 = vset.pattern.permute.xlu0 6
      %1637 = vperm.xlu0 %1636, %v709
      %v1638 = vpop.permute.xlu0 %1637
      %1639 = vset.pattern.permute.xlu0 6
      %1640 = vperm.xlu0 %1639, %v710
      %v1641 = vpop.permute.xlu0 %1640
      %1642 = vset.pattern.permute.xlu0 6
      %1643 = vperm.xlu0 %1642, %v711
      %v1644 = vpop.permute.xlu0 %1643
      %1645 = vset.pattern.permute.xlu0 6
      %1646 = vperm.xlu0 %1645, %v712
      %v1647 = vpop.permute.xlu0 %1646
      %1648 = vset.pattern.permute.xlu0 6
      %1649 = vperm.xlu0 %1648, %v713
      %v1650 = vpop.permute.xlu0 %1649
      %1651 = vset.pattern.permute.xlu0 6
      %1652 = vperm.xlu0 %1651, %v714
      %v1653 = vpop.permute.xlu0 %1652
      %1654 = vset.pattern.permute.xlu0 6
      %1655 = vperm.xlu0 %1654, %v715
      %v1656 = vpop.permute.xlu0 %1655
      %1657 = vset.pattern.permute.xlu0 6
      %1658 = vperm.xlu0 %1657, %v716
      %v1659 = vpop.permute.xlu0 %1658
      %1660 = vset.pattern.permute.xlu0 6
      %1661 = vperm.xlu0 %1660, %v717
      %v1662 = vpop.permute.xlu0 %1661
      %1663 = vset.pattern.permute.xlu0 6
      %1664 = vperm.xlu0 %1663, %v718
      %v1665 = vpop.permute.xlu0 %1664
      %1666 = vset.pattern.permute.xlu0 6
      %1667 = vperm.xlu0 %1666, %v719
      %v1668 = vpop.permute.xlu0 %1667
      %1669 = vset.pattern.permute.xlu0 6
      %1670 = vperm.xlu0 %1669, %v720
      %v1671 = vpop.permute.xlu0 %1670
      %1672 = vset.pattern.permute.xlu0 6
      %1673 = vperm.xlu0 %1672, %v721
      %v1674 = vpop.permute.xlu0 %1673
      %1675 = vset.pattern.permute.xlu0 6
      %1676 = vperm.xlu0 %1675, %v722
      %v1677 = vpop.permute.xlu0 %1676
      %1678 = vset.pattern.permute.xlu0 6
      %1679 = vperm.xlu0 %1678, %v723
      %v1680 = vpop.permute.xlu0 %1679
      %1681 = vset.pattern.permute.xlu0 6
      %1682 = vperm.xlu0 %1681, %v724
      %v1683 = vpop.permute.xlu0 %1682
      %1684 = vset.pattern.permute.xlu0 6
      %1685 = vperm.xlu0 %1684, %v725
      %v1686 = vpop.permute.xlu0 %1685
      %vm1687 = vcmp.eq.s32.totalorder %v1593, 1
      %vm1688 = vcmp.eq.s32.totalorder %v1596, 1
      %vm1689 = vcmp.eq.s32.totalorder %v1599, 1
      %vm1690 = vcmp.eq.s32.totalorder %v1602, 1
      %vm1691 = vcmp.eq.s32.totalorder %v1605, 1
      %vm1692 = vcmp.eq.s32.totalorder %v1608, 1
      %vm1693 = vcmp.eq.s32.totalorder %v1611, 1
      %vm1694 = vcmp.eq.s32.totalorder %v1614, 1
      %vm1695 = vcmp.eq.s32.totalorder %v1617, 1
      %vm1696 = vcmp.eq.s32.totalorder %v1620, 1
      %vm1697 = vcmp.eq.s32.totalorder %v1623, 1
      %vm1698 = vcmp.eq.s32.totalorder %v1626, 1
      %vm1699 = vcmp.eq.s32.totalorder %v1629, 1
      %vm1700 = vcmp.eq.s32.totalorder %v1632, 1
      %vm1701 = vcmp.eq.s32.totalorder %v1635, 1
      %vm1702 = vcmp.eq.s32.totalorder %v1638, 1
      %vm1703 = vcmp.eq.s32.totalorder %v1641, 1
      %vm1704 = vcmp.eq.s32.totalorder %v1644, 1
      %vm1705 = vcmp.eq.s32.totalorder %v1647, 1
      %vm1706 = vcmp.eq.s32.totalorder %v1650, 1
      %vm1707 = vcmp.eq.s32.totalorder %v1653, 1
      %vm1708 = vcmp.eq.s32.totalorder %v1656, 1
      %vm1709 = vcmp.eq.s32.totalorder %v1659, 1
      %vm1710 = vcmp.eq.s32.totalorder %v1662, 1
      %vm1711 = vcmp.eq.s32.totalorder %v1665, 1
      %vm1712 = vcmp.eq.s32.totalorder %v1668, 1
      %vm1713 = vcmp.eq.s32.totalorder %v1671, 1
      %vm1714 = vcmp.eq.s32.totalorder %v1674, 1
      %vm1715 = vcmp.eq.s32.totalorder %v1677, 1
      %vm1716 = vcmp.eq.s32.totalorder %v1680, 1
      %vm1717 = vcmp.eq.s32.totalorder %v1683, 1
      %vm1718 = vcmp.eq.s32.totalorder %v1686, 1
      %v1719 = vsel %vm1687, %v627, 0.0
      %v1720 = vsel %vm1688, %v626, 0.0
      %v1721 = vsel %vm1689, %v625, 0.0
      %v1722 = vsel %vm1690, %v624, 0.0
      %v1723 = vsel %vm1691, %v623, 0.0
      %v1724 = vsel %vm1692, %v622, 0.0
      %v1725 = vsel %vm1693, %v621, 0.0
      %v1726 = vsel %vm1694, %v620, 0.0
      %v1727 = vsel %vm1695, %v619, 0.0
      %v1728 = vsel %vm1696, %v618, 0.0
      %v1729 = vsel %vm1697, %v617, 0.0
      %v1730 = vsel %vm1698, %v616, 0.0
      %v1731 = vsel %vm1699, %v615, 0.0
      %v1732 = vsel %vm1700, %v614, 0.0
      %v1733 = vsel %vm1701, %v613, 0.0
      %v1734 = vsel %vm1702, %v612, 0.0
      %v1735 = vsel %vm1703, %v611, 0.0
      %v1736 = vsel %vm1704, %v610, 0.0
      %v1737 = vsel %vm1705, %v609, 0.0
      %v1738 = vsel %vm1706, %v608, 0.0
      %v1739 = vsel %vm1707, %v607, 0.0
      %v1740 = vsel %vm1708, %v606, 0.0
      %v1741 = vsel %vm1709, %v605, 0.0
      %v1742 = vsel %vm1710, %v604, 0.0
      %v1743 = vsel %vm1711, %v603, 0.0
      %v1744 = vsel %vm1712, %v602, 0.0
      %v1745 = vsel %vm1713, %v601, 0.0
      %v1746 = vsel %vm1714, %v600, 0.0
      %v1747 = vsel %vm1715, %v599, 0.0
      %v1748 = vsel %vm1716, %v598, 0.0
      %v1749 = vsel %vm1717, %v629, 0.0
      %v1750 = vsel %vm1718, %v628, 0.0
      %1751 = vset.pattern.permute.xlu0 7
      %1752 = vperm.xlu0 %1751, %v694
      %v1753 = vpop.permute.xlu0 %1752
      %1754 = vset.pattern.permute.xlu0 7
      %1755 = vperm.xlu0 %1754, %v695
      %v1756 = vpop.permute.xlu0 %1755
      %1757 = vset.pattern.permute.xlu0 7
      %1758 = vperm.xlu0 %1757, %v696
      %v1759 = vpop.permute.xlu0 %1758
      %1760 = vset.pattern.permute.xlu0 7
      %1761 = vperm.xlu0 %1760, %v697
      %v1762 = vpop.permute.xlu0 %1761
      %1763 = vset.pattern.permute.xlu0 7
      %1764 = vperm.xlu0 %1763, %v698
      %v1765 = vpop.permute.xlu0 %1764
      %1766 = vset.pattern.permute.xlu0 7
      %1767 = vperm.xlu0 %1766, %v699
      %v1768 = vpop.permute.xlu0 %1767
      %1769 = vset.pattern.permute.xlu0 7
      %1770 = vperm.xlu0 %1769, %v700
      %v1771 = vpop.permute.xlu0 %1770
      %1772 = vset.pattern.permute.xlu0 7
      %1773 = vperm.xlu0 %1772, %v701
      %v1774 = vpop.permute.xlu0 %1773
      %1775 = vset.pattern.permute.xlu0 7
      %1776 = vperm.xlu0 %1775, %v702
      %v1777 = vpop.permute.xlu0 %1776
      %1778 = vset.pattern.permute.xlu0 7
      %1779 = vperm.xlu0 %1778, %v703
      %v1780 = vpop.permute.xlu0 %1779
      %1781 = vset.pattern.permute.xlu0 7
      %1782 = vperm.xlu0 %1781, %v704
      %v1783 = vpop.permute.xlu0 %1782
      %1784 = vset.pattern.permute.xlu0 7
      %1785 = vperm.xlu0 %1784, %v705
      %v1786 = vpop.permute.xlu0 %1785
      %1787 = vset.pattern.permute.xlu0 7
      %1788 = vperm.xlu0 %1787, %v706
      %v1789 = vpop.permute.xlu0 %1788
      %1790 = vset.pattern.permute.xlu0 7
      %1791 = vperm.xlu0 %1790, %v707
      %v1792 = vpop.permute.xlu0 %1791
      %1793 = vset.pattern.permute.xlu0 7
      %1794 = vperm.xlu0 %1793, %v708
      %v1795 = vpop.permute.xlu0 %1794
      %1796 = vset.pattern.permute.xlu0 7
      %1797 = vperm.xlu0 %1796, %v709
      %v1798 = vpop.permute.xlu0 %1797
      %1799 = vset.pattern.permute.xlu0 7
      %1800 = vperm.xlu0 %1799, %v710
      %v1801 = vpop.permute.xlu0 %1800
      %1802 = vset.pattern.permute.xlu0 7
      %1803 = vperm.xlu0 %1802, %v711
      %v1804 = vpop.permute.xlu0 %1803
      %1805 = vset.pattern.permute.xlu0 7
      %1806 = vperm.xlu0 %1805, %v712
      %v1807 = vpop.permute.xlu0 %1806
      %1808 = vset.pattern.permute.xlu0 7
      %1809 = vperm.xlu0 %1808, %v713
      %v1810 = vpop.permute.xlu0 %1809
      %1811 = vset.pattern.permute.xlu0 7
      %1812 = vperm.xlu0 %1811, %v714
      %v1813 = vpop.permute.xlu0 %1812
      %1814 = vset.pattern.permute.xlu0 7
      %1815 = vperm.xlu0 %1814, %v715
      %v1816 = vpop.permute.xlu0 %1815
      %1817 = vset.pattern.permute.xlu0 7
      %1818 = vperm.xlu0 %1817, %v716
      %v1819 = vpop.permute.xlu0 %1818
      %1820 = vset.pattern.permute.xlu0 7
      %1821 = vperm.xlu0 %1820, %v717
      %v1822 = vpop.permute.xlu0 %1821
      %1823 = vset.pattern.permute.xlu0 7
      %1824 = vperm.xlu0 %1823, %v718
      %v1825 = vpop.permute.xlu0 %1824
      %1826 = vset.pattern.permute.xlu0 7
      %1827 = vperm.xlu0 %1826, %v719
      %v1828 = vpop.permute.xlu0 %1827
      %1829 = vset.pattern.permute.xlu0 7
      %1830 = vperm.xlu0 %1829, %v720
      %v1831 = vpop.permute.xlu0 %1830
      %1832 = vset.pattern.permute.xlu0 7
      %1833 = vperm.xlu0 %1832, %v721
      %v1834 = vpop.permute.xlu0 %1833
      %1835 = vset.pattern.permute.xlu0 7
      %1836 = vperm.xlu0 %1835, %v722
      %v1837 = vpop.permute.xlu0 %1836
      %1838 = vset.pattern.permute.xlu0 7
      %1839 = vperm.xlu0 %1838, %v723
      %v1840 = vpop.permute.xlu0 %1839
      %1841 = vset.pattern.permute.xlu0 7
      %1842 = vperm.xlu0 %1841, %v724
      %v1843 = vpop.permute.xlu0 %1842
      %1844 = vset.pattern.permute.xlu0 7
      %1845 = vperm.xlu0 %1844, %v725
      %v1846 = vpop.permute.xlu0 %1845
      %vm1847 = vcmp.eq.s32.totalorder %v1753, 1
      %vm1848 = vcmp.eq.s32.totalorder %v1756, 1
      %vm1849 = vcmp.eq.s32.totalorder %v1759, 1
      %vm1850 = vcmp.eq.s32.totalorder %v1762, 1
      %vm1851 = vcmp.eq.s32.totalorder %v1765, 1
      %vm1852 = vcmp.eq.s32.totalorder %v1768, 1
      %vm1853 = vcmp.eq.s32.totalorder %v1771, 1
      %vm1854 = vcmp.eq.s32.totalorder %v1774, 1
      %vm1855 = vcmp.eq.s32.totalorder %v1777, 1
      %vm1856 = vcmp.eq.s32.totalorder %v1780, 1
      %vm1857 = vcmp.eq.s32.totalorder %v1783, 1
      %vm1858 = vcmp.eq.s32.totalorder %v1786, 1
      %vm1859 = vcmp.eq.s32.totalorder %v1789, 1
      %vm1860 = vcmp.eq.s32.totalorder %v1792, 1
      %vm1861 = vcmp.eq.s32.totalorder %v1795, 1
      %vm1862 = vcmp.eq.s32.totalorder %v1798, 1
      %vm1863 = vcmp.eq.s32.totalorder %v1801, 1
      %vm1864 = vcmp.eq.s32.totalorder %v1804, 1
      %vm1865 = vcmp.eq.s32.totalorder %v1807, 1
      %vm1866 = vcmp.eq.s32.totalorder %v1810, 1
      %vm1867 = vcmp.eq.s32.totalorder %v1813, 1
      %vm1868 = vcmp.eq.s32.totalorder %v1816, 1
      %vm1869 = vcmp.eq.s32.totalorder %v1819, 1
      %vm1870 = vcmp.eq.s32.totalorder %v1822, 1
      %vm1871 = vcmp.eq.s32.totalorder %v1825, 1
      %vm1872 = vcmp.eq.s32.totalorder %v1828, 1
      %vm1873 = vcmp.eq.s32.totalorder %v1831, 1
      %vm1874 = vcmp.eq.s32.totalorder %v1834, 1
      %vm1875 = vcmp.eq.s32.totalorder %v1837, 1
      %vm1876 = vcmp.eq.s32.totalorder %v1840, 1
      %vm1877 = vcmp.eq.s32.totalorder %v1843, 1
      %vm1878 = vcmp.eq.s32.totalorder %v1846, 1
      %v1879 = vsel %vm1847, %v533, 0.0
      %v1880 = vsel %vm1848, %v534, 0.0
      %v1881 = vsel %vm1849, %v535, 0.0
      %v1882 = vsel %vm1850, %v536, 0.0
      %v1883 = vsel %vm1851, %v537, 0.0
      %v1884 = vsel %vm1852, %v538, 0.0
      %v1885 = vsel %vm1853, %v539, 0.0
      %v1886 = vsel %vm1854, %v540, 0.0
      %v1887 = vsel %vm1855, %v541, 0.0
      %v1888 = vsel %vm1856, %v542, 0.0
      %v1889 = vsel %vm1857, %v543, 0.0
      %v1890 = vsel %vm1858, %v544, 0.0
      %v1891 = vsel %vm1859, %v545, 0.0
      %v1892 = vsel %vm1860, %v546, 0.0
      %v1893 = vsel %vm1861, %v547, 0.0
      %v1894 = vsel %vm1862, %v548, 0.0
      %v1895 = vsel %vm1863, %v549, 0.0
      %v1896 = vsel %vm1864, %v550, 0.0
      %v1897 = vsel %vm1865, %v551, 0.0
      %v1898 = vsel %vm1866, %v552, 0.0
      %v1899 = vsel %vm1867, %v553, 0.0
      %v1900 = vsel %vm1868, %v554, 0.0
      %v1901 = vsel %vm1869, %v555, 0.0
      %v1902 = vsel %vm1870, %v556, 0.0
      %v1903 = vsel %vm1871, %v557, 0.0
      %v1904 = vsel %vm1872, %v558, 0.0
      %v1905 = vsel %vm1873, %v559, 0.0
      %v1906 = vsel %vm1874, %v560, 0.0
      %v1907 = vsel %vm1875, %v561, 0.0
      %v1908 = vsel %vm1876, %v562, 0.0
      %v1909 = vsel %vm1877, %v531, 0.0
      %v1910 = vsel %vm1878, %v532, 0.0
      %1911 = vset.pattern.permute.xlu0 8
      %1912 = vperm.xlu0 %1911, %v694
      %v1913 = vpop.permute.xlu0 %1912
      %1914 = vset.pattern.permute.xlu0 8
      %1915 = vperm.xlu0 %1914, %v695
      %v1916 = vpop.permute.xlu0 %1915
      %1917 = vset.pattern.permute.xlu0 8
      %1918 = vperm.xlu0 %1917, %v696
      %v1919 = vpop.permute.xlu0 %1918
      %1920 = vset.pattern.permute.xlu0 8
      %1921 = vperm.xlu0 %1920, %v697
      %v1922 = vpop.permute.xlu0 %1921
      %1923 = vset.pattern.permute.xlu0 8
      %1924 = vperm.xlu0 %1923, %v698
      %v1925 = vpop.permute.xlu0 %1924
      %1926 = vset.pattern.permute.xlu0 8
      %1927 = vperm.xlu0 %1926, %v699
      %v1928 = vpop.permute.xlu0 %1927
      %1929 = vset.pattern.permute.xlu0 8
      %1930 = vperm.xlu0 %1929, %v700
      %v1931 = vpop.permute.xlu0 %1930
      %1932 = vset.pattern.permute.xlu0 8
      %1933 = vperm.xlu0 %1932, %v701
      %v1934 = vpop.permute.xlu0 %1933
      %1935 = vset.pattern.permute.xlu0 8
      %1936 = vperm.xlu0 %1935, %v702
      %v1937 = vpop.permute.xlu0 %1936
      %1938 = vset.pattern.permute.xlu0 8
      %1939 = vperm.xlu0 %1938, %v703
      %v1940 = vpop.permute.xlu0 %1939
      %1941 = vset.pattern.permute.xlu0 8
      %1942 = vperm.xlu0 %1941, %v704
      %v1943 = vpop.permute.xlu0 %1942
      %1944 = vset.pattern.permute.xlu0 8
      %1945 = vperm.xlu0 %1944, %v705
      %v1946 = vpop.permute.xlu0 %1945
      %1947 = vset.pattern.permute.xlu0 8
      %1948 = vperm.xlu0 %1947, %v706
      %v1949 = vpop.permute.xlu0 %1948
      %1950 = vset.pattern.permute.xlu0 8
      %1951 = vperm.xlu0 %1950, %v707
      %v1952 = vpop.permute.xlu0 %1951
      %1953 = vset.pattern.permute.xlu0 8
      %1954 = vperm.xlu0 %1953, %v708
      %v1955 = vpop.permute.xlu0 %1954
      %1956 = vset.pattern.permute.xlu0 8
      %1957 = vperm.xlu0 %1956, %v709
      %v1958 = vpop.permute.xlu0 %1957
      %1959 = vset.pattern.permute.xlu0 8
      %1960 = vperm.xlu0 %1959, %v710
      %v1961 = vpop.permute.xlu0 %1960
      %1962 = vset.pattern.permute.xlu0 8
      %1963 = vperm.xlu0 %1962, %v711
      %v1964 = vpop.permute.xlu0 %1963
      %1965 = vset.pattern.permute.xlu0 8
      %1966 = vperm.xlu0 %1965, %v712
      %v1967 = vpop.permute.xlu0 %1966
      %1968 = vset.pattern.permute.xlu0 8
      %1969 = vperm.xlu0 %1968, %v713
      %v1970 = vpop.permute.xlu0 %1969
      %1971 = vset.pattern.permute.xlu0 8
      %1972 = vperm.xlu0 %1971, %v714
      %v1973 = vpop.permute.xlu0 %1972
      %1974 = vset.pattern.permute.xlu0 8
      %1975 = vperm.xlu0 %1974, %v715
      %v1976 = vpop.permute.xlu0 %1975
      %1977 = vset.pattern.permute.xlu0 8
      %1978 = vperm.xlu0 %1977, %v716
      %v1979 = vpop.permute.xlu0 %1978
      %1980 = vset.pattern.permute.xlu0 8
      %1981 = vperm.xlu0 %1980, %v717
      %v1982 = vpop.permute.xlu0 %1981
      %1983 = vset.pattern.permute.xlu0 8
      %1984 = vperm.xlu0 %1983, %v718
      %v1985 = vpop.permute.xlu0 %1984
      %1986 = vset.pattern.permute.xlu0 8
      %1987 = vperm.xlu0 %1986, %v719
      %v1988 = vpop.permute.xlu0 %1987
      %1989 = vset.pattern.permute.xlu0 8
      %1990 = vperm.xlu0 %1989, %v720
      %v1991 = vpop.permute.xlu0 %1990
      %1992 = vset.pattern.permute.xlu0 8
      %1993 = vperm.xlu0 %1992, %v721
      %v1994 = vpop.permute.xlu0 %1993
      %1995 = vset.pattern.permute.xlu0 8
      %1996 = vperm.xlu0 %1995, %v722
      %v1997 = vpop.permute.xlu0 %1996
      %1998 = vset.pattern.permute.xlu0 8
      %1999 = vperm.xlu0 %1998, %v723
      %v2000 = vpop.permute.xlu0 %1999
      %2001 = vset.pattern.permute.xlu0 8
      %2002 = vperm.xlu0 %2001, %v724
      %v2003 = vpop.permute.xlu0 %2002
      %2004 = vset.pattern.permute.xlu0 8
      %2005 = vperm.xlu0 %2004, %v725
      %v2006 = vpop.permute.xlu0 %2005
      %vm2007 = vcmp.eq.s32.totalorder %v1913, 1
      %vm2008 = vcmp.eq.s32.totalorder %v1916, 1
      %vm2009 = vcmp.eq.s32.totalorder %v1919, 1
      %vm2010 = vcmp.eq.s32.totalorder %v1922, 1
      %vm2011 = vcmp.eq.s32.totalorder %v1925, 1
      %vm2012 = vcmp.eq.s32.totalorder %v1928, 1
      %vm2013 = vcmp.eq.s32.totalorder %v1931, 1
      %vm2014 = vcmp.eq.s32.totalorder %v1934, 1
      %vm2015 = vcmp.eq.s32.totalorder %v1937, 1
      %vm2016 = vcmp.eq.s32.totalorder %v1940, 1
      %vm2017 = vcmp.eq.s32.totalorder %v1943, 1
      %vm2018 = vcmp.eq.s32.totalorder %v1946, 1
      %vm2019 = vcmp.eq.s32.totalorder %v1949, 1
      %vm2020 = vcmp.eq.s32.totalorder %v1952, 1
      %vm2021 = vcmp.eq.s32.totalorder %v1955, 1
      %vm2022 = vcmp.eq.s32.totalorder %v1958, 1
      %vm2023 = vcmp.eq.s32.totalorder %v1961, 1
      %vm2024 = vcmp.eq.s32.totalorder %v1964, 1
      %vm2025 = vcmp.eq.s32.totalorder %v1967, 1
      %vm2026 = vcmp.eq.s32.totalorder %v1970, 1
      %vm2027 = vcmp.eq.s32.totalorder %v1973, 1
      %vm2028 = vcmp.eq.s32.totalorder %v1976, 1
      %vm2029 = vcmp.eq.s32.totalorder %v1979, 1
      %vm2030 = vcmp.eq.s32.totalorder %v1982, 1
      %vm2031 = vcmp.eq.s32.totalorder %v1985, 1
      %vm2032 = vcmp.eq.s32.totalorder %v1988, 1
      %vm2033 = vcmp.eq.s32.totalorder %v1991, 1
      %vm2034 = vcmp.eq.s32.totalorder %v1994, 1
      %vm2035 = vcmp.eq.s32.totalorder %v1997, 1
      %vm2036 = vcmp.eq.s32.totalorder %v2000, 1
      %vm2037 = vcmp.eq.s32.totalorder %v2003, 1
      %vm2038 = vcmp.eq.s32.totalorder %v2006, 1
      %v2039 = vsel %vm2007, %v1107, 0.0
      %v2040 = vsel %vm2008, %v1106, 0.0
      %v2041 = vsel %vm2009, %v1105, 0.0
      %v2042 = vsel %vm2010, %v1104, 0.0
      %v2043 = vsel %vm2011, %v1103, 0.0
      %v2044 = vsel %vm2012, %v1102, 0.0
      %v2045 = vsel %vm2013, %v1101, 0.0
      %v2046 = vsel %vm2014, %v1100, 0.0
      %v2047 = vsel %vm2015, %v1099, 0.0
      %v2048 = vsel %vm2016, %v1098, 0.0
      %v2049 = vsel %vm2017, %v1097, 0.0
      %v2050 = vsel %vm2018, %v1096, 0.0
      %v2051 = vsel %vm2019, %v1095, 0.0
      %v2052 = vsel %vm2020, %v1094, 0.0
      %v2053 = vsel %vm2021, %v1093, 0.0
      %v2054 = vsel %vm2022, %v1092, 0.0
      %v2055 = vsel %vm2023, %v1091, 0.0
      %v2056 = vsel %vm2024, %v1090, 0.0
      %v2057 = vsel %vm2025, %v1089, 0.0
      %v2058 = vsel %vm2026, %v1088, 0.0
      %v2059 = vsel %vm2027, %v1087, 0.0
      %v2060 = vsel %vm2028, %v1086, 0.0
      %v2061 = vsel %vm2029, %v1085, 0.0
      %v2062 = vsel %vm2030, %v1084, 0.0
      %v2063 = vsel %vm2031, %v1083, 0.0
      %v2064 = vsel %vm2032, %v1082, 0.0
      %v2065 = vsel %vm2033, %v1081, 0.0
      %v2066 = vsel %vm2034, %v1080, 0.0
      %v2067 = vsel %vm2035, %v1079, 0.0
      %v2068 = vsel %vm2036, %v1110, 0.0
      %v2069 = vsel %vm2037, %v1109, 0.0
      %v2070 = vsel %vm2038, %v1108, 0.0
      %2103 = vrot.lane.b32.xlu0 %v1014, 32
      %v2104 = vpop.permute.xlu0 %2103
      %2105 = vrot.lane.b32.xlu0 %v1015, 32
      %v2106 = vpop.permute.xlu0 %2105
      %2107 = vrot.lane.b32.xlu0 %v1016, 32
      %v2108 = vpop.permute.xlu0 %2107
      %2109 = vrot.lane.b32.xlu0 %v1017, 32
      %v2110 = vpop.permute.xlu0 %2109
      %2111 = vrot.lane.b32.xlu0 %v1018, 32
      %v2112 = vpop.permute.xlu0 %2111
      %2113 = vrot.lane.b32.xlu0 %v1019, 32
      %v2114 = vpop.permute.xlu0 %2113
      %2115 = vrot.lane.b32.xlu0 %v1020, 32
      %v2116 = vpop.permute.xlu0 %2115
      %2117 = vrot.lane.b32.xlu0 %v1021, 32
      %v2118 = vpop.permute.xlu0 %2117
      %2119 = vrot.lane.b32.xlu0 %v1022, 32
      %v2120 = vpop.permute.xlu0 %2119
      %2121 = vrot.lane.b32.xlu0 %v1023, 32
      %v2122 = vpop.permute.xlu0 %2121
      %2123 = vrot.lane.b32.xlu0 %v1024, 32
      %v2124 = vpop.permute.xlu0 %2123
      %2125 = vrot.lane.b32.xlu0 %v1025, 32
      %v2126 = vpop.permute.xlu0 %2125
      %2127 = vrot.lane.b32.xlu0 %v1026, 32
      %v2128 = vpop.permute.xlu0 %2127
      %2129 = vrot.lane.b32.xlu0 %v1027, 32
      %v2130 = vpop.permute.xlu0 %2129
      %2131 = vrot.lane.b32.xlu0 %v1028, 32
      %v2132 = vpop.permute.xlu0 %2131
      %2133 = vrot.lane.b32.xlu0 %v1029, 32
      %v2134 = vpop.permute.xlu0 %2133
      %2135 = vrot.lane.b32.xlu0 %v1030, 32
      %v2136 = vpop.permute.xlu0 %2135
      %2137 = vrot.lane.b32.xlu0 %v1031, 32
      %v2138 = vpop.permute.xlu0 %2137
      %2139 = vrot.lane.b32.xlu0 %v1032, 32
      %v2140 = vpop.permute.xlu0 %2139
      %2141 = vrot.lane.b32.xlu0 %v1033, 32
      %v2142 = vpop.permute.xlu0 %2141
      %2143 = vrot.lane.b32.xlu0 %v1034, 32
      %v2144 = vpop.permute.xlu0 %2143
      %2145 = vrot.lane.b32.xlu0 %v1035, 32
      %v2146 = vpop.permute.xlu0 %2145
      %2147 = vrot.lane.b32.xlu0 %v1036, 32
      %v2148 = vpop.permute.xlu0 %2147
      %2149 = vrot.lane.b32.xlu0 %v1037, 32
      %v2150 = vpop.permute.xlu0 %2149
      %2151 = vrot.lane.b32.xlu0 %v1038, 32
      %v2152 = vpop.permute.xlu0 %2151
      %2153 = vrot.lane.b32.xlu0 %v1039, 32
      %v2154 = vpop.permute.xlu0 %2153
      %2155 = vrot.lane.b32.xlu0 %v1040, 32
      %v2156 = vpop.permute.xlu0 %2155
      %2157 = vrot.lane.b32.xlu0 %v1041, 32
      %v2158 = vpop.permute.xlu0 %2157
      %2159 = vrot.lane.b32.xlu0 %v1042, 32
      %v2160 = vpop.permute.xlu0 %2159
      %2161 = vrot.lane.b32.xlu0 %v1043, 32
      %v2162 = vpop.permute.xlu0 %2161
      %2163 = vrot.lane.b32.xlu0 %v1044, 32
      %v2164 = vpop.permute.xlu0 %2163
      %2165 = vrot.lane.b32.xlu0 %v1045, 32
      %v2166 = vpop.permute.xlu0 %2165
      %2231 = vrot.lane.b32.xlu0 %v1239, 64
      %v2232 = vpop.permute.xlu0 %2231
      %2233 = vrot.lane.b32.xlu0 %v1240, 64
      %v2234 = vpop.permute.xlu0 %2233
      %2235 = vrot.lane.b32.xlu0 %v1241, 64
      %v2236 = vpop.permute.xlu0 %2235
      %2237 = vrot.lane.b32.xlu0 %v1242, 64
      %v2238 = vpop.permute.xlu0 %2237
      %2239 = vrot.lane.b32.xlu0 %v1243, 64
      %v2240 = vpop.permute.xlu0 %2239
      %2241 = vrot.lane.b32.xlu0 %v1244, 64
      %v2242 = vpop.permute.xlu0 %2241
      %2243 = vrot.lane.b32.xlu0 %v1245, 64
      %v2244 = vpop.permute.xlu0 %2243
      %2245 = vrot.lane.b32.xlu0 %v1246, 64
      %v2246 = vpop.permute.xlu0 %2245
      %2247 = vrot.lane.b32.xlu0 %v1247, 64
      %v2248 = vpop.permute.xlu0 %2247
      %2249 = vrot.lane.b32.xlu0 %v1248, 64
      %v2250 = vpop.permute.xlu0 %2249
      %2251 = vrot.lane.b32.xlu0 %v1249, 64
      %v2252 = vpop.permute.xlu0 %2251
      %2253 = vrot.lane.b32.xlu0 %v1250, 64
      %v2254 = vpop.permute.xlu0 %2253
      %2255 = vrot.lane.b32.xlu0 %v1251, 64
      %v2256 = vpop.permute.xlu0 %2255
      %2257 = vrot.lane.b32.xlu0 %v1252, 64
      %v2258 = vpop.permute.xlu0 %2257
      %2259 = vrot.lane.b32.xlu0 %v1253, 64
      %v2260 = vpop.permute.xlu0 %2259
      %2261 = vrot.lane.b32.xlu0 %v1254, 64
      %v2262 = vpop.permute.xlu0 %2261
      %2263 = vrot.lane.b32.xlu0 %v1255, 64
      %v2264 = vpop.permute.xlu0 %2263
      %2265 = vrot.lane.b32.xlu0 %v1256, 64
      %v2266 = vpop.permute.xlu0 %2265
      %2267 = vrot.lane.b32.xlu0 %v1257, 64
      %v2268 = vpop.permute.xlu0 %2267
      %2269 = vrot.lane.b32.xlu0 %v1258, 64
      %v2270 = vpop.permute.xlu0 %2269
      %2271 = vrot.lane.b32.xlu0 %v1259, 64
      %v2272 = vpop.permute.xlu0 %2271
      %2273 = vrot.lane.b32.xlu0 %v1260, 64
      %v2274 = vpop.permute.xlu0 %2273
      %2275 = vrot.lane.b32.xlu0 %v1261, 64
      %v2276 = vpop.permute.xlu0 %2275
      %2277 = vrot.lane.b32.xlu0 %v1262, 64
      %v2278 = vpop.permute.xlu0 %2277
      %2279 = vrot.lane.b32.xlu0 %v1263, 64
      %v2280 = vpop.permute.xlu0 %2279
      %2281 = vrot.lane.b32.xlu0 %v1264, 64
      %v2282 = vpop.permute.xlu0 %2281
      %2283 = vrot.lane.b32.xlu0 %v1265, 64
      %v2284 = vpop.permute.xlu0 %2283
      %2285 = vrot.lane.b32.xlu0 %v1266, 64
      %v2286 = vpop.permute.xlu0 %2285
      %2287 = vrot.lane.b32.xlu0 %v1267, 64
      %v2288 = vpop.permute.xlu0 %2287
      %2289 = vrot.lane.b32.xlu0 %v1268, 64
      %v2290 = vpop.permute.xlu0 %2289
      %2291 = vrot.lane.b32.xlu0 %v1269, 64
      %v2292 = vpop.permute.xlu0 %2291
      %2293 = vrot.lane.b32.xlu0 %v1270, 64
      %v2294 = vpop.permute.xlu0 %2293
      %2359 = vrot.lane.b32.xlu0 %v1399, 96
      %v2360 = vpop.permute.xlu0 %2359
      %2361 = vrot.lane.b32.xlu0 %v1400, 96
      %v2362 = vpop.permute.xlu0 %2361
      %2363 = vrot.lane.b32.xlu0 %v1401, 96
      %v2364 = vpop.permute.xlu0 %2363
      %2365 = vrot.lane.b32.xlu0 %v1402, 96
      %v2366 = vpop.permute.xlu0 %2365
      %2367 = vrot.lane.b32.xlu0 %v1403, 96
      %v2368 = vpop.permute.xlu0 %2367
      %2369 = vrot.lane.b32.xlu0 %v1404, 96
      %v2370 = vpop.permute.xlu0 %2369
      %2371 = vrot.lane.b32.xlu0 %v1405, 96
      %v2372 = vpop.permute.xlu0 %2371
      %2373 = vrot.lane.b32.xlu0 %v1406, 96
      %v2374 = vpop.permute.xlu0 %2373
      %2375 = vrot.lane.b32.xlu0 %v1407, 96
      %v2376 = vpop.permute.xlu0 %2375
      %2377 = vrot.lane.b32.xlu0 %v1408, 96
      %v2378 = vpop.permute.xlu0 %2377
      %2379 = vrot.lane.b32.xlu0 %v1409, 96
      %v2380 = vpop.permute.xlu0 %2379
      %2381 = vrot.lane.b32.xlu0 %v1410, 96
      %v2382 = vpop.permute.xlu0 %2381
      %2383 = vrot.lane.b32.xlu0 %v1411, 96
      %v2384 = vpop.permute.xlu0 %2383
      %2385 = vrot.lane.b32.xlu0 %v1412, 96
      %v2386 = vpop.permute.xlu0 %2385
      %2387 = vrot.lane.b32.xlu0 %v1413, 96
      %v2388 = vpop.permute.xlu0 %2387
      %2389 = vrot.lane.b32.xlu0 %v1414, 96
      %v2390 = vpop.permute.xlu0 %2389
      %2391 = vrot.lane.b32.xlu0 %v1415, 96
      %v2392 = vpop.permute.xlu0 %2391
      %2393 = vrot.lane.b32.xlu0 %v1416, 96
      %v2394 = vpop.permute.xlu0 %2393
      %2395 = vrot.lane.b32.xlu0 %v1417, 96
      %v2396 = vpop.permute.xlu0 %2395
      %2397 = vrot.lane.b32.xlu0 %v1418, 96
      %v2398 = vpop.permute.xlu0 %2397
      %2399 = vrot.lane.b32.xlu0 %v1419, 96
      %v2400 = vpop.permute.xlu0 %2399
      %2401 = vrot.lane.b32.xlu0 %v1420, 96
      %v2402 = vpop.permute.xlu0 %2401
      %2403 = vrot.lane.b32.xlu0 %v1421, 96
      %v2404 = vpop.permute.xlu0 %2403
      %2405 = vrot.lane.b32.xlu0 %v1422, 96
      %v2406 = vpop.permute.xlu0 %2405
      %2407 = vrot.lane.b32.xlu0 %v1423, 96
      %v2408 = vpop.permute.xlu0 %2407
      %2409 = vrot.lane.b32.xlu0 %v1424, 96
      %v2410 = vpop.permute.xlu0 %2409
      %2411 = vrot.lane.b32.xlu0 %v1425, 96
      %v2412 = vpop.permute.xlu0 %2411
      %2413 = vrot.lane.b32.xlu0 %v1426, 96
      %v2414 = vpop.permute.xlu0 %2413
      %2415 = vrot.lane.b32.xlu0 %v1427, 96
      %v2416 = vpop.permute.xlu0 %2415
      %2417 = vrot.lane.b32.xlu0 %v1428, 96
      %v2418 = vpop.permute.xlu0 %2417
      %2419 = vrot.lane.b32.xlu0 %v1429, 96
      %v2420 = vpop.permute.xlu0 %2419
      %2421 = vrot.lane.b32.xlu0 %v1430, 96
      %v2422 = vpop.permute.xlu0 %2421
      %2487 = vrot.lane.b32.xlu0 %v1559, 32
      %v2488 = vpop.permute.xlu0 %2487
      %2489 = vrot.lane.b32.xlu0 %v1560, 32
      %v2490 = vpop.permute.xlu0 %2489
      %2491 = vrot.lane.b32.xlu0 %v1561, 32
      %v2492 = vpop.permute.xlu0 %2491
      %2493 = vrot.lane.b32.xlu0 %v1562, 32
      %v2494 = vpop.permute.xlu0 %2493
      %2495 = vrot.lane.b32.xlu0 %v1563, 32
      %v2496 = vpop.permute.xlu0 %2495
      %2497 = vrot.lane.b32.xlu0 %v1564, 32
      %v2498 = vpop.permute.xlu0 %2497
      %2499 = vrot.lane.b32.xlu0 %v1565, 32
      %v2500 = vpop.permute.xlu0 %2499
      %2501 = vrot.lane.b32.xlu0 %v1566, 32
      %v2502 = vpop.permute.xlu0 %2501
      %2503 = vrot.lane.b32.xlu0 %v1567, 32
      %v2504 = vpop.permute.xlu0 %2503
      %2505 = vrot.lane.b32.xlu0 %v1568, 32
      %v2506 = vpop.permute.xlu0 %2505
      %2507 = vrot.lane.b32.xlu0 %v1569, 32
      %v2508 = vpop.permute.xlu0 %2507
      %2509 = vrot.lane.b32.xlu0 %v1570, 32
      %v2510 = vpop.permute.xlu0 %2509
      %2511 = vrot.lane.b32.xlu0 %v1571, 32
      %v2512 = vpop.permute.xlu0 %2511
      %2513 = vrot.lane.b32.xlu0 %v1572, 32
      %v2514 = vpop.permute.xlu0 %2513
      %2515 = vrot.lane.b32.xlu0 %v1573, 32
      %v2516 = vpop.permute.xlu0 %2515
      %2517 = vrot.lane.b32.xlu0 %v1574, 32
      %v2518 = vpop.permute.xlu0 %2517
      %2519 = vrot.lane.b32.xlu0 %v1575, 32
      %v2520 = vpop.permute.xlu0 %2519
      %2521 = vrot.lane.b32.xlu0 %v1576, 32
      %v2522 = vpop.permute.xlu0 %2521
      %2523 = vrot.lane.b32.xlu0 %v1577, 32
      %v2524 = vpop.permute.xlu0 %2523
      %2525 = vrot.lane.b32.xlu0 %v1578, 32
      %v2526 = vpop.permute.xlu0 %2525
      %2527 = vrot.lane.b32.xlu0 %v1579, 32
      %v2528 = vpop.permute.xlu0 %2527
      %2529 = vrot.lane.b32.xlu0 %v1580, 32
      %v2530 = vpop.permute.xlu0 %2529
      %2531 = vrot.lane.b32.xlu0 %v1581, 32
      %v2532 = vpop.permute.xlu0 %2531
      %2533 = vrot.lane.b32.xlu0 %v1582, 32
      %v2534 = vpop.permute.xlu0 %2533
      %2535 = vrot.lane.b32.xlu0 %v1583, 32
      %v2536 = vpop.permute.xlu0 %2535
      %2537 = vrot.lane.b32.xlu0 %v1584, 32
      %v2538 = vpop.permute.xlu0 %2537
      %2539 = vrot.lane.b32.xlu0 %v1585, 32
      %v2540 = vpop.permute.xlu0 %2539
      %2541 = vrot.lane.b32.xlu0 %v1586, 32
      %v2542 = vpop.permute.xlu0 %2541
      %2543 = vrot.lane.b32.xlu0 %v1587, 32
      %v2544 = vpop.permute.xlu0 %2543
      %2545 = vrot.lane.b32.xlu0 %v1588, 32
      %v2546 = vpop.permute.xlu0 %2545
      %2547 = vrot.lane.b32.xlu0 %v1589, 32
      %v2548 = vpop.permute.xlu0 %2547
      %2549 = vrot.lane.b32.xlu0 %v1590, 32
      %v2550 = vpop.permute.xlu0 %2549
      %2615 = vrot.lane.b32.xlu0 %v1719, 64
      %v2616 = vpop.permute.xlu0 %2615
      %2617 = vrot.lane.b32.xlu0 %v1720, 64
      %v2618 = vpop.permute.xlu0 %2617
      %2619 = vrot.lane.b32.xlu0 %v1721, 64
      %v2620 = vpop.permute.xlu0 %2619
      %2621 = vrot.lane.b32.xlu0 %v1722, 64
      %v2622 = vpop.permute.xlu0 %2621
      %2623 = vrot.lane.b32.xlu0 %v1723, 64
      %v2624 = vpop.permute.xlu0 %2623
      %2625 = vrot.lane.b32.xlu0 %v1724, 64
      %v2626 = vpop.permute.xlu0 %2625
      %2627 = vrot.lane.b32.xlu0 %v1725, 64
      %v2628 = vpop.permute.xlu0 %2627
      %2629 = vrot.lane.b32.xlu0 %v1726, 64
      %v2630 = vpop.permute.xlu0 %2629
      %2631 = vrot.lane.b32.xlu0 %v1727, 64
      %v2632 = vpop.permute.xlu0 %2631
      %2633 = vrot.lane.b32.xlu0 %v1728, 64
      %v2634 = vpop.permute.xlu0 %2633
      %2635 = vrot.lane.b32.xlu0 %v1729, 64
      %v2636 = vpop.permute.xlu0 %2635
      %2637 = vrot.lane.b32.xlu0 %v1730, 64
      %v2638 = vpop.permute.xlu0 %2637
      %2639 = vrot.lane.b32.xlu0 %v1731, 64
      %v2640 = vpop.permute.xlu0 %2639
      %2641 = vrot.lane.b32.xlu0 %v1732, 64
      %v2642 = vpop.permute.xlu0 %2641
      %2643 = vrot.lane.b32.xlu0 %v1733, 64
      %v2644 = vpop.permute.xlu0 %2643
      %2645 = vrot.lane.b32.xlu0 %v1734, 64
      %v2646 = vpop.permute.xlu0 %2645
      %2647 = vrot.lane.b32.xlu0 %v1735, 64
      %v2648 = vpop.permute.xlu0 %2647
      %2649 = vrot.lane.b32.xlu0 %v1736, 64
      %v2650 = vpop.permute.xlu0 %2649
      %2651 = vrot.lane.b32.xlu0 %v1737, 64
      %v2652 = vpop.permute.xlu0 %2651
      %2653 = vrot.lane.b32.xlu0 %v1738, 64
      %v2654 = vpop.permute.xlu0 %2653
      %2655 = vrot.lane.b32.xlu0 %v1739, 64
      %v2656 = vpop.permute.xlu0 %2655
      %2657 = vrot.lane.b32.xlu0 %v1740, 64
      %v2658 = vpop.permute.xlu0 %2657
      %2659 = vrot.lane.b32.xlu0 %v1741, 64
      %v2660 = vpop.permute.xlu0 %2659
      %2661 = vrot.lane.b32.xlu0 %v1742, 64
      %v2662 = vpop.permute.xlu0 %2661
      %2663 = vrot.lane.b32.xlu0 %v1743, 64
      %v2664 = vpop.permute.xlu0 %2663
      %2665 = vrot.lane.b32.xlu0 %v1744, 64
      %v2666 = vpop.permute.xlu0 %2665
      %2667 = vrot.lane.b32.xlu0 %v1745, 64
      %v2668 = vpop.permute.xlu0 %2667
      %2669 = vrot.lane.b32.xlu0 %v1746, 64
      %v2670 = vpop.permute.xlu0 %2669
      %2671 = vrot.lane.b32.xlu0 %v1747, 64
      %v2672 = vpop.permute.xlu0 %2671
      %2673 = vrot.lane.b32.xlu0 %v1748, 64
      %v2674 = vpop.permute.xlu0 %2673
      %2675 = vrot.lane.b32.xlu0 %v1749, 64
      %v2676 = vpop.permute.xlu0 %2675
      %2677 = vrot.lane.b32.xlu0 %v1750, 64
      %v2678 = vpop.permute.xlu0 %2677
      %2743 = vrot.lane.b32.xlu0 %v1879, 96
      %v2744 = vpop.permute.xlu0 %2743
      %2745 = vrot.lane.b32.xlu0 %v1880, 96
      %v2746 = vpop.permute.xlu0 %2745
      %2747 = vrot.lane.b32.xlu0 %v1881, 96
      %v2748 = vpop.permute.xlu0 %2747
      %2749 = vrot.lane.b32.xlu0 %v1882, 96
      %v2750 = vpop.permute.xlu0 %2749
      %2751 = vrot.lane.b32.xlu0 %v1883, 96
      %v2752 = vpop.permute.xlu0 %2751
      %2753 = vrot.lane.b32.xlu0 %v1884, 96
      %v2754 = vpop.permute.xlu0 %2753
      %2755 = vrot.lane.b32.xlu0 %v1885, 96
      %v2756 = vpop.permute.xlu0 %2755
      %2757 = vrot.lane.b32.xlu0 %v1886, 96
      %v2758 = vpop.permute.xlu0 %2757
      %2759 = vrot.lane.b32.xlu0 %v1887, 96
      %v2760 = vpop.permute.xlu0 %2759
      %2761 = vrot.lane.b32.xlu0 %v1888, 96
      %v2762 = vpop.permute.xlu0 %2761
      %2763 = vrot.lane.b32.xlu0 %v1889, 96
      %v2764 = vpop.permute.xlu0 %2763
      %2765 = vrot.lane.b32.xlu0 %v1890, 96
      %v2766 = vpop.permute.xlu0 %2765
      %2767 = vrot.lane.b32.xlu0 %v1891, 96
      %v2768 = vpop.permute.xlu0 %2767
      %2769 = vrot.lane.b32.xlu0 %v1892, 96
      %v2770 = vpop.permute.xlu0 %2769
      %2771 = vrot.lane.b32.xlu0 %v1893, 96
      %v2772 = vpop.permute.xlu0 %2771
      %2773 = vrot.lane.b32.xlu0 %v1894, 96
      %v2774 = vpop.permute.xlu0 %2773
      %2775 = vrot.lane.b32.xlu0 %v1895, 96
      %v2776 = vpop.permute.xlu0 %2775
      %2777 = vrot.lane.b32.xlu0 %v1896, 96
      %v2778 = vpop.permute.xlu0 %2777
      %2779 = vrot.lane.b32.xlu0 %v1897, 96
      %v2780 = vpop.permute.xlu0 %2779
      %2781 = vrot.lane.b32.xlu0 %v1898, 96
      %v2782 = vpop.permute.xlu0 %2781
      %2783 = vrot.lane.b32.xlu0 %v1899, 96
      %v2784 = vpop.permute.xlu0 %2783
      %2785 = vrot.lane.b32.xlu0 %v1900, 96
      %v2786 = vpop.permute.xlu0 %2785
      %2787 = vrot.lane.b32.xlu0 %v1901, 96
      %v2788 = vpop.permute.xlu0 %2787
      %2789 = vrot.lane.b32.xlu0 %v1902, 96
      %v2790 = vpop.permute.xlu0 %2789
      %2791 = vrot.lane.b32.xlu0 %v1903, 96
      %v2792 = vpop.permute.xlu0 %2791
      %2793 = vrot.lane.b32.xlu0 %v1904, 96
      %v2794 = vpop.permute.xlu0 %2793
      %2795 = vrot.lane.b32.xlu0 %v1905, 96
      %v2796 = vpop.permute.xlu0 %2795
      %2797 = vrot.lane.b32.xlu0 %v1906, 96
      %v2798 = vpop.permute.xlu0 %2797
      %2799 = vrot.lane.b32.xlu0 %v1907, 96
      %v2800 = vpop.permute.xlu0 %2799
      %2801 = vrot.lane.b32.xlu0 %v1908, 96
      %v2802 = vpop.permute.xlu0 %2801
      %2803 = vrot.lane.b32.xlu0 %v1909, 96
      %v2804 = vpop.permute.xlu0 %2803
      %2805 = vrot.lane.b32.xlu0 %v1910, 96
      %v2806 = vpop.permute.xlu0 %2805
      %vm2839 = vcmask 261120
      %v2840 = vsel %vm2839, %v854, %v2104
      %v2841 = vsel %vm2839, %v855, %v2106
      %v2842 = vsel %vm2839, %v856, %v2108
      %v2843 = vsel %vm2839, %v857, %v2110
      %v2844 = vsel %vm2839, %v858, %v2112
      %v2845 = vsel %vm2839, %v859, %v2114
      %v2846 = vsel %vm2839, %v860, %v2116
      %v2847 = vsel %vm2839, %v861, %v2118
      %v2848 = vsel %vm2839, %v862, %v2120
      %v2849 = vsel %vm2839, %v863, %v2122
      %v2850 = vsel %vm2839, %v864, %v2124
      %v2851 = vsel %vm2839, %v865, %v2126
      %v2852 = vsel %vm2839, %v866, %v2128
      %v2853 = vsel %vm2839, %v867, %v2130
      %v2854 = vsel %vm2839, %v868, %v2132
      %v2855 = vsel %vm2839, %v869, %v2134
      %v2856 = vsel %vm2839, %v870, %v2136
      %v2857 = vsel %vm2839, %v871, %v2138
      %v2858 = vsel %vm2839, %v872, %v2140
      %v2859 = vsel %vm2839, %v873, %v2142
      %v2860 = vsel %vm2839, %v874, %v2144
      %v2861 = vsel %vm2839, %v875, %v2146
      %v2862 = vsel %vm2839, %v876, %v2148
      %v2863 = vsel %vm2839, %v877, %v2150
      %v2864 = vsel %vm2839, %v878, %v2152
      %v2865 = vsel %vm2839, %v879, %v2154
      %v2866 = vsel %vm2839, %v880, %v2156
      %v2867 = vsel %vm2839, %v881, %v2158
      %v2868 = vsel %vm2839, %v882, %v2160
      %v2869 = vsel %vm2839, %v883, %v2162
      %v2870 = vsel %vm2839, %v884, %v2164
      %v2871 = vsel %vm2839, %v885, %v2166
      %vm2872 = vcmask 523264
      %v2873 = vsel %vm2872, %v2840, %v2232
      %v2874 = vsel %vm2872, %v2841, %v2234
      %v2875 = vsel %vm2872, %v2842, %v2236
      %v2876 = vsel %vm2872, %v2843, %v2238
      %v2877 = vsel %vm2872, %v2844, %v2240
      %v2878 = vsel %vm2872, %v2845, %v2242
      %v2879 = vsel %vm2872, %v2846, %v2244
      %v2880 = vsel %vm2872, %v2847, %v2246
      %v2881 = vsel %vm2872, %v2848, %v2248
      %v2882 = vsel %vm2872, %v2849, %v2250
      %v2883 = vsel %vm2872, %v2850, %v2252
      %v2884 = vsel %vm2872, %v2851, %v2254
      %v2885 = vsel %vm2872, %v2852, %v2256
      %v2886 = vsel %vm2872, %v2853, %v2258
      %v2887 = vsel %vm2872, %v2854, %v2260
      %v2888 = vsel %vm2872, %v2855, %v2262
      %v2889 = vsel %vm2872, %v2856, %v2264
      %v2890 = vsel %vm2872, %v2857, %v2266
      %v2891 = vsel %vm2872, %v2858, %v2268
      %v2892 = vsel %vm2872, %v2859, %v2270
      %v2893 = vsel %vm2872, %v2860, %v2272
      %v2894 = vsel %vm2872, %v2861, %v2274
      %v2895 = vsel %vm2872, %v2862, %v2276
      %v2896 = vsel %vm2872, %v2863, %v2278
      %v2897 = vsel %vm2872, %v2864, %v2280
      %v2898 = vsel %vm2872, %v2865, %v2282
      %v2899 = vsel %vm2872, %v2866, %v2284
      %v2900 = vsel %vm2872, %v2867, %v2286
      %v2901 = vsel %vm2872, %v2868, %v2288
      %v2902 = vsel %vm2872, %v2869, %v2290
      %v2903 = vsel %vm2872, %v2870, %v2292
      %v2904 = vsel %vm2872, %v2871, %v2294
      %vm2905 = vcmask 785408
      %v2906 = vsel %vm2905, %v2873, %v2360
      %v2907 = vsel %vm2905, %v2874, %v2362
      %v2908 = vsel %vm2905, %v2875, %v2364
      %v2909 = vsel %vm2905, %v2876, %v2366
      %v2910 = vsel %vm2905, %v2877, %v2368
      %v2911 = vsel %vm2905, %v2878, %v2370
      %v2912 = vsel %vm2905, %v2879, %v2372
      %v2913 = vsel %vm2905, %v2880, %v2374
      %v2914 = vsel %vm2905, %v2881, %v2376
      %v2915 = vsel %vm2905, %v2882, %v2378
      %v2916 = vsel %vm2905, %v2883, %v2380
      %v2917 = vsel %vm2905, %v2884, %v2382
      %v2918 = vsel %vm2905, %v2885, %v2384
      %v2919 = vsel %vm2905, %v2886, %v2386
      %v2920 = vsel %vm2905, %v2887, %v2388
      %v2921 = vsel %vm2905, %v2888, %v2390
      %v2922 = vsel %vm2905, %v2889, %v2392
      %v2923 = vsel %vm2905, %v2890, %v2394
      %v2924 = vsel %vm2905, %v2891, %v2396
      %v2925 = vsel %vm2905, %v2892, %v2398
      %v2926 = vsel %vm2905, %v2893, %v2400
      %v2927 = vsel %vm2905, %v2894, %v2402
      %v2928 = vsel %vm2905, %v2895, %v2404
      %v2929 = vsel %vm2905, %v2896, %v2406
      %v2930 = vsel %vm2905, %v2897, %v2408
      %v2931 = vsel %vm2905, %v2898, %v2410
      %v2932 = vsel %vm2905, %v2899, %v2412
      %v2933 = vsel %vm2905, %v2900, %v2414
      %v2934 = vsel %vm2905, %v2901, %v2416
      %v2935 = vsel %vm2905, %v2902, %v2418
      %v2936 = vsel %vm2905, %v2903, %v2420
      %v2937 = vsel %vm2905, %v2904, %v2422
      %v2938 = vsel %vm2839, %v531, %v2488
      %v2939 = vsel %vm2839, %v532, %v2490
      %v2940 = vsel %vm2839, %v533, %v2492
      %v2941 = vsel %vm2839, %v534, %v2494
      %v2942 = vsel %vm2839, %v535, %v2496
      %v2943 = vsel %vm2839, %v536, %v2498
      %v2944 = vsel %vm2839, %v537, %v2500
      %v2945 = vsel %vm2839, %v538, %v2502
      %v2946 = vsel %vm2839, %v539, %v2504
      %v2947 = vsel %vm2839, %v540, %v2506
      %v2948 = vsel %vm2839, %v541, %v2508
      %v2949 = vsel %vm2839, %v542, %v2510
      %v2950 = vsel %vm2839, %v543, %v2512
      %v2951 = vsel %vm2839, %v544, %v2514
      %v2952 = vsel %vm2839, %v545, %v2516
      %v2953 = vsel %vm2839, %v546, %v2518
      %v2954 = vsel %vm2839, %v547, %v2520
      %v2955 = vsel %vm2839, %v548, %v2522
      %v2956 = vsel %vm2839, %v549, %v2524
      %v2957 = vsel %vm2839, %v550, %v2526
      %v2958 = vsel %vm2839, %v551, %v2528
      %v2959 = vsel %vm2839, %v552, %v2530
      %v2960 = vsel %vm2839, %v553, %v2532
      %v2961 = vsel %vm2839, %v554, %v2534
      %v2962 = vsel %vm2839, %v555, %v2536
      %v2963 = vsel %vm2839, %v556, %v2538
      %v2964 = vsel %vm2839, %v557, %v2540
      %v2965 = vsel %vm2839, %v558, %v2542
      %v2966 = vsel %vm2839, %v559, %v2544
      %v2967 = vsel %vm2839, %v560, %v2546
      %v2968 = vsel %vm2839, %v561, %v2548
      %v2969 = vsel %vm2839, %v562, %v2550
      %v2970 = vsel %vm2872, %v2938, %v2616
      %v2971 = vsel %vm2872, %v2939, %v2618
      %v2972 = vsel %vm2872, %v2940, %v2620
      %v2973 = vsel %vm2872, %v2941, %v2622
      %v2974 = vsel %vm2872, %v2942, %v2624
      %v2975 = vsel %vm2872, %v2943, %v2626
      %v2976 = vsel %vm2872, %v2944, %v2628
      %v2977 = vsel %vm2872, %v2945, %v2630
      %v2978 = vsel %vm2872, %v2946, %v2632
      %v2979 = vsel %vm2872, %v2947, %v2634
      %v2980 = vsel %vm2872, %v2948, %v2636
      %v2981 = vsel %vm2872, %v2949, %v2638
      %v2982 = vsel %vm2872, %v2950, %v2640
      %v2983 = vsel %vm2872, %v2951, %v2642
      %v2984 = vsel %vm2872, %v2952, %v2644
      %v2985 = vsel %vm2872, %v2953, %v2646
      %v2986 = vsel %vm2872, %v2954, %v2648
      %v2987 = vsel %vm2872, %v2955, %v2650
      %v2988 = vsel %vm2872, %v2956, %v2652
      %v2989 = vsel %vm2872, %v2957, %v2654
      %v2990 = vsel %vm2872, %v2958, %v2656
      %v2991 = vsel %vm2872, %v2959, %v2658
      %v2992 = vsel %vm2872, %v2960, %v2660
      %v2993 = vsel %vm2872, %v2961, %v2662
      %v2994 = vsel %vm2872, %v2962, %v2664
      %v2995 = vsel %vm2872, %v2963, %v2666
      %v2996 = vsel %vm2872, %v2964, %v2668
      %v2997 = vsel %vm2872, %v2965, %v2670
      %v2998 = vsel %vm2872, %v2966, %v2672
      %v2999 = vsel %vm2872, %v2967, %v2674
      %v3000 = vsel %vm2872, %v2968, %v2676
      %v3001 = vsel %vm2872, %v2969, %v2678
      %v3002 = vsel %vm2905, %v2970, %v2744
      %v3003 = vsel %vm2905, %v2971, %v2746
      %v3004 = vsel %vm2905, %v2972, %v2748
      %v3005 = vsel %vm2905, %v2973, %v2750
      %v3006 = vsel %vm2905, %v2974, %v2752
      %v3007 = vsel %vm2905, %v2975, %v2754
      %v3008 = vsel %vm2905, %v2976, %v2756
      %v3009 = vsel %vm2905, %v2977, %v2758
      %v3010 = vsel %vm2905, %v2978, %v2760
      %v3011 = vsel %vm2905, %v2979, %v2762
      %v3012 = vsel %vm2905, %v2980, %v2764
      %v3013 = vsel %vm2905, %v2981, %v2766
      %v3014 = vsel %vm2905, %v2982, %v2768
      %v3015 = vsel %vm2905, %v2983, %v2770
      %v3016 = vsel %vm2905, %v2984, %v2772
      %v3017 = vsel %vm2905, %v2985, %v2774
      %v3018 = vsel %vm2905, %v2986, %v2776
      %v3019 = vsel %vm2905, %v2987, %v2778
      %v3020 = vsel %vm2905, %v2988, %v2780
      %v3021 = vsel %vm2905, %v2989, %v2782
      %v3022 = vsel %vm2905, %v2990, %v2784
      %v3023 = vsel %vm2905, %v2991, %v2786
      %v3024 = vsel %vm2905, %v2992, %v2788
      %v3025 = vsel %vm2905, %v2993, %v2790
      %v3026 = vsel %vm2905, %v2994, %v2792
      %v3027 = vsel %vm2905, %v2995, %v2794
      %v3028 = vsel %vm2905, %v2996, %v2796
      %v3029 = vsel %vm2905, %v2997, %v2798
      %v3030 = vsel %vm2905, %v2998, %v2800
      %v3031 = vsel %vm2905, %v2999, %v2802
      %v3032 = vsel %vm2905, %v3000, %v2804
      %v3033 = vsel %vm2905, %v3001, %v2806
      %v3034 = vpack.c.bf16 %v2907, %v2906
      %v3035 = vpack.c.bf16 %v3003, %v3002
      %v3036 = vpack.c.bf16 %v2040, %v2039
      %v3037 = vpack.c.bf16 %v2909, %v2908
      %v3038 = vpack.c.bf16 %v3005, %v3004
      %v3039 = vpack.c.bf16 %v2042, %v2041
      %v3040 = vpack.c.bf16 %v2911, %v2910
      %v3041 = vpack.c.bf16 %v3007, %v3006
      %v3042 = vpack.c.bf16 %v2044, %v2043
      %v3043 = vpack.c.bf16 %v2913, %v2912
      %v3044 = vpack.c.bf16 %v3009, %v3008
      %v3045 = vpack.c.bf16 %v2046, %v2045
      %v3046 = vpack.c.bf16 %v2915, %v2914
      %v3047 = vpack.c.bf16 %v3011, %v3010
      %v3048 = vpack.c.bf16 %v2048, %v2047
      %v3049 = vpack.c.bf16 %v2917, %v2916
      %v3050 = vpack.c.bf16 %v3013, %v3012
      %v3051 = vpack.c.bf16 %v2050, %v2049
      %v3052 = vpack.c.bf16 %v2919, %v2918
      %v3053 = vpack.c.bf16 %v3015, %v3014
      %v3054 = vpack.c.bf16 %v2052, %v2051
      %v3055 = vpack.c.bf16 %v2921, %v2920
      %v3056 = vpack.c.bf16 %v3017, %v3016
      %v3057 = vpack.c.bf16 %v2054, %v2053
      %v3058 = vpack.c.bf16 %v2923, %v2922
      %v3059 = vpack.c.bf16 %v3019, %v3018
      %v3060 = vpack.c.bf16 %v2056, %v2055
      %v3061 = vpack.c.bf16 %v2925, %v2924
      %v3062 = vpack.c.bf16 %v3021, %v3020
      %v3063 = vpack.c.bf16 %v2058, %v2057
      %v3064 = vpack.c.bf16 %v2927, %v2926
      %v3065 = vpack.c.bf16 %v3023, %v3022
      %v3066 = vpack.c.bf16 %v2060, %v2059
      %v3067 = vpack.c.bf16 %v2929, %v2928
      %v3068 = vpack.c.bf16 %v3025, %v3024
      %v3069 = vpack.c.bf16 %v2062, %v2061
      %v3070 = vpack.c.bf16 %v2931, %v2930
      %v3071 = vpack.c.bf16 %v3027, %v3026
      %v3072 = vpack.c.bf16 %v2064, %v2063
      %v3073 = vpack.c.bf16 %v2933, %v2932
      %v3074 = vpack.c.bf16 %v3029, %v3028
      %v3075 = vpack.c.bf16 %v2066, %v2065
      %v3076 = vpack.c.bf16 %v2935, %v2934
      %v3077 = vpack.c.bf16 %v3031, %v3030
      %v3078 = vpack.c.bf16 %v2068, %v2067
      %v3079 = vpack.c.bf16 %v2937, %v2936
      %v3080 = vpack.c.bf16 %v3033, %v3032
      %v3081 = vpack.c.bf16 %v2070, %v2069
      %v3082 = vld [vmem:[%s3] sm:$0xf]
      %v3083 = vld [vmem:[%s3 + $0x4] sm:$0xf]
      %v3084 = vld [vmem:[%s3 + $0x8] sm:$0xf]
      %v3085 = vld [vmem:[%s3 + $0xc] sm:$0xf]
      %v3086 = vld [vmem:[%s3 + $0x10] sm:$0xf]
      %v3087 = vld [vmem:[%s3 + $0x14] sm:$0xf]
      %v3088 = vld [vmem:[%s3 + $0x18] sm:$0xf]
      %v3089 = vld [vmem:[%s3 + $0x1c] sm:$0xf]
      %v3090 = vld [vmem:[%s3 + $0x20] sm:$0xf]
      %v3091 = vld [vmem:[%s3 + $0x24] sm:$0xf]
      %v3092 = vld [vmem:[%s3 + $0x28] sm:$0xf]
      %v3093 = vld [vmem:[%s3 + $0x2c] sm:$0xf]
      %v3094 = vld [vmem:[%s3 + $0x30] sm:$0xf]
      %v3095 = vld [vmem:[%s3 + $0x34] sm:$0xf]
      %v3096 = vld [vmem:[%s3 + $0x38] sm:$0xf]
      %v3097 = vld [vmem:[%s3 + $0x3c] sm:$0xf]
      %v3098 = vld [vmem:[%s3 + $0x40] sm:$0xf]
      %v3099 = vld [vmem:[%s3 + $0x44] sm:$0xf]
      %v3100 = vld [vmem:[%s3 + $0x48] sm:$0xf]
      %v3101 = vld [vmem:[%s3 + $0x4c] sm:$0xf]
      %v3102 = vld [vmem:[%s3 + $0x50] sm:$0xf]
      %v3103 = vld [vmem:[%s3 + $0x54] sm:$0xf]
      %v3104 = vld [vmem:[%s3 + $0x58] sm:$0xf]
      %v3105 = vld [vmem:[%s3 + $0x5c] sm:$0xf]
      %v3106 = vld [vmem:[%s3 + $0x60] sm:$0xf]
      %v3107 = vld [vmem:[%s3 + $0x64] sm:$0xf]
      %v3108 = vld [vmem:[%s3 + $0x68] sm:$0xf]
      %v3109 = vld [vmem:[%s3 + $0x6c] sm:$0xf]
      %v3110 = vld [vmem:[%s3 + $0x70] sm:$0xf]
      %v3111 = vld [vmem:[%s3 + $0x74] sm:$0xf]
      %v3112 = vld [vmem:[%s3 + $0x78] sm:$0xf]
      %v3113 = vld [vmem:[%s3 + $0x7c] sm:$0xf]
      %v3114 = vld [vmem:[%s3 + $0x80] sm:$0xf]
      %v3115 = vld [vmem:[%s3 + $0x84] sm:$0xf]
      %v3116 = vld [vmem:[%s3 + $0x88] sm:$0xf]
      %v3117 = vld [vmem:[%s3 + $0x8c] sm:$0xf]
      %v3118 = vld [vmem:[%s4] sm:$0x1]
      %v3120 = vperm.slane %v3118, 0
      %v3158 = vunpack.c.l.b16 %v3082
      %v3159 = vunpack.c.l.b16 %v3083
      %v3160 = vunpack.c.l.b16 %v3084
      %v3161 = vunpack.c.l.b16 %v3085
      %v3162 = vunpack.c.l.b16 %v3086
      %v3163 = vunpack.c.l.b16 %v3087
      %v3164 = vunpack.c.l.b16 %v3088
      %v3165 = vunpack.c.l.b16 %v3089
      %v3166 = vunpack.c.l.b16 %v3090
      %v3167 = vunpack.c.l.b16 %v3091
      %v3168 = vunpack.c.l.b16 %v3092
      %v3169 = vunpack.c.l.b16 %v3093
      %v3170 = vunpack.c.l.b16 %v3094
      %v3171 = vunpack.c.l.b16 %v3095
      %v3172 = vunpack.c.l.b16 %v3096
      %v3173 = vunpack.c.l.b16 %v3097
      %v3174 = vunpack.c.l.b16 %v3098
      %v3175 = vunpack.c.l.b16 %v3099
      %v3176 = vunpack.c.l.b16 %v3100
      %v3177 = vunpack.c.l.b16 %v3101
      %v3178 = vunpack.c.l.b16 %v3102
      %v3179 = vunpack.c.l.b16 %v3103
      %v3180 = vunpack.c.l.b16 %v3104
      %v3181 = vunpack.c.l.b16 %v3105
      %v3182 = vunpack.c.l.b16 %v3106
      %v3183 = vunpack.c.l.b16 %v3107
      %v3184 = vunpack.c.l.b16 %v3108
      %v3185 = vunpack.c.l.b16 %v3109
      %v3186 = vunpack.c.l.b16 %v3110
      %v3187 = vunpack.c.l.b16 %v3111
      %v3188 = vunpack.c.l.b16 %v3112
      %v3189 = vunpack.c.l.b16 %v3113
      %v3190 = vunpack.c.l.b16 %v3114
      %v3191 = vunpack.c.l.b16 %v3115
      %v3192 = vunpack.c.l.b16 %v3116
      %v3193 = vunpack.c.l.b16 %v3117
      %v3194 = vpack.c.b16 %v3159, %v3158
      %v3195 = vpack.c.b16 %v3161, %v3160
      %v3196 = vpack.c.b16 %v3163, %v3162
      %v3197 = vpack.c.b16 %v3165, %v3164
      %v3198 = vpack.c.b16 %v3167, %v3166
      %v3199 = vpack.c.b16 %v3169, %v3168
      %v3200 = vpack.c.b16 %v3171, %v3170
      %v3201 = vpack.c.b16 %v3173, %v3172
      %v3202 = vpack.c.b16 %v3175, %v3174
      %v3203 = vpack.c.b16 %v3177, %v3176
      %v3204 = vpack.c.b16 %v3179, %v3178
      %v3205 = vpack.c.b16 %v3181, %v3180
      %v3206 = vpack.c.b16 %v3183, %v3182
      %v3207 = vpack.c.b16 %v3185, %v3184
      %v3208 = vpack.c.b16 %v3187, %v3186
      %v3209 = vpack.c.b16 %v3189, %v3188
      %v3210 = vpack.c.b16 %v3191, %v3190
      %v3211 = vpack.c.b16 %v3193, %v3192
      %v3231 = vsel %vm2839, %v3036, 0
      %v3234 = vsel %vm2839, %v3039, 0
      %v3237 = vsel %vm2839, %v3042, 0
      %v3240 = vsel %vm2839, %v3045, 0
      %v3243 = vsel %vm2839, %v3048, 0
      %v3246 = vsel %vm2839, %v3051, 0
      %v3249 = vsel %vm2839, %v3054, 0
      %v3252 = vsel %vm2839, %v3057, 0
      %v3255 = vsel %vm2839, %v3060, 0
      %v3258 = vsel %vm2839, %v3063, 0
      %v3261 = vsel %vm2839, %v3066, 0
      %v3264 = vsel %vm2839, %v3069, 0
      %v3267 = vsel %vm2839, %v3072, 0
      %v3270 = vsel %vm2839, %v3075, 0
      %v3273 = vsel %vm2839, %v3078, 0
      %v3276 = vsel %vm2839, %v3081, 0
      %3278 = vmatpush.bf16.msra.mxu0 %v3201
      %3279 = vmatpush.bf16.msra.mxu0 %v3200
      %3280 = vmatpush.bf16.msra.mxu0 %v3199
      %3281 = vmatpush.bf16.msra.mxu0 %v3198
      %3282 = vmatpush.bf16.msra.mxu0 %v3197
      %3283 = vmatpush.bf16.msra.mxu0 %v3196
      %3284 = vmatpush.bf16.msra.mxu0 %v3195
      %3285 = vmatpush.bf16.msra.mxu0 %v3194
      %3286 = vmatmul.bf16.gmra.mxu0 %v3034
      %v3287 = vpop.f32.mrf.mxu0
      %v3288 = vadd.f32 %v3120, %v3287
      %v3289 = vpop.f32.mrf.mxu0
      %v3290 = vadd.f32 %v3120, %v3289
      %3291 = vmatmul.bf16.gmra.mxu0 %v3037
      %v3292 = vpop.f32.mrf.mxu0
      %v3293 = vadd.f32 %v3120, %v3292
      %v3294 = vpop.f32.mrf.mxu0
      %v3295 = vadd.f32 %v3120, %v3294
      %3296 = vmatmul.bf16.gmra.mxu0 %v3040
      %v3297 = vpop.f32.mrf.mxu0
      %v3298 = vadd.f32 %v3120, %v3297
      %v3299 = vpop.f32.mrf.mxu0
      %v3300 = vadd.f32 %v3120, %v3299
      %3301 = vmatmul.bf16.gmra.mxu0 %v3043
      %v3302 = vpop.f32.mrf.mxu0
      %v3303 = vadd.f32 %v3120, %v3302
      %v3304 = vpop.f32.mrf.mxu0
      %v3305 = vadd.f32 %v3120, %v3304
      %3306 = vmatmul.bf16.gmra.mxu0 %v3046
      %v3307 = vpop.f32.mrf.mxu0
      %v3308 = vadd.f32 %v3120, %v3307
      %v3309 = vpop.f32.mrf.mxu0
      %v3310 = vadd.f32 %v3120, %v3309
      %3311 = vmatmul.bf16.gmra.mxu0 %v3049
      %v3312 = vpop.f32.mrf.mxu0
      %v3313 = vadd.f32 %v3120, %v3312
      %v3314 = vpop.f32.mrf.mxu0
      %v3315 = vadd.f32 %v3120, %v3314
      %3316 = vmatmul.bf16.gmra.mxu0 %v3052
      %v3317 = vpop.f32.mrf.mxu0
      %v3318 = vadd.f32 %v3120, %v3317
      %v3319 = vpop.f32.mrf.mxu0
      %v3320 = vadd.f32 %v3120, %v3319
      %3321 = vmatmul.bf16.gmra.mxu0 %v3055
      %v3322 = vpop.f32.mrf.mxu0
      %v3323 = vadd.f32 %v3120, %v3322
      %v3324 = vpop.f32.mrf.mxu0
      %v3325 = vadd.f32 %v3120, %v3324
      %3326 = vmatmul.bf16.gmra.mxu0 %v3058
      %v3327 = vpop.f32.mrf.mxu0
      %v3328 = vadd.f32 %v3120, %v3327
      %v3329 = vpop.f32.mrf.mxu0
      %v3330 = vadd.f32 %v3120, %v3329
      %3331 = vmatmul.bf16.gmra.mxu0 %v3061
      %v3332 = vpop.f32.mrf.mxu0
      %v3333 = vadd.f32 %v3120, %v3332
      %v3334 = vpop.f32.mrf.mxu0
      %v3335 = vadd.f32 %v3120, %v3334
      %3336 = vmatmul.bf16.gmra.mxu0 %v3064
      %v3337 = vpop.f32.mrf.mxu0
      %v3338 = vadd.f32 %v3120, %v3337
      %v3339 = vpop.f32.mrf.mxu0
      %v3340 = vadd.f32 %v3120, %v3339
      %3341 = vmatmul.bf16.gmra.mxu0 %v3067
      %v3342 = vpop.f32.mrf.mxu0
      %v3343 = vadd.f32 %v3120, %v3342
      %v3344 = vpop.f32.mrf.mxu0
      %v3345 = vadd.f32 %v3120, %v3344
      %3346 = vmatmul.bf16.gmra.mxu0 %v3070
      %v3347 = vpop.f32.mrf.mxu0
      %v3348 = vadd.f32 %v3120, %v3347
      %v3349 = vpop.f32.mrf.mxu0
      %v3350 = vadd.f32 %v3120, %v3349
      %3351 = vmatmul.bf16.gmra.mxu0 %v3073
      %v3352 = vpop.f32.mrf.mxu0
      %v3353 = vadd.f32 %v3120, %v3352
      %v3354 = vpop.f32.mrf.mxu0
      %v3355 = vadd.f32 %v3120, %v3354
      %3356 = vmatmul.bf16.gmra.mxu0 %v3076
      %v3357 = vpop.f32.mrf.mxu0
      %v3358 = vadd.f32 %v3120, %v3357
      %v3359 = vpop.f32.mrf.mxu0
      %v3360 = vadd.f32 %v3120, %v3359
      %3361 = vmatmul.bf16.gmra.mxu0 %v3079
      %v3362 = vpop.f32.mrf.mxu0
      %v3363 = vadd.f32 %v3120, %v3362
      %v3364 = vpop.f32.mrf.mxu0
      %v3365 = vadd.f32 %v3120, %v3364
      %3366 = vdwg.mxu0
      %3367 = vmatpush.bf16.msra.mxu0 %v3209
      %3368 = vmatpush.bf16.msra.mxu0 %v3208
      %3369 = vmatpush.bf16.msra.mxu0 %v3207
      %3370 = vmatpush.bf16.msra.mxu0 %v3206
      %3371 = vmatpush.bf16.msra.mxu0 %v3205
      %3372 = vmatpush.bf16.msra.mxu0 %v3204
      %3373 = vmatpush.bf16.msra.mxu0 %v3203
      %3374 = vmatpush.bf16.msra.mxu0 %v3202
      %3375 = vmatmul.bf16.gmra.mxu0 %v3035
      %v3376 = vpop.f32.mrf.mxu0
      %v3377 = vadd.f32 %v3288, %v3376
      %v3378 = vpop.f32.mrf.mxu0
      %v3379 = vadd.f32 %v3290, %v3378
      %3380 = vmatmul.bf16.gmra.mxu0 %v3038
      %v3381 = vpop.f32.mrf.mxu0
      %v3382 = vadd.f32 %v3293, %v3381
      %v3383 = vpop.f32.mrf.mxu0
      %v3384 = vadd.f32 %v3295, %v3383
      %3385 = vmatmul.bf16.gmra.mxu0 %v3041
      %v3386 = vpop.f32.mrf.mxu0
      %v3387 = vadd.f32 %v3298, %v3386
      %v3388 = vpop.f32.mrf.mxu0
      %v3389 = vadd.f32 %v3300, %v3388
      %3390 = vmatmul.bf16.gmra.mxu0 %v3044
      %v3391 = vpop.f32.mrf.mxu0
      %v3392 = vadd.f32 %v3303, %v3391
      %v3393 = vpop.f32.mrf.mxu0
      %v3394 = vadd.f32 %v3305, %v3393
      %3395 = vmatmul.bf16.gmra.mxu0 %v3047
      %v3396 = vpop.f32.mrf.mxu0
      %v3397 = vadd.f32 %v3308, %v3396
      %v3398 = vpop.f32.mrf.mxu0
      %v3399 = vadd.f32 %v3310, %v3398
      %3400 = vmatmul.bf16.gmra.mxu0 %v3050
      %v3401 = vpop.f32.mrf.mxu0
      %v3402 = vadd.f32 %v3313, %v3401
      %v3403 = vpop.f32.mrf.mxu0
      %v3404 = vadd.f32 %v3315, %v3403
      %3405 = vmatmul.bf16.gmra.mxu0 %v3053
      %v3406 = vpop.f32.mrf.mxu0
      %v3407 = vadd.f32 %v3318, %v3406
      %v3408 = vpop.f32.mrf.mxu0
      %v3409 = vadd.f32 %v3320, %v3408
      %3410 = vmatmul.bf16.gmra.mxu0 %v3056
      %v3411 = vpop.f32.mrf.mxu0
      %v3412 = vadd.f32 %v3323, %v3411
      %v3413 = vpop.f32.mrf.mxu0
      %v3414 = vadd.f32 %v3325, %v3413
      %3415 = vmatmul.bf16.gmra.mxu0 %v3059
      %v3416 = vpop.f32.mrf.mxu0
      %v3417 = vadd.f32 %v3328, %v3416
      %v3418 = vpop.f32.mrf.mxu0
      %v3419 = vadd.f32 %v3330, %v3418
      %3420 = vmatmul.bf16.gmra.mxu0 %v3062
      %v3421 = vpop.f32.mrf.mxu0
      %v3422 = vadd.f32 %v3333, %v3421
      %v3423 = vpop.f32.mrf.mxu0
      %v3424 = vadd.f32 %v3335, %v3423
      %3425 = vmatmul.bf16.gmra.mxu0 %v3065
      %v3426 = vpop.f32.mrf.mxu0
      %v3427 = vadd.f32 %v3338, %v3426
      %v3428 = vpop.f32.mrf.mxu0
      %v3429 = vadd.f32 %v3340, %v3428
      %3430 = vmatmul.bf16.gmra.mxu0 %v3068
      %v3431 = vpop.f32.mrf.mxu0
      %v3432 = vadd.f32 %v3343, %v3431
      %v3433 = vpop.f32.mrf.mxu0
      %v3434 = vadd.f32 %v3345, %v3433
      %3435 = vmatmul.bf16.gmra.mxu0 %v3071
      %v3436 = vpop.f32.mrf.mxu0
      %v3437 = vadd.f32 %v3348, %v3436
      %v3438 = vpop.f32.mrf.mxu0
      %v3439 = vadd.f32 %v3350, %v3438
      %3440 = vmatmul.bf16.gmra.mxu0 %v3074
      %v3441 = vpop.f32.mrf.mxu0
      %v3442 = vadd.f32 %v3353, %v3441
      %v3443 = vpop.f32.mrf.mxu0
      %v3444 = vadd.f32 %v3355, %v3443
      %3445 = vmatmul.bf16.gmra.mxu0 %v3077
      %v3446 = vpop.f32.mrf.mxu0
      %v3447 = vadd.f32 %v3358, %v3446
      %v3448 = vpop.f32.mrf.mxu0
      %v3449 = vadd.f32 %v3360, %v3448
      %3450 = vmatmul.bf16.gmra.mxu0 %v3080
      %v3451 = vpop.f32.mrf.mxu0
      %v3452 = vadd.f32 %v3363, %v3451
      %v3453 = vpop.f32.mrf.mxu0
      %v3454 = vadd.f32 %v3365, %v3453
      %3455 = vdwg.mxu0
      %3456 = vmatpush.bf16.msra.mxu0 0
      %3457 = vmatpush.bf16.msra.mxu0 0
      %3458 = vmatpush.bf16.msra.mxu0 0
      %3459 = vmatpush.bf16.msra.mxu0 0
      %3460 = vmatpush.bf16.msra.mxu0 0
      %3461 = vmatpush.bf16.msra.mxu0 0
      %3462 = vmatpush.bf16.msra.mxu0 %v3211
      %3463 = vmatpush.bf16.msra.mxu0 %v3210
      %3464 = vmatmul.bf16.gmra.mxu0 %v3231
      %v3465 = vpop.f32.mrf.mxu0
      %v3466 = vadd.f32 %v3377, %v3465
      %v3467 = vpop.f32.mrf.mxu0
      %v3468 = vadd.f32 %v3379, %v3467
      %3469 = vmatmul.bf16.gmra.mxu0 %v3234
      %v3470 = vpop.f32.mrf.mxu0
      %v3471 = vadd.f32 %v3382, %v3470
      %v3472 = vpop.f32.mrf.mxu0
      %v3473 = vadd.f32 %v3384, %v3472
      %3474 = vmatmul.bf16.gmra.mxu0 %v3237
      %v3475 = vpop.f32.mrf.mxu0
      %v3476 = vadd.f32 %v3387, %v3475
      %v3477 = vpop.f32.mrf.mxu0
      %v3478 = vadd.f32 %v3389, %v3477
      %3479 = vmatmul.bf16.gmra.mxu0 %v3240
      %v3480 = vpop.f32.mrf.mxu0
      %v3481 = vadd.f32 %v3392, %v3480
      %v3482 = vpop.f32.mrf.mxu0
      %v3483 = vadd.f32 %v3394, %v3482
      %3484 = vmatmul.bf16.gmra.mxu0 %v3243
      %v3485 = vpop.f32.mrf.mxu0
      %v3486 = vadd.f32 %v3397, %v3485
      %v3487 = vpop.f32.mrf.mxu0
      %v3488 = vadd.f32 %v3399, %v3487
      %3489 = vmatmul.bf16.gmra.mxu0 %v3246
      %v3490 = vpop.f32.mrf.mxu0
      %v3491 = vadd.f32 %v3402, %v3490
      %v3492 = vpop.f32.mrf.mxu0
      %v3493 = vadd.f32 %v3404, %v3492
      %3494 = vmatmul.bf16.gmra.mxu0 %v3249
      %v3495 = vpop.f32.mrf.mxu0
      %v3496 = vadd.f32 %v3407, %v3495
      %v3497 = vpop.f32.mrf.mxu0
      %v3498 = vadd.f32 %v3409, %v3497
      %3499 = vmatmul.bf16.gmra.mxu0 %v3252
      %v3500 = vpop.f32.mrf.mxu0
      %v3501 = vadd.f32 %v3412, %v3500
      %v3502 = vpop.f32.mrf.mxu0
      %v3503 = vadd.f32 %v3414, %v3502
      %3504 = vmatmul.bf16.gmra.mxu0 %v3255
      %v3505 = vpop.f32.mrf.mxu0
      %v3506 = vadd.f32 %v3417, %v3505
      %v3507 = vpop.f32.mrf.mxu0
      %v3508 = vadd.f32 %v3419, %v3507
      %3509 = vmatmul.bf16.gmra.mxu0 %v3258
      %v3510 = vpop.f32.mrf.mxu0
      %v3511 = vadd.f32 %v3422, %v3510
      %v3512 = vpop.f32.mrf.mxu0
      %v3513 = vadd.f32 %v3424, %v3512
      %3514 = vmatmul.bf16.gmra.mxu0 %v3261
      %v3515 = vpop.f32.mrf.mxu0
      %v3516 = vadd.f32 %v3427, %v3515
      %v3517 = vpop.f32.mrf.mxu0
      %v3518 = vadd.f32 %v3429, %v3517
      %3519 = vmatmul.bf16.gmra.mxu0 %v3264
      %v3520 = vpop.f32.mrf.mxu0
      %v3521 = vadd.f32 %v3432, %v3520
      %v3522 = vpop.f32.mrf.mxu0
      %v3523 = vadd.f32 %v3434, %v3522
      %3524 = vmatmul.bf16.gmra.mxu0 %v3267
      %v3525 = vpop.f32.mrf.mxu0
      %v3526 = vadd.f32 %v3437, %v3525
      %v3527 = vpop.f32.mrf.mxu0
      %v3528 = vadd.f32 %v3439, %v3527
      %3529 = vmatmul.bf16.gmra.mxu0 %v3270
      %v3530 = vpop.f32.mrf.mxu0
      %v3531 = vadd.f32 %v3442, %v3530
      %v3532 = vpop.f32.mrf.mxu0
      %v3533 = vadd.f32 %v3444, %v3532
      %3534 = vmatmul.bf16.gmra.mxu0 %v3273
      %v3535 = vpop.f32.mrf.mxu0
      %v3536 = vadd.f32 %v3447, %v3535
      %v3537 = vpop.f32.mrf.mxu0
      %v3538 = vadd.f32 %v3449, %v3537
      %3539 = vmatmul.bf16.gmra.mxu0 %v3276
      %v3540 = vpop.f32.mrf.mxu0
      %v3541 = vadd.f32 %v3452, %v3540
      %v3542 = vpop.f32.mrf.mxu0
      %v3543 = vadd.f32 %v3454, %v3542
      %3544 = vdwg.mxu0
      %v3545 = vmax.f32 %v3466, 0.0
      %v3546 = vmax.f32 %v3468, 0.0
      %v3547 = vmax.f32 %v3471, 0.0
      %v3548 = vmax.f32 %v3473, 0.0
      %v3549 = vmax.f32 %v3476, 0.0
      %v3550 = vmax.f32 %v3478, 0.0
      %v3551 = vmax.f32 %v3481, 0.0
      %v3552 = vmax.f32 %v3483, 0.0
      %v3553 = vmax.f32 %v3486, 0.0
      %v3554 = vmax.f32 %v3488, 0.0
      %v3555 = vmax.f32 %v3491, 0.0
      %v3556 = vmax.f32 %v3493, 0.0
      %v3557 = vmax.f32 %v3496, 0.0
      %v3558 = vmax.f32 %v3498, 0.0
      %v3559 = vmax.f32 %v3501, 0.0
      %v3560 = vmax.f32 %v3503, 0.0
      %v3561 = vmax.f32 %v3506, 0.0
      %v3562 = vmax.f32 %v3508, 0.0
      %v3563 = vmax.f32 %v3511, 0.0
      %v3564 = vmax.f32 %v3513, 0.0
      %v3565 = vmax.f32 %v3516, 0.0
      %v3566 = vmax.f32 %v3518, 0.0
      %v3567 = vmax.f32 %v3521, 0.0
      %v3568 = vmax.f32 %v3523, 0.0
      %v3569 = vmax.f32 %v3526, 0.0
      %v3570 = vmax.f32 %v3528, 0.0
      %v3571 = vmax.f32 %v3531, 0.0
      %v3572 = vmax.f32 %v3533, 0.0
      %v3573 = vmax.f32 %v3536, 0.0
      %v3574 = vmax.f32 %v3538, 0.0
      %v3575 = vmax.f32 %v3541, 0.0
      %v3576 = vmax.f32 %v3543, 0.0
      %v3577 = vpack.c.bf16 %v3545, %v3545
      %v3578 = vpack.c.bf16 %v3546, %v3546
      %v3579 = vpack.c.bf16 %v3547, %v3547
      %v3580 = vpack.c.bf16 %v3548, %v3548
      %v3581 = vpack.c.bf16 %v3549, %v3549
      %v3582 = vpack.c.bf16 %v3550, %v3550
      %v3583 = vpack.c.bf16 %v3551, %v3551
      %v3584 = vpack.c.bf16 %v3552, %v3552
      %v3585 = vpack.c.bf16 %v3553, %v3553
      %v3586 = vpack.c.bf16 %v3554, %v3554
      %v3587 = vpack.c.bf16 %v3555, %v3555
      %v3588 = vpack.c.bf16 %v3556, %v3556
      %v3589 = vpack.c.bf16 %v3557, %v3557
      %v3590 = vpack.c.bf16 %v3558, %v3558
      %v3591 = vpack.c.bf16 %v3559, %v3559
      %v3592 = vpack.c.bf16 %v3560, %v3560
      %v3593 = vpack.c.bf16 %v3561, %v3561
      %v3594 = vpack.c.bf16 %v3562, %v3562
      %v3595 = vpack.c.bf16 %v3563, %v3563
      %v3596 = vpack.c.bf16 %v3564, %v3564
      %v3597 = vpack.c.bf16 %v3565, %v3565
      %v3598 = vpack.c.bf16 %v3566, %v3566
      %v3599 = vpack.c.bf16 %v3567, %v3567
      %v3600 = vpack.c.bf16 %v3568, %v3568
      %v3601 = vpack.c.bf16 %v3569, %v3569
      %v3602 = vpack.c.bf16 %v3570, %v3570
      %v3603 = vpack.c.bf16 %v3571, %v3571
      %v3604 = vpack.c.bf16 %v3572, %v3572
      %v3605 = vpack.c.bf16 %v3573, %v3573
      %v3606 = vpack.c.bf16 %v3574, %v3574
      %v3607 = vpack.c.bf16 %v3575, %v3575
      %v3608 = vpack.c.bf16 %v3576, %v3576
      %vm3609 = vcmask 257024
      %3610 = vst.msk [vmem:[%s251] sm:$0xf] %vm3609, %v3577
      %3611 = vst.msk [vmem:[%s251 + $0x4] sm:$0xf] %vm3609, %v3578
      %3612 = vst.msk [vmem:[%s251 + $0x8] sm:$0xf] %vm3609, %v3579
      %3613 = vst.msk [vmem:[%s251 + $0xc] sm:$0xf] %vm3609, %v3580
      %3614 = vst.msk [vmem:[%s251 + $0x10] sm:$0xf] %vm3609, %v3581
      %3615 = vst.msk [vmem:[%s251 + $0x14] sm:$0xf] %vm3609, %v3582
      %3616 = vst.msk [vmem:[%s251 + $0x18] sm:$0xf] %vm3609, %v3583
      %3617 = vst.msk [vmem:[%s251 + $0x1c] sm:$0xf] %vm3609, %v3584
      %3618 = vst.msk [vmem:[%s251 + $0x20] sm:$0xf] %vm3609, %v3585
      %3619 = vst.msk [vmem:[%s251 + $0x24] sm:$0xf] %vm3609, %v3586
      %3620 = vst.msk [vmem:[%s251 + $0x28] sm:$0xf] %vm3609, %v3587
      %3621 = vst.msk [vmem:[%s251 + $0x2c] sm:$0xf] %vm3609, %v3588
      %3622 = vst.msk [vmem:[%s251 + $0x30] sm:$0xf] %vm3609, %v3589
      %3623 = vst.msk [vmem:[%s251 + $0x34] sm:$0xf] %vm3609, %v3590
      %3624 = vst.msk [vmem:[%s251 + $0x38] sm:$0xf] %vm3609, %v3591
      %3625 = vst.msk [vmem:[%s251 + $0x3c] sm:$0xf] %vm3609, %v3592
      %3626 = vst.msk [vmem:[%s251 + $0x40] sm:$0xf] %vm3609, %v3593
      %3627 = vst.msk [vmem:[%s251 + $0x44] sm:$0xf] %vm3609, %v3594
      %3628 = vst.msk [vmem:[%s251 + $0x48] sm:$0xf] %vm3609, %v3595
      %3629 = vst.msk [vmem:[%s251 + $0x4c] sm:$0xf] %vm3609, %v3596
      %3630 = vst.msk [vmem:[%s251 + $0x50] sm:$0xf] %vm3609, %v3597
      %3631 = vst.msk [vmem:[%s251 + $0x54] sm:$0xf] %vm3609, %v3598
      %3632 = vst.msk [vmem:[%s251 + $0x58] sm:$0xf] %vm3609, %v3599
      %3633 = vst.msk [vmem:[%s251 + $0x5c] sm:$0xf] %vm3609, %v3600
      %3634 = vst.msk [vmem:[%s251 + $0x60] sm:$0xf] %vm3609, %v3601
      %3635 = vst.msk [vmem:[%s251 + $0x64] sm:$0xf] %vm3609, %v3602
      %3636 = vst.msk [vmem:[%s251 + $0x68] sm:$0xf] %vm3609, %v3603
      %3637 = vst.msk [vmem:[%s251 + $0x6c] sm:$0xf] %vm3609, %v3604
      %3638 = vst.msk [vmem:[%s251 + $0x70] sm:$0xf] %vm3609, %v3605
      %3639 = vst.msk [vmem:[%s251 + $0x74] sm:$0xf] %vm3609, %v3606
      %3640 = vst.msk [vmem:[%s251 + $0x78] sm:$0xf] %vm3609, %v3607
      %3641 = vst.msk [vmem:[%s251 + $0x7c] sm:$0xf] %vm3609, %v3608
      %p3642 = scmp.lt.s32.totalorder %s17, 1
      %s3643 = scalar_select %p3642, %s17, 1
      %s3644 = smul.addr %s3643, 32
      %s3645 = smul.addr %s3644, 4
      %s3646 = scalar_lea.vmem %s6, %s3645
      // Predicated region
      $region45: #{tpu_custom_call.1} parent=43 // pred_check
        %p3647 = pneg %p166
      $region46: #{tpu_custom_call.1} parent=43 // pred_check_branch
        %3649 = sbr.rel (%p3647) target = $region48
      $region47: #{tpu_custom_call.1} parent=43 // pred_region
        _
      $region48: #{tpu_custom_call.1} parent=43 // pred_fallthru
        _
    $region44: #{tpu_custom_call.1} parent=5 // pred_fallthru
      _
    %p3650 = scmp.le.s32.totalorder 2, %s12
    // Predicated region
    $region49: #{tpu_custom_call.1} parent=5 // pred_check
      %p3651 = pneg %p3650
    $region50: #{tpu_custom_call.1} parent=5 // pred_check_branch
      %3653 = sbr.rel (%p3651) target = $region52
    $region51: #{tpu_custom_call.1} parent=5 // pred_region
      %s3654 = ssub.s32 %s12, 2
      // Predicated region
      $region53: #{tpu_custom_call.1} parent=51 // pred_check
        %p3655 = pneg %p172
      $region54: #{tpu_custom_call.1} parent=51 // pred_check_branch
        %3657 = sbr.rel (%p3655) target = $region56
      $region55: #{tpu_custom_call.1} parent=51 // pred_region
        %p3658 = scmp.lt.s32.totalorder %s18, 1
        %s3659 = scalar_select %p3658, %s18, 1
        %s3660 = smul.addr %s3659, 32
        %s3661 = smul.addr %s3660, 4
        %s3662 = scalar_lea.vmem %s6, %s3661
      $region56: #{tpu_custom_call.1} parent=51 // pred_fallthru
        _
    $region52: #{tpu_custom_call.1} parent=5 // pred_fallthru
      _
  $region6: #{tpu_custom_call.1} parent=0 // loop_footer
    %s16 = sadd.s32 1, %s12
  $region7: #{tpu_custom_call.1} parent=0 // loop_footer_branch
    %11 = sbr.rel target = $region3
  $region8: #{tpu_custom_call.1} parent=0 // loop_exit
    _

</llo_original>
